<compile_context>
chip_gen: v6e
topology: v6e:2x2x1
jax: 0.10.0
libtpu: 0.0.40
codegen_flags: <defaults>
</compile_context>

<pallas_src>
import functools

import jax
import jax.numpy as jnp
from jax.experimental import pallas as pl
from jax.experimental.pallas import tpu as pltpu

K = 5  # conv kernel size, padding = 2 ("same")

# (Cout, Cin) of the 9 conv layers in execution order.
# dec2..dec4 are ConvTranspose1d in PyTorch; converted host-side to equivalent Conv1d.
CONV_LAYERS = ((8, 1), (16, 8), (1, 16),     # enc1, enc2, enc3
               (16, 1), (8, 16), (1, 8),     # dec2, dec3, dec4 (ConvT -> Conv)
               (8, 1), (16, 8), (1, 16))     # layer1, layer2, layer3
COUT_PAD = 16


def _cin_pad(cin):
    return 8 if cin == 1 else cin


_IDX8 = tuple(i for i, (_, ci) in enumerate(CONV_LAYERS) if _cin_pad(ci) == 8)
_IDX16 = tuple(i for i, (_, ci) in enumerate(CONV_LAYERS) if _cin_pad(ci) == 16)
_PACK_SLOT = {}
for _pos, _g in enumerate(_IDX8):
    _PACK_SLOT[_g] = (False, _pos)
for _pos, _g in enumerate(_IDX16):
    _PACK_SLOT[_g] = (True, _pos)


# --------------------------------- the kernel ---------------------------------

def _phenotyper_kernel(x_ref, cw8_ref, cw16_ref, cb_ref, wf_ref, bfb_ref,
                       w4_ref, b4_ref, imp_ref, cls_ref, *, bt, nip):
    N = bt * nip

    # Per-sample lane index 0..nip-1, replicated bt times along the lane axis.
    li_row = jax.lax.broadcasted_iota(jnp.int32, (1, nip), 1)
    li = jnp.concatenate([li_row] * bt, axis=1)                    # (1, N) int32

    mask_cache = {}

    def tap_mask(dil, s):
        key = (dil, s)
        if key not in mask_cache:
            if s > 0:
                m = li >= (s * dil)
            else:
                m = li < (nip + s * dil)
            mask_cache[key] = m.astype(jnp.float32)
        return mask_cache[key]

    def conv5(h, idx, dil=1):
        """'same' 1-D conv (kernel 5, pad 2) on per-sample data dilated by `dil`.
        h: (1|8|16, N) f32 -> (16, N) f32 (rows >= actual cout are exactly zero)."""
        _, cin = CONV_LAYERS[idx]
        c8 = _cin_pad(cin)
        if h.shape[0] == 1:
            h = jnp.broadcast_to(h, (c8, N))      # extra rows hit zero weight columns
        elif h.shape[0] > c8:
            h = h[:c8, :]
        parts = []
        for j in range(K):
            s = 2 - j
            if s == 0:
                parts.append(h)
            else:
                r = pltpu.roll(h, shift=(s * dil) % N, axis=1)
                parts.append(r * tap_mask(dil, s))
        him = jnp.concatenate(parts, axis=0).astype(jnp.bfloat16)  # (K*c8, N)
        is16, loc = _PACK_SLOT[idx]
        w2 = cw16_ref[loc] if is16 else cw8_ref[loc]               # (16, K*c8) bf16
        acc = jnp.dot(w2, him, preferred_element_type=jnp.float32)  # (16, N) f32
        return acc + cb_ref[idx]                                   # + (16, 1) bias

    relu = lambda v: jnp.maximum(v, 0.0)

    def to_rows(v):    # (1, N) -> (bt, nip): batch moves lanes -> sublanes
        return jnp.concatenate([v[:, b * nip:(b + 1) * nip] for b in range(bt)], axis=0)

    def to_lanes(v):   # (bt, nip) -> (1, N): batch moves sublanes -> lanes
        return jnp.concatenate([v[b:b + 1, :] for b in range(bt)], axis=1)

    def pool(h, dil_in):
        # AvgPool1d(2,2), kept dilated in place: valid lanes become ≡ 0 (mod 2*dil_in).
        return 0.5 * (h + pltpu.roll(h, shift=(-dil_in) % N, axis=1))

    # ---------------- encode ----------------
    x = x_ref[...]                                                 # (1, N) f32
    h = relu(conv5(x, 0))
    h = relu(conv5(h, 1))
    h3 = relu(conv5(h, 2)[0:1, :])                                 # (1, N)

    # ---------------- bottleneck: enc4 ∘ dec1 fused (no nonlinearity between them) ----
    d = relu(jnp.dot(to_rows(h3).astype(jnp.bfloat16), wf_ref[...],
                     preferred_element_type=jnp.float32) + bfb_ref[...])   # (bt, nip)
    d = to_lanes(d)                                                # (1, N)

    # ---------------- decode ----------------
    g = relu(conv5(d, 3))
    g = relu(conv5(g, 4))
    imp = conv5(g, 5)[0:1, :]                                      # (1, N), no relu
    imp_ref[...] = imp

    # ---------------- classify (dilated avg-pools; layer4 weights are pre-scattered) --
    c = relu(conv5(imp, 6))[:8, :]                                 # (8, N), dil 1
    c = pool(c, 1)                                                 # valid lanes ≡ 0 (mod 2)
    c = relu(conv5(c, 7, dil=2))                                   # (16, N)
    c = pool(c, 2)                                                 # ≡ 0 (mod 4)
    c = relu(conv5(c, 8, dil=4)[0:1, :])                           # (1, N)
    c = pool(c, 4)                                                 # ≡ 0 (mod 8)

    logits = jnp.dot(to_rows(c).astype(jnp.bfloat16), w4_ref[...],
                     preferred_element_type=jnp.float32) + b4_ref[...]     # (bt, 128)
    cls_ref[...] = pl.reciprocal(1.0 + jnp.exp(-logits), approx=True)      # sigmoid


# ------------------------------ host-side packing ------------------------------

def _convT_to_conv(w):
    """ConvTranspose1d weight (Cin, Cout, K), stride=1, pad=2 -> equivalent Conv1d
    weight (Cout, Cin, K):  W'[o, c, j] = W[c, o, K-1-j]."""
    return jnp.flip(jnp.transpose(w, (1, 0, 2)), axis=2)


def _pack_conv_params(p):
    layers = [
        (p['enc1_w'], p['enc1_b']), (p['enc2_w'], p['enc2_b']), (p['enc3_w'], p['enc3_b']),
        (_convT_to_conv(p['dec2_w']), p['dec2_b']),
        (_convT_to_conv(p['dec3_w']), p['dec3_b']),
        (_convT_to_conv(p['dec4_w']), p['dec4_b']),
        (p['layer1_w'], p['layer1_b']), (p['layer2_w'], p['layer2_b']), (p['layer3_w'], p['layer3_b']),
    ]
    cw8 = jnp.zeros((len(_IDX8), COUT_PAD, 8 * K), jnp.float32)
    cw16 = jnp.zeros((len(_IDX16), COUT_PAD, 16 * K), jnp.float32)
    cb = jnp.zeros((len(layers), COUT_PAD, 1), jnp.float32)
    for gi, (w, b) in enumerate(layers):
        cout, cin, _ = w.shape
        c8 = _cin_pad(cin)
        wp = jnp.zeros((COUT_PAD, c8, K), jnp.float32).at[:cout, :cin, :].set(w.astype(jnp.float32))
        w2 = jnp.transpose(wp, (0, 2, 1)).reshape(COUT_PAD, K * c8)   # tap-major columns
        is16, loc = _PACK_SLOT[gi]
        if is16:
            cw16 = cw16.at[loc].set(w2)
        else:
            cw8 = cw8.at[loc].set(w2)
        cb = cb.at[gi, :cout, 0].set(b.astype(jnp.float32))
    return cw8.astype(jnp.bfloat16), cw16.astype(jnp.bfloat16), cb


def phenotyper_forward(x, p, latent_dim, nOp, bt=8):
    B, nIp = x.shape
    assert nIp % 8 == 0, "nIp must be divisible by 8 (three AvgPool1d(2,2) stages)"
    assert bt % 8 == 0 and (bt * nIp) % 128 == 0
    cls_pad = max(128, ((nOp + 127) // 128) * 128)
    Bp = ((B + bt - 1) // bt) * bt
    grid = (Bp // bt,)

    # Batch padded to a multiple of bt, then laid out along lanes (one flat row).
    xp = jnp.zeros((Bp, nIp), jnp.float32).at[:B].set(x.astype(jnp.float32))
    x_flat = xp.reshape(1, Bp * nIp)

    cw8, cw16, cb = _pack_conv_params(p)

    # enc4 -> dec1 fused into one (nIp, nIp) linear layer (no activation between them).
    wf = (p['dec1_w'] @ p['enc4_w']).T.astype(jnp.bfloat16)                       # (nIp, nIp)
    bfb = (p['dec1_w'] @ p['enc4_b'] + p['dec1_b']).reshape(1, nIp).astype(jnp.float32)

    # layer4 weight scattered onto the dilated (stride-8) layout, padded lane-dense.
    w4_small = p['layer4_w'].T.astype(jnp.float32)                                # (nIp//8, nOp)
    w4 = (jnp.zeros((nIp // 8, 8, cls_pad), jnp.float32)
          .at[:, 0, :nOp].set(w4_small)
          .reshape(nIp, cls_pad)
          .astype(jnp.bfloat16))
    b4 = jnp.zeros((1, cls_pad), jnp.float32).at[0, :nOp].set(p['layer4_b'].astype(jnp.float32))

    args = (x_flat, cw8, cw16, cb, wf, bfb, w4, b4)

    def full_spec(a):
        zeros = (0,) * a.ndim
        return pl.BlockSpec(a.shape, lambda g, _z=zeros: _z)

    in_specs = ([pl.BlockSpec((1, bt * nIp), lambda g: (0, g))]
                + [full_spec(a) for a in args[1:]])
    out_specs = (pl.BlockSpec((1, bt * nIp), lambda g: (0, g)),
                 pl.BlockSpec((bt, cls_pad), lambda g: (g, 0)))

    kernel = functools.partial(_phenotyper_kernel, bt=bt, nip=nIp)
    imp_flat, cls_full = pl.pallas_call(
        kernel,
        out_shape=(jax.ShapeDtypeStruct((1, Bp * nIp), jnp.float32),
                   jax.ShapeDtypeStruct((Bp, cls_pad), jnp.float32)),
        grid=grid,
        in_specs=in_specs,
        out_specs=out_specs,
        compiler_params=pltpu.CompilerParams(dimension_semantics=("parallel",)),
    )(*args)

    imp = imp_flat.reshape(Bp, nIp)[:B]
    cls = cls_full[:B, :nOp]
    return imp, cls


# ------------------------------ parameters & reference ------------------------------

def init_params(key, nIp, latent_dim, nOp):
    def nrm(k, shape, scale=0.1):
        return (scale * jax.random.normal(k, shape)).astype(jnp.float32)
    ks = jax.random.split(key, 24)
    p = {}
    p['enc1_w'] = nrm(ks[0], (8, 1, K));            p['enc1_b'] = nrm(ks[1], (8,))
    p['enc2_w'] = nrm(ks[2], (16, 8, K));           p['enc2_b'] = nrm(ks[3], (16,))
    p['enc3_w'] = nrm(ks[4], (1, 16, K));           p['enc3_b'] = nrm(ks[5], (1,))
    p['enc4_w'] = nrm(ks[6], (latent_dim, nIp));    p['enc4_b'] = nrm(ks[7], (latent_dim,))
    p['dec1_w'] = nrm(ks[8], (nIp, latent_dim));    p['dec1_b'] = nrm(ks[9], (nIp,))
    p['dec2_w'] = nrm(ks[10], (1, 16, K));          p['dec2_b'] = nrm(ks[11], (16,))
    p['dec3_w'] = nrm(ks[12], (16, 8, K));          p['dec3_b'] = nrm(ks[13], (8,))
    p['dec4_w'] = nrm(ks[14], (8, 1, K));           p['dec4_b'] = nrm(ks[15], (1,))
    p['layer1_w'] = nrm(ks[16], (8, 1, K));         p['layer1_b'] = nrm(ks[17], (8,))
    p['layer2_w'] = nrm(ks[18], (16, 8, K));        p['layer2_b'] = nrm(ks[19], (16,))
    p['layer3_w'] = nrm(ks[20], (1, 16, K));        p['layer3_b'] = nrm(ks[21], (1,))
    p['layer4_w'] = nrm(ks[22], (nOp, nIp // 8));   p['layer4_b'] = nrm(ks[23], (nOp,))
    return p


def _ref_conv1d_same(x, w, b):
    """PyTorch Conv1d (cross-correlation), kernel K, padding (K-1)//2.  x: (B,Cin,L)."""
    pth = (K - 1) // 2
    L = x.shape[2]
    xp = jnp.pad(x, ((0, 0), (0, 0), (pth, pth)))
    out = sum(jnp.einsum('oc,bcl->bol', w[:, :, k], xp[:, :, k:k + L]) for k in range(K))
    return out + b[None, :, None]


def _ref_convT1d(x, w, b):
    """PyTorch ConvTranspose1d, stride=1, padding=2.  x: (B,Cin,L), w: (Cin,Cout,K)."""
    pth = 2
    q = K - 1 - pth
    L = x.shape[2]
    xp = jnp.pad(x, ((0, 0), (0, 0), (q, q)))
    out = sum(jnp.einsum('co,bcl->bol', w[:, :, k], xp[:, :, K - 1 - k:K - 1 - k + L])
              for k in range(K))
    return out + b[None, :, None]


def ref_forward(x, p):
    xb = x[:, None, :]
    h = jax.nn.relu(_ref_conv1d_same(xb, p['enc1_w'], p['enc1_b']))
    h = jax.nn.relu(_ref_conv1d_same(h, p['enc2_w'], p['enc2_b']))
    h = jax.nn.relu(_ref_conv1d_same(h, p['enc3_w'], p['enc3_b']))
    lat = h @ p['enc4_w'].T + p['enc4_b']
    d = jax.nn.relu(lat @ p['dec1_w'].T + p['dec1_b'])
    d = jax.nn.relu(_ref_convT1d(d, p['dec2_w'], p['dec2_b']))
    d = jax.nn.relu(_ref_convT1d(d, p['dec3_w'], p['dec3_b']))
    imp = _ref_convT1d(d, p['dec4_w'], p['dec4_b'])[:, 0, :]
    c = jax.nn.relu(_ref_conv1d_same(imp[:, None, :], p['layer1_w'], p['layer1_b']))
    c = c.reshape(c.shape[0], c.shape[1], -1, 2).mean(-1)
    c = jax.nn.relu(_ref_conv1d_same(c, p['layer2_w'], p['layer2_b']))
    c = c.reshape(c.shape[0], c.shape[1], -1, 2).mean(-1)
    c = jax.nn.relu(_ref_conv1d_same(c, p['layer3_w'], p['layer3_b']))
    c = c.reshape(c.shape[0], c.shape[1], -1, 2).mean(-1)
    cls = jax.nn.sigmoid(c[:, 0, :] @ p['layer4_w'].T + p['layer4_b'])
    return imp, cls


# ------------------------------------ main ------------------------------------

if __name__ == "__main__":
    B, nIp, latent_dim, nOp = 2, 128, 32, 8
    key = jax.random.PRNGKey(0)
    kx, kp = jax.random.split(key)
    x = jax.random.normal(kx, (B, nIp), dtype=jnp.float32)
    params = init_params(kp, nIp, latent_dim, nOp)

    imp, cls = jax.block_until_ready(phenotyper_forward(x, params, latent_dim, nOp))

    assert imp.shape == (B, nIp) and cls.shape == (B, nOp)

    imp_ref, cls_ref = ref_forward(x, params)
    assert bool(jnp.allclose(imp, imp_ref, atol=2e-2, rtol=2e-2)), "imputed mismatch"
    assert bool(jnp.allclose(cls, cls_ref, atol=2e-2, rtol=2e-2)), "classified mismatch"

    print("KERNEL_OK")
</pallas_src>

<mosaic_0001>
module attributes {stable_mosaic.version = 11 : i64} {
  func.func @_phenotyper_kernel(%arg0: i32, %arg1: memref<1x1024xf32, #tpu.memory_space<vmem>>, %arg2: memref<6x16x40xbf16, #tpu.memory_space<vmem>>, %arg3: memref<3x16x80xbf16, #tpu.memory_space<vmem>>, %arg4: memref<9x16x1xf32, #tpu.memory_space<vmem>>, %arg5: memref<128x128xbf16, #tpu.memory_space<vmem>>, %arg6: memref<1x128xf32, #tpu.memory_space<vmem>>, %arg7: memref<128x128xbf16, #tpu.memory_space<vmem>>, %arg8: memref<1x128xf32, #tpu.memory_space<vmem>>, %arg9: memref<1x1024xf32, #tpu.memory_space<vmem>>, %arg10: memref<8x128xf32, #tpu.memory_space<vmem>>) attributes {dimension_semantics = [#tpu.dimension_semantics<parallel>], iteration_bounds = array<i64: 1>, scalar_prefetch = 0 : i64, scratch_operands = 0 : i64, tpu.core_type = #tpu.core_type<tc>, window_params = [{transform_indices = @transform_0, window_bounds = array<i64: 1, 1024>}, {pipeline_mode = #tpu.pipeline_mode<synchronous>, transform_indices = @transform_1, window_bounds = array<i64: 6, 16, 40>}, {pipeline_mode = #tpu.pipeline_mode<synchronous>, transform_indices = @transform_2, window_bounds = array<i64: 3, 16, 80>}, {pipeline_mode = #tpu.pipeline_mode<synchronous>, transform_indices = @transform_3, window_bounds = array<i64: 9, 16, 1>}, {pipeline_mode = #tpu.pipeline_mode<synchronous>, transform_indices = @transform_4, window_bounds = array<i64: 128, 128>}, {pipeline_mode = #tpu.pipeline_mode<synchronous>, transform_indices = @transform_5, window_bounds = array<i64: 1, 128>}, {pipeline_mode = #tpu.pipeline_mode<synchronous>, transform_indices = @transform_6, window_bounds = array<i64: 128, 128>}, {pipeline_mode = #tpu.pipeline_mode<synchronous>, transform_indices = @transform_7, window_bounds = array<i64: 1, 128>}, {transform_indices = @transform_8, window_bounds = array<i64: 1, 1024>}, {transform_indices = @transform_9, window_bounds = array<i64: 8, 128>}]} {
    %0 = tpu.iota {dimensions = array<i32: 1>} : vector<1x128xi32>
    %1 = tpu.concatenate %0, %0, %0, %0, %0, %0, %0, %0 in 1 : vector<1x128xi32>, vector<1x128xi32>, vector<1x128xi32>, vector<1x128xi32>, vector<1x128xi32>, vector<1x128xi32>, vector<1x128xi32>, vector<1x128xi32> -> vector<1x1024xi32>
    %c0 = arith.constant 0 : index
    %c0_0 = arith.constant 0 : index
    %2 = vector.load %arg1[%c0, %c0_0] : memref<1x1024xf32, #tpu.memory_space<vmem>>, vector<1x1024xf32>
    %3 = vector.shape_cast %2 : vector<1x1024xf32> to vector<1x1024xf32>
    %4 = vector.broadcast %3 : vector<1x1024xf32> to vector<8x1024xf32>
    %c2_i32 = arith.constant 2 : i32
    %5 = tpu.dynamic_rotate %4 by %c2_i32 dim 1 : vector<8x1024xf32>, i32 -> vector<8x1024xf32>
    %c2_i32_1 = arith.constant 2 : i32
    %6 = vector.broadcast %c2_i32_1 : i32 to vector<1x1024xi32>
    %7 = arith.cmpi sge, %1, %6 : vector<1x1024xi32>
    %8 = arith.extui %7 : vector<1x1024xi1> to vector<1x1024xi32>
    %9 = arith.sitofp %8 : vector<1x1024xi32> to vector<1x1024xf32>
    %10 = vector.broadcast %9 : vector<1x1024xf32> to vector<8x1024xf32>
    %11 = arith.mulf %5, %10 : vector<8x1024xf32>
    %c1_i32 = arith.constant 1 : i32
    %12 = tpu.dynamic_rotate %4 by %c1_i32 dim 1 : vector<8x1024xf32>, i32 -> vector<8x1024xf32>
    %c1_i32_2 = arith.constant 1 : i32
    %13 = vector.broadcast %c1_i32_2 : i32 to vector<1x1024xi32>
    %14 = arith.cmpi sge, %1, %13 : vector<1x1024xi32>
    %15 = arith.extui %14 : vector<1x1024xi1> to vector<1x1024xi32>
    %16 = arith.sitofp %15 : vector<1x1024xi32> to vector<1x1024xf32>
    %17 = vector.broadcast %16 : vector<1x1024xf32> to vector<8x1024xf32>
    %18 = arith.mulf %12, %17 : vector<8x1024xf32>
    %c1023_i32 = arith.constant 1023 : i32
    %19 = tpu.dynamic_rotate %4 by %c1023_i32 dim 1 : vector<8x1024xf32>, i32 -> vector<8x1024xf32>
    %c127_i32 = arith.constant 127 : i32
    %20 = vector.broadcast %c127_i32 : i32 to vector<1x1024xi32>
    %21 = arith.cmpi slt, %1, %20 : vector<1x1024xi32>
    %22 = arith.extui %21 : vector<1x1024xi1> to vector<1x1024xi32>
    %23 = arith.sitofp %22 : vector<1x1024xi32> to vector<1x1024xf32>
    %24 = vector.broadcast %23 : vector<1x1024xf32> to vector<8x1024xf32>
    %25 = arith.mulf %19, %24 : vector<8x1024xf32>
    %c1022_i32 = arith.constant 1022 : i32
    %26 = tpu.dynamic_rotate %4 by %c1022_i32 dim 1 : vector<8x1024xf32>, i32 -> vector<8x1024xf32>
    %c126_i32 = arith.constant 126 : i32
    %27 = vector.broadcast %c126_i32 : i32 to vector<1x1024xi32>
    %28 = arith.cmpi slt, %1, %27 : vector<1x1024xi32>
    %29 = arith.extui %28 : vector<1x1024xi1> to vector<1x1024xi32>
    %30 = arith.sitofp %29 : vector<1x1024xi32> to vector<1x1024xf32>
    %31 = vector.broadcast %30 : vector<1x1024xf32> to vector<8x1024xf32>
    %32 = arith.mulf %26, %31 : vector<8x1024xf32>
    %33 = tpu.concatenate %11, %18, %4, %25, %32 in 0 : vector<8x1024xf32>, vector<8x1024xf32>, vector<8x1024xf32>, vector<8x1024xf32>, vector<8x1024xf32> -> vector<40x1024xf32>
    %34 = arith.truncf %33 : vector<40x1024xf32> to vector<40x1024xbf16>
    %c0_3 = arith.constant 0 : index
    %c0_4 = arith.constant 0 : index
    %c0_5 = arith.constant 0 : index
    %35 = vector.load %arg2[%c0_3, %c0_4, %c0_5] : memref<6x16x40xbf16, #tpu.memory_space<vmem>>, vector<1x16x40xbf16>
    %36 = vector.shape_cast %35 : vector<1x16x40xbf16> to vector<16x40xbf16>
    %cst = arith.constant dense<0.000000e+00> : vector<16x1024xf32>
    %37 = tpu.matmul %36, %34, %cst {dimension_numbers = #tpu.dot_dimension_numbers<[1], [0], [0], [1], [0, 0, 1, 1], [], []>} : vector<16x40xbf16>, vector<40x1024xbf16>, vector<16x1024xf32> -> vector<16x1024xf32>
    %c0_6 = arith.constant 0 : index
    %c0_7 = arith.constant 0 : index
    %c0_8 = arith.constant 0 : index
    %38 = vector.load %arg4[%c0_6, %c0_7, %c0_8] : memref<9x16x1xf32, #tpu.memory_space<vmem>>, vector<1x16x1xf32>
    %39 = vector.shape_cast %38 : vector<1x16x1xf32> to vector<16x1xf32>
    %40 = vector.broadcast %39 : vector<16x1xf32> to vector<16x1024xf32>
    %41 = arith.addf %37, %40 : vector<16x1024xf32>
    %cst_9 = arith.constant 0.000000e+00 : f32
    %42 = vector.broadcast %cst_9 : f32 to vector<16x1024xf32>
    %43 = arith.maximumf %41, %42 : vector<16x1024xf32>
    %44 = vector.extract_strided_slice %43 {offsets = [0, 0], sizes = [8, 1024], strides = [1, 1]} : vector<16x1024xf32> to vector<8x1024xf32>
    %c2_i32_10 = arith.constant 2 : i32
    %45 = tpu.dynamic_rotate %44 by %c2_i32_10 dim 1 : vector<8x1024xf32>, i32 -> vector<8x1024xf32>
    %46 = vector.broadcast %9 : vector<1x1024xf32> to vector<8x1024xf32>
    %47 = arith.mulf %45, %46 : vector<8x1024xf32>
    %c1_i32_11 = arith.constant 1 : i32
    %48 = tpu.dynamic_rotate %44 by %c1_i32_11 dim 1 : vector<8x1024xf32>, i32 -> vector<8x1024xf32>
    %49 = vector.broadcast %16 : vector<1x1024xf32> to vector<8x1024xf32>
    %50 = arith.mulf %48, %49 : vector<8x1024xf32>
    %c1023_i32_12 = arith.constant 1023 : i32
    %51 = tpu.dynamic_rotate %44 by %c1023_i32_12 dim 1 : vector<8x1024xf32>, i32 -> vector<8x1024xf32>
    %52 = vector.broadcast %23 : vector<1x1024xf32> to vector<8x1024xf32>
    %53 = arith.mulf %51, %52 : vector<8x1024xf32>
    %c1022_i32_13 = arith.constant 1022 : i32
    %54 = tpu.dynamic_rotate %44 by %c1022_i32_13 dim 1 : vector<8x1024xf32>, i32 -> vector<8x1024xf32>
    %55 = vector.broadcast %30 : vector<1x1024xf32> to vector<8x1024xf32>
    %56 = arith.mulf %54, %55 : vector<8x1024xf32>
    %57 = tpu.concatenate %47, %50, %44, %53, %56 in 0 : vector<8x1024xf32>, vector<8x1024xf32>, vector<8x1024xf32>, vector<8x1024xf32>, vector<8x1024xf32> -> vector<40x1024xf32>
    %58 = arith.truncf %57 : vector<40x1024xf32> to vector<40x1024xbf16>
    %c1 = arith.constant 1 : index
    %c0_14 = arith.constant 0 : index
    %c0_15 = arith.constant 0 : index
    %59 = vector.load %arg2[%c1, %c0_14, %c0_15] : memref<6x16x40xbf16, #tpu.memory_space<vmem>>, vector<1x16x40xbf16>
    %60 = vector.shape_cast %59 : vector<1x16x40xbf16> to vector<16x40xbf16>
    %cst_16 = arith.constant dense<0.000000e+00> : vector<16x1024xf32>
    %61 = tpu.matmul %60, %58, %cst_16 {dimension_numbers = #tpu.dot_dimension_numbers<[1], [0], [0], [1], [0, 0, 1, 1], [], []>} : vector<16x40xbf16>, vector<40x1024xbf16>, vector<16x1024xf32> -> vector<16x1024xf32>
    %c1_17 = arith.constant 1 : index
    %c0_18 = arith.constant 0 : index
    %c0_19 = arith.constant 0 : index
    %62 = vector.load %arg4[%c1_17, %c0_18, %c0_19] : memref<9x16x1xf32, #tpu.memory_space<vmem>>, vector<1x16x1xf32>
    %63 = vector.shape_cast %62 : vector<1x16x1xf32> to vector<16x1xf32>
    %64 = vector.broadcast %63 : vector<16x1xf32> to vector<16x1024xf32>
    %65 = arith.addf %61, %64 : vector<16x1024xf32>
    %cst_20 = arith.constant 0.000000e+00 : f32
    %66 = vector.broadcast %cst_20 : f32 to vector<16x1024xf32>
    %67 = arith.maximumf %65, %66 : vector<16x1024xf32>
    %c2_i32_21 = arith.constant 2 : i32
    %68 = tpu.dynamic_rotate %67 by %c2_i32_21 dim 1 : vector<16x1024xf32>, i32 -> vector<16x1024xf32>
    %69 = vector.broadcast %9 : vector<1x1024xf32> to vector<16x1024xf32>
    %70 = arith.mulf %68, %69 : vector<16x1024xf32>
    %c1_i32_22 = arith.constant 1 : i32
    %71 = tpu.dynamic_rotate %67 by %c1_i32_22 dim 1 : vector<16x1024xf32>, i32 -> vector<16x1024xf32>
    %72 = vector.broadcast %16 : vector<1x1024xf32> to vector<16x1024xf32>
    %73 = arith.mulf %71, %72 : vector<16x1024xf32>
    %c1023_i32_23 = arith.constant 1023 : i32
    %74 = tpu.dynamic_rotate %67 by %c1023_i32_23 dim 1 : vector<16x1024xf32>, i32 -> vector<16x1024xf32>
    %75 = vector.broadcast %23 : vector<1x1024xf32> to vector<16x1024xf32>
    %76 = arith.mulf %74, %75 : vector<16x1024xf32>
    %c1022_i32_24 = arith.constant 1022 : i32
    %77 = tpu.dynamic_rotate %67 by %c1022_i32_24 dim 1 : vector<16x1024xf32>, i32 -> vector<16x1024xf32>
    %78 = vector.broadcast %30 : vector<1x1024xf32> to vector<16x1024xf32>
    %79 = arith.mulf %77, %78 : vector<16x1024xf32>
    %80 = tpu.concatenate %70, %73, %67, %76, %79 in 0 : vector<16x1024xf32>, vector<16x1024xf32>, vector<16x1024xf32>, vector<16x1024xf32>, vector<16x1024xf32> -> vector<80x1024xf32>
    %81 = arith.truncf %80 : vector<80x1024xf32> to vector<80x1024xbf16>
    %c0_25 = arith.constant 0 : index
    %c0_26 = arith.constant 0 : index
    %c0_27 = arith.constant 0 : index
    %82 = vector.load %arg3[%c0_25, %c0_26, %c0_27] : memref<3x16x80xbf16, #tpu.memory_space<vmem>>, vector<1x16x80xbf16>
    %83 = vector.shape_cast %82 : vector<1x16x80xbf16> to vector<16x80xbf16>
    %cst_28 = arith.constant dense<0.000000e+00> : vector<16x1024xf32>
    %84 = tpu.matmul %83, %81, %cst_28 {dimension_numbers = #tpu.dot_dimension_numbers<[1], [0], [0], [1], [0, 0, 1, 1], [], []>} : vector<16x80xbf16>, vector<80x1024xbf16>, vector<16x1024xf32> -> vector<16x1024xf32>
    %c2 = arith.constant 2 : index
    %c0_29 = arith.constant 0 : index
    %c0_30 = arith.constant 0 : index
    %85 = vector.load %arg4[%c2, %c0_29, %c0_30] : memref<9x16x1xf32, #tpu.memory_space<vmem>>, vector<1x16x1xf32>
    %86 = vector.shape_cast %85 : vector<1x16x1xf32> to vector<16x1xf32>
    %87 = vector.broadcast %86 : vector<16x1xf32> to vector<16x1024xf32>
    %88 = arith.addf %84, %87 : vector<16x1024xf32>
    %89 = vector.extract_strided_slice %88 {offsets = [0, 0], sizes = [1, 1024], strides = [1, 1]} : vector<16x1024xf32> to vector<1x1024xf32>
    %cst_31 = arith.constant 0.000000e+00 : f32
    %90 = vector.broadcast %cst_31 : f32 to vector<1x1024xf32>
    %91 = arith.maximumf %89, %90 : vector<1x1024xf32>
    %92 = vector.extract_strided_slice %91 {offsets = [0, 0], sizes = [1, 128], strides = [1, 1]} : vector<1x1024xf32> to vector<1x128xf32>
    %93 = vector.extract_strided_slice %91 {offsets = [0, 128], sizes = [1, 128], strides = [1, 1]} : vector<1x1024xf32> to vector<1x128xf32>
    %94 = vector.extract_strided_slice %91 {offsets = [0, 256], sizes = [1, 128], strides = [1, 1]} : vector<1x1024xf32> to vector<1x128xf32>
    %95 = vector.extract_strided_slice %91 {offsets = [0, 384], sizes = [1, 128], strides = [1, 1]} : vector<1x1024xf32> to vector<1x128xf32>
    %96 = vector.extract_strided_slice %91 {offsets = [0, 512], sizes = [1, 128], strides = [1, 1]} : vector<1x1024xf32> to vector<1x128xf32>
    %97 = vector.extract_strided_slice %91 {offsets = [0, 640], sizes = [1, 128], strides = [1, 1]} : vector<1x1024xf32> to vector<1x128xf32>
    %98 = vector.extract_strided_slice %91 {offsets = [0, 768], sizes = [1, 128], strides = [1, 1]} : vector<1x1024xf32> to vector<1x128xf32>
    %99 = vector.extract_strided_slice %91 {offsets = [0, 896], sizes = [1, 128], strides = [1, 1]} : vector<1x1024xf32> to vector<1x128xf32>
    %100 = tpu.concatenate %92, %93, %94, %95, %96, %97, %98, %99 in 0 : vector<1x128xf32>, vector<1x128xf32>, vector<1x128xf32>, vector<1x128xf32>, vector<1x128xf32>, vector<1x128xf32>, vector<1x128xf32>, vector<1x128xf32> -> vector<8x128xf32>
    %101 = arith.truncf %100 : vector<8x128xf32> to vector<8x128xbf16>
    %c0_32 = arith.constant 0 : index
    %c0_33 = arith.constant 0 : index
    %102 = vector.load %arg5[%c0_32, %c0_33] : memref<128x128xbf16, #tpu.memory_space<vmem>>, vector<128x128xbf16>
    %cst_34 = arith.constant dense<0.000000e+00> : vector<8x128xf32>
    %103 = tpu.matmul %101, %102, %cst_34 {dimension_numbers = #tpu.dot_dimension_numbers<[1], [0], [0], [1], [0, 0, 1, 1], [], []>} : vector<8x128xbf16>, vector<128x128xbf16>, vector<8x128xf32> -> vector<8x128xf32>
    %c0_35 = arith.constant 0 : index
    %c0_36 = arith.constant 0 : index
    %104 = vector.load %arg6[%c0_35, %c0_36] : memref<1x128xf32, #tpu.memory_space<vmem>>, vector<1x128xf32>
    %105 = vector.broadcast %104 : vector<1x128xf32> to vector<8x128xf32>
    %106 = arith.addf %103, %105 : vector<8x128xf32>
    %cst_37 = arith.constant 0.000000e+00 : f32
    %107 = vector.broadcast %cst_37 : f32 to vector<8x128xf32>
    %108 = arith.maximumf %106, %107 : vector<8x128xf32>
    %109 = vector.extract_strided_slice %108 {offsets = [0, 0], sizes = [1, 128], strides = [1, 1]} : vector<8x128xf32> to vector<1x128xf32>
    %110 = vector.extract_strided_slice %108 {offsets = [1, 0], sizes = [1, 128], strides = [1, 1]} : vector<8x128xf32> to vector<1x128xf32>
    %111 = vector.extract_strided_slice %108 {offsets = [2, 0], sizes = [1, 128], strides = [1, 1]} : vector<8x128xf32> to vector<1x128xf32>
    %112 = vector.extract_strided_slice %108 {offsets = [3, 0], sizes = [1, 128], strides = [1, 1]} : vector<8x128xf32> to vector<1x128xf32>
    %113 = vector.extract_strided_slice %108 {offsets = [4, 0], sizes = [1, 128], strides = [1, 1]} : vector<8x128xf32> to vector<1x128xf32>
    %114 = vector.extract_strided_slice %108 {offsets = [5, 0], sizes = [1, 128], strides = [1, 1]} : vector<8x128xf32> to vector<1x128xf32>
    %115 = vector.extract_strided_slice %108 {offsets = [6, 0], sizes = [1, 128], strides = [1, 1]} : vector<8x128xf32> to vector<1x128xf32>
    %116 = vector.extract_strided_slice %108 {offsets = [7, 0], sizes = [1, 128], strides = [1, 1]} : vector<8x128xf32> to vector<1x128xf32>
    %117 = tpu.concatenate %109, %110, %111, %112, %113, %114, %115, %116 in 1 : vector<1x128xf32>, vector<1x128xf32>, vector<1x128xf32>, vector<1x128xf32>, vector<1x128xf32>, vector<1x128xf32>, vector<1x128xf32>, vector<1x128xf32> -> vector<1x1024xf32>
    %118 = vector.shape_cast %117 : vector<1x1024xf32> to vector<1x1024xf32>
    %119 = vector.broadcast %118 : vector<1x1024xf32> to vector<8x1024xf32>
    %c2_i32_38 = arith.constant 2 : i32
    %120 = tpu.dynamic_rotate %119 by %c2_i32_38 dim 1 : vector<8x1024xf32>, i32 -> vector<8x1024xf32>
    %121 = vector.broadcast %9 : vector<1x1024xf32> to vector<8x1024xf32>
    %122 = arith.mulf %120, %121 : vector<8x1024xf32>
    %c1_i32_39 = arith.constant 1 : i32
    %123 = tpu.dynamic_rotate %119 by %c1_i32_39 dim 1 : vector<8x1024xf32>, i32 -> vector<8x1024xf32>
    %124 = vector.broadcast %16 : vector<1x1024xf32> to vector<8x1024xf32>
    %125 = arith.mulf %123, %124 : vector<8x1024xf32>
    %c1023_i32_40 = arith.constant 1023 : i32
    %126 = tpu.dynamic_rotate %119 by %c1023_i32_40 dim 1 : vector<8x1024xf32>, i32 -> vector<8x1024xf32>
    %127 = vector.broadcast %23 : vector<1x1024xf32> to vector<8x1024xf32>
    %128 = arith.mulf %126, %127 : vector<8x1024xf32>
    %c1022_i32_41 = arith.constant 1022 : i32
    %129 = tpu.dynamic_rotate %119 by %c1022_i32_41 dim 1 : vector<8x1024xf32>, i32 -> vector<8x1024xf32>
    %130 = vector.broadcast %30 : vector<1x1024xf32> to vector<8x1024xf32>
    %131 = arith.mulf %129, %130 : vector<8x1024xf32>
    %132 = tpu.concatenate %122, %125, %119, %128, %131 in 0 : vector<8x1024xf32>, vector<8x1024xf32>, vector<8x1024xf32>, vector<8x1024xf32>, vector<8x1024xf32> -> vector<40x1024xf32>
    %133 = arith.truncf %132 : vector<40x1024xf32> to vector<40x1024xbf16>
    %c2_42 = arith.constant 2 : index
    %c0_43 = arith.constant 0 : index
    %c0_44 = arith.constant 0 : index
    %134 = vector.load %arg2[%c2_42, %c0_43, %c0_44] : memref<6x16x40xbf16, #tpu.memory_space<vmem>>, vector<1x16x40xbf16>
    %135 = vector.shape_cast %134 : vector<1x16x40xbf16> to vector<16x40xbf16>
    %cst_45 = arith.constant dense<0.000000e+00> : vector<16x1024xf32>
    %136 = tpu.matmul %135, %133, %cst_45 {dimension_numbers = #tpu.dot_dimension_numbers<[1], [0], [0], [1], [0, 0, 1, 1], [], []>} : vector<16x40xbf16>, vector<40x1024xbf16>, vector<16x1024xf32> -> vector<16x1024xf32>
    %c3 = arith.constant 3 : index
    %c0_46 = arith.constant 0 : index
    %c0_47 = arith.constant 0 : index
    %137 = vector.load %arg4[%c3, %c0_46, %c0_47] : memref<9x16x1xf32, #tpu.memory_space<vmem>>, vector<1x16x1xf32>
    %138 = vector.shape_cast %137 : vector<1x16x1xf32> to vector<16x1xf32>
    %139 = vector.broadcast %138 : vector<16x1xf32> to vector<16x1024xf32>
    %140 = arith.addf %136, %139 : vector<16x1024xf32>
    %cst_48 = arith.constant 0.000000e+00 : f32
    %141 = vector.broadcast %cst_48 : f32 to vector<16x1024xf32>
    %142 = arith.maximumf %140, %141 : vector<16x1024xf32>
    %c2_i32_49 = arith.constant 2 : i32
    %143 = tpu.dynamic_rotate %142 by %c2_i32_49 dim 1 : vector<16x1024xf32>, i32 -> vector<16x1024xf32>
    %144 = vector.broadcast %9 : vector<1x1024xf32> to vector<16x1024xf32>
    %145 = arith.mulf %143, %144 : vector<16x1024xf32>
    %c1_i32_50 = arith.constant 1 : i32
    %146 = tpu.dynamic_rotate %142 by %c1_i32_50 dim 1 : vector<16x1024xf32>, i32 -> vector<16x1024xf32>
    %147 = vector.broadcast %16 : vector<1x1024xf32> to vector<16x1024xf32>
    %148 = arith.mulf %146, %147 : vector<16x1024xf32>
    %c1023_i32_51 = arith.constant 1023 : i32
    %149 = tpu.dynamic_rotate %142 by %c1023_i32_51 dim 1 : vector<16x1024xf32>, i32 -> vector<16x1024xf32>
    %150 = vector.broadcast %23 : vector<1x1024xf32> to vector<16x1024xf32>
    %151 = arith.mulf %149, %150 : vector<16x1024xf32>
    %c1022_i32_52 = arith.constant 1022 : i32
    %152 = tpu.dynamic_rotate %142 by %c1022_i32_52 dim 1 : vector<16x1024xf32>, i32 -> vector<16x1024xf32>
    %153 = vector.broadcast %30 : vector<1x1024xf32> to vector<16x1024xf32>
    %154 = arith.mulf %152, %153 : vector<16x1024xf32>
    %155 = tpu.concatenate %145, %148, %142, %151, %154 in 0 : vector<16x1024xf32>, vector<16x1024xf32>, vector<16x1024xf32>, vector<16x1024xf32>, vector<16x1024xf32> -> vector<80x1024xf32>
    %156 = arith.truncf %155 : vector<80x1024xf32> to vector<80x1024xbf16>
    %c1_53 = arith.constant 1 : index
    %c0_54 = arith.constant 0 : index
    %c0_55 = arith.constant 0 : index
    %157 = vector.load %arg3[%c1_53, %c0_54, %c0_55] : memref<3x16x80xbf16, #tpu.memory_space<vmem>>, vector<1x16x80xbf16>
    %158 = vector.shape_cast %157 : vector<1x16x80xbf16> to vector<16x80xbf16>
    %cst_56 = arith.constant dense<0.000000e+00> : vector<16x1024xf32>
    %159 = tpu.matmul %158, %156, %cst_56 {dimension_numbers = #tpu.dot_dimension_numbers<[1], [0], [0], [1], [0, 0, 1, 1], [], []>} : vector<16x80xbf16>, vector<80x1024xbf16>, vector<16x1024xf32> -> vector<16x1024xf32>
    %c4 = arith.constant 4 : index
    %c0_57 = arith.constant 0 : index
    %c0_58 = arith.constant 0 : index
    %160 = vector.load %arg4[%c4, %c0_57, %c0_58] : memref<9x16x1xf32, #tpu.memory_space<vmem>>, vector<1x16x1xf32>
    %161 = vector.shape_cast %160 : vector<1x16x1xf32> to vector<16x1xf32>
    %162 = vector.broadcast %161 : vector<16x1xf32> to vector<16x1024xf32>
    %163 = arith.addf %159, %162 : vector<16x1024xf32>
    %cst_59 = arith.constant 0.000000e+00 : f32
    %164 = vector.broadcast %cst_59 : f32 to vector<16x1024xf32>
    %165 = arith.maximumf %163, %164 : vector<16x1024xf32>
    %166 = vector.extract_strided_slice %165 {offsets = [0, 0], sizes = [8, 1024], strides = [1, 1]} : vector<16x1024xf32> to vector<8x1024xf32>
    %c2_i32_60 = arith.constant 2 : i32
    %167 = tpu.dynamic_rotate %166 by %c2_i32_60 dim 1 : vector<8x1024xf32>, i32 -> vector<8x1024xf32>
    %168 = vector.broadcast %9 : vector<1x1024xf32> to vector<8x1024xf32>
    %169 = arith.mulf %167, %168 : vector<8x1024xf32>
    %c1_i32_61 = arith.constant 1 : i32
    %170 = tpu.dynamic_rotate %166 by %c1_i32_61 dim 1 : vector<8x1024xf32>, i32 -> vector<8x1024xf32>
    %171 = vector.broadcast %16 : vector<1x1024xf32> to vector<8x1024xf32>
    %172 = arith.mulf %170, %171 : vector<8x1024xf32>
    %c1023_i32_62 = arith.constant 1023 : i32
    %173 = tpu.dynamic_rotate %166 by %c1023_i32_62 dim 1 : vector<8x1024xf32>, i32 -> vector<8x1024xf32>
    %174 = vector.broadcast %23 : vector<1x1024xf32> to vector<8x1024xf32>
    %175 = arith.mulf %173, %174 : vector<8x1024xf32>
    %c1022_i32_63 = arith.constant 1022 : i32
    %176 = tpu.dynamic_rotate %166 by %c1022_i32_63 dim 1 : vector<8x1024xf32>, i32 -> vector<8x1024xf32>
    %177 = vector.broadcast %30 : vector<1x1024xf32> to vector<8x1024xf32>
    %178 = arith.mulf %176, %177 : vector<8x1024xf32>
    %179 = tpu.concatenate %169, %172, %166, %175, %178 in 0 : vector<8x1024xf32>, vector<8x1024xf32>, vector<8x1024xf32>, vector<8x1024xf32>, vector<8x1024xf32> -> vector<40x1024xf32>
    %180 = arith.truncf %179 : vector<40x1024xf32> to vector<40x1024xbf16>
    %c3_64 = arith.constant 3 : index
    %c0_65 = arith.constant 0 : index
    %c0_66 = arith.constant 0 : index
    %181 = vector.load %arg2[%c3_64, %c0_65, %c0_66] : memref<6x16x40xbf16, #tpu.memory_space<vmem>>, vector<1x16x40xbf16>
    %182 = vector.shape_cast %181 : vector<1x16x40xbf16> to vector<16x40xbf16>
    %cst_67 = arith.constant dense<0.000000e+00> : vector<16x1024xf32>
    %183 = tpu.matmul %182, %180, %cst_67 {dimension_numbers = #tpu.dot_dimension_numbers<[1], [0], [0], [1], [0, 0, 1, 1], [], []>} : vector<16x40xbf16>, vector<40x1024xbf16>, vector<16x1024xf32> -> vector<16x1024xf32>
    %c5 = arith.constant 5 : index
    %c0_68 = arith.constant 0 : index
    %c0_69 = arith.constant 0 : index
    %184 = vector.load %arg4[%c5, %c0_68, %c0_69] : memref<9x16x1xf32, #tpu.memory_space<vmem>>, vector<1x16x1xf32>
    %185 = vector.shape_cast %184 : vector<1x16x1xf32> to vector<16x1xf32>
    %186 = vector.broadcast %185 : vector<16x1xf32> to vector<16x1024xf32>
    %187 = arith.addf %183, %186 : vector<16x1024xf32>
    %188 = vector.extract_strided_slice %187 {offsets = [0, 0], sizes = [1, 1024], strides = [1, 1]} : vector<16x1024xf32> to vector<1x1024xf32>
    %c0_70 = arith.constant 0 : index
    %c0_71 = arith.constant 0 : index
    %189 = vector.load %arg9[%c0_70, %c0_71] : memref<1x1024xf32, #tpu.memory_space<vmem>>, vector<1x1024xf32>
    tpu.vector_store %arg9[%c0_70, %c0_71], %188 {strides = array<i32>} : memref<1x1024xf32, #tpu.memory_space<vmem>>, vector<1x1024xf32>,
    %190 = vector.shape_cast %188 : vector<1x1024xf32> to vector<1x1024xf32>
    %191 = vector.broadcast %190 : vector<1x1024xf32> to vector<8x1024xf32>
    %c2_i32_72 = arith.constant 2 : i32
    %192 = tpu.dynamic_rotate %191 by %c2_i32_72 dim 1 : vector<8x1024xf32>, i32 -> vector<8x1024xf32>
    %193 = vector.broadcast %9 : vector<1x1024xf32> to vector<8x1024xf32>
    %194 = arith.mulf %192, %193 : vector<8x1024xf32>
    %c1_i32_73 = arith.constant 1 : i32
    %195 = tpu.dynamic_rotate %191 by %c1_i32_73 dim 1 : vector<8x1024xf32>, i32 -> vector<8x1024xf32>
    %196 = vector.broadcast %16 : vector<1x1024xf32> to vector<8x1024xf32>
    %197 = arith.mulf %195, %196 : vector<8x1024xf32>
    %c1023_i32_74 = arith.constant 1023 : i32
    %198 = tpu.dynamic_rotate %191 by %c1023_i32_74 dim 1 : vector<8x1024xf32>, i32 -> vector<8x1024xf32>
    %199 = vector.broadcast %23 : vector<1x1024xf32> to vector<8x1024xf32>
    %200 = arith.mulf %198, %199 : vector<8x1024xf32>
    %c1022_i32_75 = arith.constant 1022 : i32
    %201 = tpu.dynamic_rotate %191 by %c1022_i32_75 dim 1 : vector<8x1024xf32>, i32 -> vector<8x1024xf32>
    %202 = vector.broadcast %30 : vector<1x1024xf32> to vector<8x1024xf32>
    %203 = arith.mulf %201, %202 : vector<8x1024xf32>
    %204 = tpu.concatenate %194, %197, %191, %200, %203 in 0 : vector<8x1024xf32>, vector<8x1024xf32>, vector<8x1024xf32>, vector<8x1024xf32>, vector<8x1024xf32> -> vector<40x1024xf32>
    %205 = arith.truncf %204 : vector<40x1024xf32> to vector<40x1024xbf16>
    %c4_76 = arith.constant 4 : index
    %c0_77 = arith.constant 0 : index
    %c0_78 = arith.constant 0 : index
    %206 = vector.load %arg2[%c4_76, %c0_77, %c0_78] : memref<6x16x40xbf16, #tpu.memory_space<vmem>>, vector<1x16x40xbf16>
    %207 = vector.shape_cast %206 : vector<1x16x40xbf16> to vector<16x40xbf16>
    %cst_79 = arith.constant dense<0.000000e+00> : vector<16x1024xf32>
    %208 = tpu.matmul %207, %205, %cst_79 {dimension_numbers = #tpu.dot_dimension_numbers<[1], [0], [0], [1], [0, 0, 1, 1], [], []>} : vector<16x40xbf16>, vector<40x1024xbf16>, vector<16x1024xf32> -> vector<16x1024xf32>
    %c6 = arith.constant 6 : index
    %c0_80 = arith.constant 0 : index
    %c0_81 = arith.constant 0 : index
    %209 = vector.load %arg4[%c6, %c0_80, %c0_81] : memref<9x16x1xf32, #tpu.memory_space<vmem>>, vector<1x16x1xf32>
    %210 = vector.shape_cast %209 : vector<1x16x1xf32> to vector<16x1xf32>
    %211 = vector.broadcast %210 : vector<16x1xf32> to vector<16x1024xf32>
    %212 = arith.addf %208, %211 : vector<16x1024xf32>
    %cst_82 = arith.constant 0.000000e+00 : f32
    %213 = vector.broadcast %cst_82 : f32 to vector<16x1024xf32>
    %214 = arith.maximumf %212, %213 : vector<16x1024xf32>
    %215 = vector.extract_strided_slice %214 {offsets = [0, 0], sizes = [8, 1024], strides = [1, 1]} : vector<16x1024xf32> to vector<8x1024xf32>
    %c1023_i32_83 = arith.constant 1023 : i32
    %216 = tpu.dynamic_rotate %215 by %c1023_i32_83 dim 1 : vector<8x1024xf32>, i32 -> vector<8x1024xf32>
    %217 = arith.addf %215, %216 : vector<8x1024xf32>
    %cst_84 = arith.constant 5.000000e-01 : f32
    %218 = vector.broadcast %cst_84 : f32 to vector<8x1024xf32>
    %219 = arith.mulf %218, %217 : vector<8x1024xf32>
    %c4_i32 = arith.constant 4 : i32
    %220 = tpu.dynamic_rotate %219 by %c4_i32 dim 1 : vector<8x1024xf32>, i32 -> vector<8x1024xf32>
    %c4_i32_85 = arith.constant 4 : i32
    %221 = vector.broadcast %c4_i32_85 : i32 to vector<1x1024xi32>
    %222 = arith.cmpi sge, %1, %221 : vector<1x1024xi32>
    %223 = arith.extui %222 : vector<1x1024xi1> to vector<1x1024xi32>
    %224 = arith.sitofp %223 : vector<1x1024xi32> to vector<1x1024xf32>
    %225 = vector.broadcast %224 : vector<1x1024xf32> to vector<8x1024xf32>
    %226 = arith.mulf %220, %225 : vector<8x1024xf32>
    %c2_i32_86 = arith.constant 2 : i32
    %227 = tpu.dynamic_rotate %219 by %c2_i32_86 dim 1 : vector<8x1024xf32>, i32 -> vector<8x1024xf32>
    %c2_i32_87 = arith.constant 2 : i32
    %228 = vector.broadcast %c2_i32_87 : i32 to vector<1x1024xi32>
    %229 = arith.cmpi sge, %1, %228 : vector<1x1024xi32>
    %230 = arith.extui %229 : vector<1x1024xi1> to vector<1x1024xi32>
    %231 = arith.sitofp %230 : vector<1x1024xi32> to vector<1x1024xf32>
    %232 = vector.broadcast %231 : vector<1x1024xf32> to vector<8x1024xf32>
    %233 = arith.mulf %227, %232 : vector<8x1024xf32>
    %c1022_i32_88 = arith.constant 1022 : i32
    %234 = tpu.dynamic_rotate %219 by %c1022_i32_88 dim 1 : vector<8x1024xf32>, i32 -> vector<8x1024xf32>
    %c126_i32_89 = arith.constant 126 : i32
    %235 = vector.broadcast %c126_i32_89 : i32 to vector<1x1024xi32>
    %236 = arith.cmpi slt, %1, %235 : vector<1x1024xi32>
    %237 = arith.extui %236 : vector<1x1024xi1> to vector<1x1024xi32>
    %238 = arith.sitofp %237 : vector<1x1024xi32> to vector<1x1024xf32>
    %239 = vector.broadcast %238 : vector<1x1024xf32> to vector<8x1024xf32>
    %240 = arith.mulf %234, %239 : vector<8x1024xf32>
    %c1020_i32 = arith.constant 1020 : i32
    %241 = tpu.dynamic_rotate %219 by %c1020_i32 dim 1 : vector<8x1024xf32>, i32 -> vector<8x1024xf32>
    %c124_i32 = arith.constant 124 : i32
    %242 = vector.broadcast %c124_i32 : i32 to vector<1x1024xi32>
    %243 = arith.cmpi slt, %1, %242 : vector<1x1024xi32>
    %244 = arith.extui %243 : vector<1x1024xi1> to vector<1x1024xi32>
    %245 = arith.sitofp %244 : vector<1x1024xi32> to vector<1x1024xf32>
    %246 = vector.broadcast %245 : vector<1x1024xf32> to vector<8x1024xf32>
    %247 = arith.mulf %241, %246 : vector<8x1024xf32>
    %248 = tpu.concatenate %226, %233, %219, %240, %247 in 0 : vector<8x1024xf32>, vector<8x1024xf32>, vector<8x1024xf32>, vector<8x1024xf32>, vector<8x1024xf32> -> vector<40x1024xf32>
    %249 = arith.truncf %248 : vector<40x1024xf32> to vector<40x1024xbf16>
    %c5_90 = arith.constant 5 : index
    %c0_91 = arith.constant 0 : index
    %c0_92 = arith.constant 0 : index
    %250 = vector.load %arg2[%c5_90, %c0_91, %c0_92] : memref<6x16x40xbf16, #tpu.memory_space<vmem>>, vector<1x16x40xbf16>
    %251 = vector.shape_cast %250 : vector<1x16x40xbf16> to vector<16x40xbf16>
    %cst_93 = arith.constant dense<0.000000e+00> : vector<16x1024xf32>
    %252 = tpu.matmul %251, %249, %cst_93 {dimension_numbers = #tpu.dot_dimension_numbers<[1], [0], [0], [1], [0, 0, 1, 1], [], []>} : vector<16x40xbf16>, vector<40x1024xbf16>, vector<16x1024xf32> -> vector<16x1024xf32>
    %c7 = arith.constant 7 : index
    %c0_94 = arith.constant 0 : index
    %c0_95 = arith.constant 0 : index
    %253 = vector.load %arg4[%c7, %c0_94, %c0_95] : memref<9x16x1xf32, #tpu.memory_space<vmem>>, vector<1x16x1xf32>
    %254 = vector.shape_cast %253 : vector<1x16x1xf32> to vector<16x1xf32>
    %255 = vector.broadcast %254 : vector<16x1xf32> to vector<16x1024xf32>
    %256 = arith.addf %252, %255 : vector<16x1024xf32>
    %cst_96 = arith.constant 0.000000e+00 : f32
    %257 = vector.broadcast %cst_96 : f32 to vector<16x1024xf32>
    %258 = arith.maximumf %256, %257 : vector<16x1024xf32>
    %c1022_i32_97 = arith.constant 1022 : i32
    %259 = tpu.dynamic_rotate %258 by %c1022_i32_97 dim 1 : vector<16x1024xf32>, i32 -> vector<16x1024xf32>
    %260 = arith.addf %258, %259 : vector<16x1024xf32>
    %cst_98 = arith.constant 5.000000e-01 : f32
    %261 = vector.broadcast %cst_98 : f32 to vector<16x1024xf32>
    %262 = arith.mulf %261, %260 : vector<16x1024xf32>
    %c8_i32 = arith.constant 8 : i32
    %263 = tpu.dynamic_rotate %262 by %c8_i32 dim 1 : vector<16x1024xf32>, i32 -> vector<16x1024xf32>
    %c8_i32_99 = arith.constant 8 : i32
    %264 = vector.broadcast %c8_i32_99 : i32 to vector<1x1024xi32>
    %265 = arith.cmpi sge, %1, %264 : vector<1x1024xi32>
    %266 = arith.extui %265 : vector<1x1024xi1> to vector<1x1024xi32>
    %267 = arith.sitofp %266 : vector<1x1024xi32> to vector<1x1024xf32>
    %268 = vector.broadcast %267 : vector<1x1024xf32> to vector<16x1024xf32>
    %269 = arith.mulf %263, %268 : vector<16x1024xf32>
    %c4_i32_100 = arith.constant 4 : i32
    %270 = tpu.dynamic_rotate %262 by %c4_i32_100 dim 1 : vector<16x1024xf32>, i32 -> vector<16x1024xf32>
    %c4_i32_101 = arith.constant 4 : i32
    %271 = vector.broadcast %c4_i32_101 : i32 to vector<1x1024xi32>
    %272 = arith.cmpi sge, %1, %271 : vector<1x1024xi32>
    %273 = arith.extui %272 : vector<1x1024xi1> to vector<1x1024xi32>
    %274 = arith.sitofp %273 : vector<1x1024xi32> to vector<1x1024xf32>
    %275 = vector.broadcast %274 : vector<1x1024xf32> to vector<16x1024xf32>
    %276 = arith.mulf %270, %275 : vector<16x1024xf32>
    %c1020_i32_102 = arith.constant 1020 : i32
    %277 = tpu.dynamic_rotate %262 by %c1020_i32_102 dim 1 : vector<16x1024xf32>, i32 -> vector<16x1024xf32>
    %c124_i32_103 = arith.constant 124 : i32
    %278 = vector.broadcast %c124_i32_103 : i32 to vector<1x1024xi32>
    %279 = arith.cmpi slt, %1, %278 : vector<1x1024xi32>
    %280 = arith.extui %279 : vector<1x1024xi1> to vector<1x1024xi32>
    %281 = arith.sitofp %280 : vector<1x1024xi32> to vector<1x1024xf32>
    %282 = vector.broadcast %281 : vector<1x1024xf32> to vector<16x1024xf32>
    %283 = arith.mulf %277, %282 : vector<16x1024xf32>
    %c1016_i32 = arith.constant 1016 : i32
    %284 = tpu.dynamic_rotate %262 by %c1016_i32 dim 1 : vector<16x1024xf32>, i32 -> vector<16x1024xf32>
    %c120_i32 = arith.constant 120 : i32
    %285 = vector.broadcast %c120_i32 : i32 to vector<1x1024xi32>
    %286 = arith.cmpi slt, %1, %285 : vector<1x1024xi32>
    %287 = arith.extui %286 : vector<1x1024xi1> to vector<1x1024xi32>
    %288 = arith.sitofp %287 : vector<1x1024xi32> to vector<1x1024xf32>
    %289 = vector.broadcast %288 : vector<1x1024xf32> to vector<16x1024xf32>
    %290 = arith.mulf %284, %289 : vector<16x1024xf32>
    %291 = tpu.concatenate %269, %276, %262, %283, %290 in 0 : vector<16x1024xf32>, vector<16x1024xf32>, vector<16x1024xf32>, vector<16x1024xf32>, vector<16x1024xf32> -> vector<80x1024xf32>
    %292 = arith.truncf %291 : vector<80x1024xf32> to vector<80x1024xbf16>
    %c2_104 = arith.constant 2 : index
    %c0_105 = arith.constant 0 : index
    %c0_106 = arith.constant 0 : index
    %293 = vector.load %arg3[%c2_104, %c0_105, %c0_106] : memref<3x16x80xbf16, #tpu.memory_space<vmem>>, vector<1x16x80xbf16>
    %294 = vector.shape_cast %293 : vector<1x16x80xbf16> to vector<16x80xbf16>
    %cst_107 = arith.constant dense<0.000000e+00> : vector<16x1024xf32>
    %295 = tpu.matmul %294, %292, %cst_107 {dimension_numbers = #tpu.dot_dimension_numbers<[1], [0], [0], [1], [0, 0, 1, 1], [], []>} : vector<16x80xbf16>, vector<80x1024xbf16>, vector<16x1024xf32> -> vector<16x1024xf32>
    %c8 = arith.constant 8 : index
    %c0_108 = arith.constant 0 : index
    %c0_109 = arith.constant 0 : index
    %296 = vector.load %arg4[%c8, %c0_108, %c0_109] : memref<9x16x1xf32, #tpu.memory_space<vmem>>, vector<1x16x1xf32>
    %297 = vector.shape_cast %296 : vector<1x16x1xf32> to vector<16x1xf32>
    %298 = vector.broadcast %297 : vector<16x1xf32> to vector<16x1024xf32>
    %299 = arith.addf %295, %298 : vector<16x1024xf32>
    %300 = vector.extract_strided_slice %299 {offsets = [0, 0], sizes = [1, 1024], strides = [1, 1]} : vector<16x1024xf32> to vector<1x1024xf32>
    %cst_110 = arith.constant 0.000000e+00 : f32
    %301 = vector.broadcast %cst_110 : f32 to vector<1x1024xf32>
    %302 = arith.maximumf %300, %301 : vector<1x1024xf32>
    %c1020_i32_111 = arith.constant 1020 : i32
    %303 = tpu.dynamic_rotate %302 by %c1020_i32_111 dim 1 : vector<1x1024xf32>, i32 -> vector<1x1024xf32>
    %304 = arith.addf %302, %303 : vector<1x1024xf32>
    %cst_112 = arith.constant 5.000000e-01 : f32
    %305 = vector.broadcast %cst_112 : f32 to vector<1x1024xf32>
    %306 = arith.mulf %305, %304 : vector<1x1024xf32>
    %307 = vector.extract_strided_slice %306 {offsets = [0, 0], sizes = [1, 128], strides = [1, 1]} : vector<1x1024xf32> to vector<1x128xf32>
    %308 = vector.extract_strided_slice %306 {offsets = [0, 128], sizes = [1, 128], strides = [1, 1]} : vector<1x1024xf32> to vector<1x128xf32>
    %309 = vector.extract_strided_slice %306 {offsets = [0, 256], sizes = [1, 128], strides = [1, 1]} : vector<1x1024xf32> to vector<1x128xf32>
    %310 = vector.extract_strided_slice %306 {offsets = [0, 384], sizes = [1, 128], strides = [1, 1]} : vector<1x1024xf32> to vector<1x128xf32>
    %311 = vector.extract_strided_slice %306 {offsets = [0, 512], sizes = [1, 128], strides = [1, 1]} : vector<1x1024xf32> to vector<1x128xf32>
    %312 = vector.extract_strided_slice %306 {offsets = [0, 640], sizes = [1, 128], strides = [1, 1]} : vector<1x1024xf32> to vector<1x128xf32>
    %313 = vector.extract_strided_slice %306 {offsets = [0, 768], sizes = [1, 128], strides = [1, 1]} : vector<1x1024xf32> to vector<1x128xf32>
    %314 = vector.extract_strided_slice %306 {offsets = [0, 896], sizes = [1, 128], strides = [1, 1]} : vector<1x1024xf32> to vector<1x128xf32>
    %315 = tpu.concatenate %307, %308, %309, %310, %311, %312, %313, %314 in 0 : vector<1x128xf32>, vector<1x128xf32>, vector<1x128xf32>, vector<1x128xf32>, vector<1x128xf32>, vector<1x128xf32>, vector<1x128xf32>, vector<1x128xf32> -> vector<8x128xf32>
    %316 = arith.truncf %315 : vector<8x128xf32> to vector<8x128xbf16>
    %c0_113 = arith.constant 0 : index
    %c0_114 = arith.constant 0 : index
    %317 = vector.load %arg7[%c0_113, %c0_114] : memref<128x128xbf16, #tpu.memory_space<vmem>>, vector<128x128xbf16>
    %cst_115 = arith.constant dense<0.000000e+00> : vector<8x128xf32>
    %318 = tpu.matmul %316, %317, %cst_115 {dimension_numbers = #tpu.dot_dimension_numbers<[1], [0], [0], [1], [0, 0, 1, 1], [], []>} : vector<8x128xbf16>, vector<128x128xbf16>, vector<8x128xf32> -> vector<8x128xf32>
    %c0_116 = arith.constant 0 : index
    %c0_117 = arith.constant 0 : index
    %319 = vector.load %arg8[%c0_116, %c0_117] : memref<1x128xf32, #tpu.memory_space<vmem>>, vector<1x128xf32>
    %320 = vector.broadcast %319 : vector<1x128xf32> to vector<8x128xf32>
    %321 = arith.addf %318, %320 : vector<8x128xf32>
    %cst_118 = arith.constant 0.000000e+00 : f32
    %322 = vector.broadcast %cst_118 : f32 to vector<8x128xf32>
    %323 = arith.subf %322, %321 : vector<8x128xf32>
    %324 = math.exp %323 : vector<8x128xf32>
    %cst_119 = arith.constant 1.000000e+00 : f32
    %325 = vector.broadcast %cst_119 : f32 to vector<8x128xf32>
    %326 = arith.addf %325, %324 : vector<8x128xf32>
    %327 = tpu.reciprocal %326 {approx = true} : vector<8x128xf32> -> vector<8x128xf32>
    %c0_120 = arith.constant 0 : index
    %c0_121 = arith.constant 0 : index
    %328 = vector.load %arg10[%c0_120, %c0_121] : memref<8x128xf32, #tpu.memory_space<vmem>>, vector<8x128xf32>
    tpu.vector_store %arg10[%c0_120, %c0_121], %327 {strides = array<i32>} : memref<8x128xf32, #tpu.memory_space<vmem>>, vector<8x128xf32>,
    return
  }
  func.func @transform_0(%arg0: i32) -> (i32, i32) {
    %c0_i32 = arith.constant 0 : i32
    %c0_i32_0 = arith.constant 0 : i32
    return %c0_i32, %arg0 : i32, i32
  }
  func.func @transform_1(%arg0: i32) -> (i32, i32, i32) {
    %c0_i32 = arith.constant 0 : i32
    %c0_i32_0 = arith.constant 0 : i32
    %c0_i32_1 = arith.constant 0 : i32
    %c0_i32_2 = arith.constant 0 : i32
    return %c0_i32, %c0_i32_0, %c0_i32_1 : i32, i32, i32
  }
  func.func @transform_2(%arg0: i32) -> (i32, i32, i32) {
    %c0_i32 = arith.constant 0 : i32
    %c0_i32_0 = arith.constant 0 : i32
    %c0_i32_1 = arith.constant 0 : i32
    %c0_i32_2 = arith.constant 0 : i32
    return %c0_i32, %c0_i32_0, %c0_i32_1 : i32, i32, i32
  }
  func.func @transform_3(%arg0: i32) -> (i32, i32, i32) {
    %c0_i32 = arith.constant 0 : i32
    %c0_i32_0 = arith.constant 0 : i32
    %c0_i32_1 = arith.constant 0 : i32
    %c0_i32_2 = arith.constant 0 : i32
    return %c0_i32, %c0_i32_0, %c0_i32_1 : i32, i32, i32
  }
  func.func @transform_4(%arg0: i32) -> (i32, i32) {
    %c0_i32 = arith.constant 0 : i32
    %c0_i32_0 = arith.constant 0 : i32
    %c0_i32_1 = arith.constant 0 : i32
    return %c0_i32, %c0_i32_0 : i32, i32
  }
  func.func @transform_5(%arg0: i32) -> (i32, i32) {
    %c0_i32 = arith.constant 0 : i32
    %c0_i32_0 = arith.constant 0 : i32
    %c0_i32_1 = arith.constant 0 : i32
    return %c0_i32, %c0_i32_0 : i32, i32
  }
  func.func @transform_6(%arg0: i32) -> (i32, i32) {
    %c0_i32 = arith.constant 0 : i32
    %c0_i32_0 = arith.constant 0 : i32
    %c0_i32_1 = arith.constant 0 : i32
    return %c0_i32, %c0_i32_0 : i32, i32
  }
  func.func @transform_7(%arg0: i32) -> (i32, i32) {
    %c0_i32 = arith.constant 0 : i32
    %c0_i32_0 = arith.constant 0 : i32
    %c0_i32_1 = arith.constant 0 : i32
    return %c0_i32, %c0_i32_0 : i32, i32
  }
  func.func @transform_8(%arg0: i32) -> (i32, i32) {
    %c0_i32 = arith.constant 0 : i32
    %c0_i32_0 = arith.constant 0 : i32
    return %c0_i32, %arg0 : i32, i32
  }
  func.func @transform_9(%arg0: i32) -> (i32, i32) {
    %c0_i32 = arith.constant 0 : i32
    %c0_i32_0 = arith.constant 0 : i32
    return %arg0, %c0_i32 : i32, i32
  }
}

</mosaic_0001>

<llo_original>
// kernel: tpu_custom_call.1
$region0: #{tpu_custom_call.1}
  #allocation0 [shape = 'u32[]', space=smem, size = 0x4, offset = 0x4, fixed_abs, tag = 'smem constant byte address 0x4 - core index']
  #allocation1 [shape = 'u32[144,128]{1,0:T(1,128)}', space=vmem, size = 0x12000, scoped, tag = 'internal scratch']
  %s0 = inlined_call_operand.hbm [shape: f32[1,1024], index: 0, kind: input, shape index: {}]
  %s1 = inlined_call_operand.hbm [shape: bf16[6,16,40], index: 1, kind: input, shape index: {}]
  %s2 = inlined_call_operand.vmem [shape: bf16[3,16,80], index: 2, kind: input, shape index: {}]
  %s3 = inlined_call_operand.vmem [shape: f32[9,16,1], index: 3, kind: input, shape index: {}]
  %s4 = inlined_call_operand.vmem [shape: bf16[128,128], index: 4, kind: input, shape index: {}]
  %s5 = inlined_call_operand.vmem [shape: f32[1,128], index: 5, kind: input, shape index: {}]
  %s6 = inlined_call_operand.vmem [shape: bf16[128,128], index: 6, kind: input, shape index: {}]
  %s7 = inlined_call_operand.vmem [shape: f32[1,128], index: 7, kind: input, shape index: {}]
  %s8 = inlined_call_operand.hbm [shape: f32[1,1024], index: 8, kind: output, shape index: {0}]
  %s9 = inlined_call_operand.hbm [shape: f32[8,128], index: 9, kind: output, shape index: {1}]
  %10 = xla_tuple %s8, %s9
  %s11 = sld [smem:[#allocation0]]
  $region58: #{tpu_custom_call.1} parent=0
    _
  %s13 = ssub.s32 1, %s11
  %s14 = scalar_select 0, %s13, %s11
  $region1: #{tpu_custom_call.1} parent=0
    #allocation2 [shape = 'u8[4096]{0}', space=vmem, size = 0x1000, scoped, tag = 'input window, operand 0, single buffered']
    #allocation3 [shape = 's32[1]{0}', space=sflag, size = 0x4, scoped, tag = 'scoped memory for tpu_custom_call.1']
    #allocation4 [shape = 's32[1]{0}', space=sflag, size = 0x4, scoped, tag = 'scoped memory for tpu_custom_call.1']
    #allocation5 [shape = 'u8[24576]{0}', space=vmem, size = 0x6000, scoped, tag = 'input window, operand 1, single buffered']
    #allocation6 [shape = 's32[1]{0}', space=sflag, size = 0x4, scoped, tag = 'scoped memory for tpu_custom_call.1']
    #allocation7 [shape = 'u8[4096]{0}', space=vmem, size = 0x1000, scoped, tag = 'output window, operand 0, single buffered']
    #allocation8 [shape = 'u8[4096]{0}', space=vmem, size = 0x1000, scoped, tag = 'output window, operand 1, single buffered']
    #allocation9 [shape = 's32[1]{0}', space=sflag, size = 0x4, scoped, tag = 'scoped memory for tpu_custom_call.1']
    %15 = vsyncpa [#allocation3], 0
    %16 = vsyncpa [#allocation6], 0
    %17 = vsyncpa [#allocation4], 0
    %18 = vsyncpa [#allocation9], 0
    // Predicated region
    $region2: #{tpu_custom_call.1} parent=1 // pred_check
      _
    $region3: #{tpu_custom_call.1} parent=1 // pred_check_branch
      %20 = sbr.rel (0) target = $region5
    $region4: #{tpu_custom_call.1} parent=1 // pred_region
      %s22 = ssub.s32 128, 128
      %23 = vsyncadd [#allocation3], %s22
      %s25 = sshll.u32 [#allocation2], 4
      %s26 = int_to_ptr.vmem [resolvable:$true] %s25
      %28 = dma.hbm_to_vmem [thread:$0]  %s0, 128, %s26, [#allocation3]
    $region5: #{tpu_custom_call.1} parent=1 // pred_fallthru
      _
    // Predicated region
    $region6: #{tpu_custom_call.1} parent=1 // pred_check
      _
    $region7: #{tpu_custom_call.1} parent=1 // pred_check_branch
      %30 = sbr.rel (0) target = $region9
    $region8: #{tpu_custom_call.1} parent=1 // pred_region
      %s32 = ssub.s32 768, 768
      %33 = vsyncadd [#allocation6], %s32
      %s34 = sshll.u32 [#allocation5], 4
      %s35 = int_to_ptr.vmem [resolvable:$true] %s34
      %40 = dma.hbm_to_vmem [thread:$0]  %s1, 768, %s35, [#allocation6], 64, 64, 4
    $region9: #{tpu_custom_call.1} parent=1 // pred_fallthru
      _
    // Predicated region
    $region10: #{tpu_custom_call.1} parent=1 // pred_check
      _
    $region11: #{tpu_custom_call.1} parent=1 // pred_check_branch
      %42 = sbr.rel (0) target = $region13
    $region12: #{tpu_custom_call.1} parent=1 // pred_region
      _
    $region13: #{tpu_custom_call.1} parent=1 // pred_fallthru
      _
    // Predicated region
    $region14: #{tpu_custom_call.1} parent=1 // pred_check
      _
    $region15: #{tpu_custom_call.1} parent=1 // pred_check_branch
      %44 = sbr.rel (0) target = $region17
    $region16: #{tpu_custom_call.1} parent=1 // pred_region
      _
    $region17: #{tpu_custom_call.1} parent=1 // pred_fallthru
      _
    // Predicated region
    $region18: #{tpu_custom_call.1} parent=1 // pred_check
      _
    $region19: #{tpu_custom_call.1} parent=1 // pred_check_branch
      %46 = sbr.rel (0) target = $region21
    $region20: #{tpu_custom_call.1} parent=1 // pred_region
      _
    $region21: #{tpu_custom_call.1} parent=1 // pred_fallthru
      _
    // Predicated region
    $region22: #{tpu_custom_call.1} parent=1 // pred_check
      _
    $region23: #{tpu_custom_call.1} parent=1 // pred_check_branch
      %48 = sbr.rel (0) target = $region25
    $region24: #{tpu_custom_call.1} parent=1 // pred_region
      _
    $region25: #{tpu_custom_call.1} parent=1 // pred_fallthru
      _
    // Predicated region
    $region26: #{tpu_custom_call.1} parent=1 // pred_check
      _
    $region27: #{tpu_custom_call.1} parent=1 // pred_check_branch
      %50 = sbr.rel (0) target = $region29
    $region28: #{tpu_custom_call.1} parent=1 // pred_region
      _
    $region29: #{tpu_custom_call.1} parent=1 // pred_fallthru
      _
    // Predicated region
    $region30: #{tpu_custom_call.1} parent=1 // pred_check
      _
    $region31: #{tpu_custom_call.1} parent=1 // pred_check_branch
      %52 = sbr.rel (0) target = $region33
    $region32: #{tpu_custom_call.1} parent=1 // pred_region
      _
    $region33: #{tpu_custom_call.1} parent=1 // pred_fallthru
      _
    // Predicated region
    $region34: #{tpu_custom_call.1} parent=1 // pred_check
      _
    $region35: #{tpu_custom_call.1} parent=1 // pred_check_branch
      %54 = sbr.rel (0) target = $region37
    $region36: #{tpu_custom_call.1} parent=1 // pred_region
      %55 = dma.done [#allocation3], 128
    $region37: #{tpu_custom_call.1} parent=1 // pred_fallthru
      _
    // Predicated region
    $region38: #{tpu_custom_call.1} parent=1 // pred_check
      _
    $region39: #{tpu_custom_call.1} parent=1 // pred_check_branch
      %57 = sbr.rel (0) target = $region41
    $region40: #{tpu_custom_call.1} parent=1 // pred_region
      %58 = dma.done [#allocation6], 768
    $region41: #{tpu_custom_call.1} parent=1 // pred_fallthru
      _
    %v60 = vlaneseq
    %v61 = vand.u32 %v60, 127
    %v62 = vld [vmem:[#allocation2] sm:$0xff]
    %v64 = vlaneseq
    %v65 = vshrl.u32 %v64, 7
    %v66 = vsub.s32 0, %v65
    %v67 = vrot.slane %v62, %v66
    %v68 = vlaneseq
    %v69 = vshrl.u32 %v68, 7
    %v70 = vsub.s32 1, %v69
    %v71 = vrot.slane %v62, %v70
    %v72 = vlaneseq
    %v73 = vshrl.u32 %v72, 7
    %v74 = vsub.s32 2, %v73
    %v75 = vrot.slane %v62, %v74
    %v76 = vlaneseq
    %v77 = vshrl.u32 %v76, 7
    %v78 = vsub.s32 3, %v77
    %v79 = vrot.slane %v62, %v78
    %v80 = vlaneseq
    %v81 = vshrl.u32 %v80, 7
    %v82 = vsub.s32 4, %v81
    %v83 = vrot.slane %v62, %v82
    %v84 = vlaneseq
    %v85 = vshrl.u32 %v84, 7
    %v86 = vsub.s32 5, %v85
    %v87 = vrot.slane %v62, %v86
    %v88 = vlaneseq
    %v89 = vshrl.u32 %v88, 7
    %v90 = vsub.s32 6, %v89
    %v91 = vrot.slane %v62, %v90
    %v92 = vlaneseq
    %v93 = vshrl.u32 %v92, 7
    %v94 = vsub.s32 7, %v93
    %v95 = vrot.slane %v62, %v94
    %104 = vrot.lane.b32.xlu0 %v67, 2
    %v105 = vpop.permute.xlu0 %104
    %106 = vrot.lane.b32.xlu0 %v71, 2
    %v107 = vpop.permute.xlu0 %106
    %108 = vrot.lane.b32.xlu0 %v75, 2
    %v109 = vpop.permute.xlu0 %108
    %110 = vrot.lane.b32.xlu0 %v79, 2
    %v111 = vpop.permute.xlu0 %110
    %112 = vrot.lane.b32.xlu0 %v83, 2
    %v113 = vpop.permute.xlu0 %112
    %114 = vrot.lane.b32.xlu0 %v87, 2
    %v115 = vpop.permute.xlu0 %114
    %116 = vrot.lane.b32.xlu0 %v91, 2
    %v117 = vpop.permute.xlu0 %116
    %118 = vrot.lane.b32.xlu0 %v95, 2
    %v119 = vpop.permute.xlu0 %118
    %vm120 = vcmp.lt.s32.totalorder %v61, 2
    %v121 = vsel %vm120, %v117, %v119
    %v122 = vsel %vm120, %v115, %v117
    %v123 = vsel %vm120, %v113, %v115
    %v124 = vsel %vm120, %v111, %v113
    %v125 = vsel %vm120, %v109, %v111
    %v126 = vsel %vm120, %v107, %v109
    %v127 = vsel %vm120, %v105, %v107
    %v128 = vsel %vm120, %v119, %v105
    %vm129 = vcmp.ge.s32.totalorder %v61, 2
    %v130 = vsel %vm129, 1, 0
    %v131 = vcvt.s32.f32 %v130
    %v132 = vlaneseq
    %v133 = vshrl.u32 %v132, 7
    %v134 = vsub.s32 0, %v133
    %v135 = vrot.slane %v131, %v134
    %v136 = vmul.f32 %v128, %v135
    %v137 = vmul.f32 %v127, %v135
    %v138 = vmul.f32 %v126, %v135
    %v139 = vmul.f32 %v125, %v135
    %v140 = vmul.f32 %v124, %v135
    %v141 = vmul.f32 %v123, %v135
    %v142 = vmul.f32 %v122, %v135
    %v143 = vmul.f32 %v121, %v135
    %144 = vrot.lane.b32.xlu0 %v67, 1
    %v145 = vpop.permute.xlu0 %144
    %146 = vrot.lane.b32.xlu0 %v71, 1
    %v147 = vpop.permute.xlu0 %146
    %148 = vrot.lane.b32.xlu0 %v75, 1
    %v149 = vpop.permute.xlu0 %148
    %150 = vrot.lane.b32.xlu0 %v79, 1
    %v151 = vpop.permute.xlu0 %150
    %152 = vrot.lane.b32.xlu0 %v83, 1
    %v153 = vpop.permute.xlu0 %152
    %154 = vrot.lane.b32.xlu0 %v87, 1
    %v155 = vpop.permute.xlu0 %154
    %156 = vrot.lane.b32.xlu0 %v91, 1
    %v157 = vpop.permute.xlu0 %156
    %158 = vrot.lane.b32.xlu0 %v95, 1
    %v159 = vpop.permute.xlu0 %158
    %vm160 = vcmp.lt.s32.totalorder %v61, 1
    %v161 = vsel %vm160, %v157, %v159
    %v162 = vsel %vm160, %v155, %v157
    %v163 = vsel %vm160, %v153, %v155
    %v164 = vsel %vm160, %v151, %v153
    %v165 = vsel %vm160, %v149, %v151
    %v166 = vsel %vm160, %v147, %v149
    %v167 = vsel %vm160, %v145, %v147
    %v168 = vsel %vm160, %v159, %v145
    %vm169 = vcmp.ge.s32.totalorder %v61, 1
    %v170 = vsel %vm169, 1, 0
    %v171 = vcvt.s32.f32 %v170
    %v172 = vlaneseq
    %v173 = vshrl.u32 %v172, 7
    %v174 = vsub.s32 0, %v173
    %v175 = vrot.slane %v171, %v174
    %v176 = vmul.f32 %v168, %v175
    %v177 = vmul.f32 %v167, %v175
    %v178 = vmul.f32 %v166, %v175
    %v179 = vmul.f32 %v165, %v175
    %v180 = vmul.f32 %v164, %v175
    %v181 = vmul.f32 %v163, %v175
    %v182 = vmul.f32 %v162, %v175
    %v183 = vmul.f32 %v161, %v175
    %184 = vrot.lane.b32.xlu0 %v67, 127
    %v185 = vpop.permute.xlu0 %184
    %186 = vrot.lane.b32.xlu0 %v71, 127
    %v187 = vpop.permute.xlu0 %186
    %188 = vrot.lane.b32.xlu0 %v75, 127
    %v189 = vpop.permute.xlu0 %188
    %190 = vrot.lane.b32.xlu0 %v79, 127
    %v191 = vpop.permute.xlu0 %190
    %192 = vrot.lane.b32.xlu0 %v83, 127
    %v193 = vpop.permute.xlu0 %192
    %194 = vrot.lane.b32.xlu0 %v87, 127
    %v195 = vpop.permute.xlu0 %194
    %196 = vrot.lane.b32.xlu0 %v91, 127
    %v197 = vpop.permute.xlu0 %196
    %198 = vrot.lane.b32.xlu0 %v95, 127
    %v199 = vpop.permute.xlu0 %198
    %vm200 = vcmp.lt.s32.totalorder %v61, 127
    %v201 = vsel %vm200, %v197, %v199
    %v202 = vsel %vm200, %v195, %v197
    %v203 = vsel %vm200, %v193, %v195
    %v204 = vsel %vm200, %v191, %v193
    %v205 = vsel %vm200, %v189, %v191
    %v206 = vsel %vm200, %v187, %v189
    %v207 = vsel %vm200, %v185, %v187
    %v208 = vsel %vm200, %v199, %v185
    %v209 = vsel %vm200, 1, 0
    %v210 = vcvt.s32.f32 %v209
    %v211 = vlaneseq
    %v212 = vshrl.u32 %v211, 7
    %v213 = vsub.s32 0, %v212
    %v214 = vrot.slane %v210, %v213
    %v215 = vmul.f32 %v207, %v214
    %v216 = vmul.f32 %v206, %v214
    %v217 = vmul.f32 %v205, %v214
    %v218 = vmul.f32 %v204, %v214
    %v219 = vmul.f32 %v203, %v214
    %v220 = vmul.f32 %v202, %v214
    %v221 = vmul.f32 %v201, %v214
    %v222 = vmul.f32 %v208, %v214
    %223 = vrot.lane.b32.xlu0 %v67, 126
    %v224 = vpop.permute.xlu0 %223
    %225 = vrot.lane.b32.xlu0 %v71, 126
    %v226 = vpop.permute.xlu0 %225
    %227 = vrot.lane.b32.xlu0 %v75, 126
    %v228 = vpop.permute.xlu0 %227
    %229 = vrot.lane.b32.xlu0 %v79, 126
    %v230 = vpop.permute.xlu0 %229
    %231 = vrot.lane.b32.xlu0 %v83, 126
    %v232 = vpop.permute.xlu0 %231
    %233 = vrot.lane.b32.xlu0 %v87, 126
    %v234 = vpop.permute.xlu0 %233
    %235 = vrot.lane.b32.xlu0 %v91, 126
    %v236 = vpop.permute.xlu0 %235
    %237 = vrot.lane.b32.xlu0 %v95, 126
    %v238 = vpop.permute.xlu0 %237
    %vm239 = vcmp.lt.s32.totalorder %v61, 126
    %v240 = vsel %vm239, %v236, %v238
    %v241 = vsel %vm239, %v234, %v236
    %v242 = vsel %vm239, %v232, %v234
    %v243 = vsel %vm239, %v230, %v232
    %v244 = vsel %vm239, %v228, %v230
    %v245 = vsel %vm239, %v226, %v228
    %v246 = vsel %vm239, %v224, %v226
    %v247 = vsel %vm239, %v238, %v224
    %v248 = vsel %vm239, 1, 0
    %v249 = vcvt.s32.f32 %v248
    %v250 = vlaneseq
    %v251 = vshrl.u32 %v250, 7
    %v252 = vsub.s32 0, %v251
    %v253 = vrot.slane %v249, %v252
    %v254 = vmul.f32 %v246, %v253
    %v255 = vmul.f32 %v245, %v253
    %v256 = vmul.f32 %v244, %v253
    %v257 = vmul.f32 %v243, %v253
    %v258 = vmul.f32 %v242, %v253
    %v259 = vmul.f32 %v241, %v253
    %v260 = vmul.f32 %v240, %v253
    %v261 = vmul.f32 %v247, %v253
    %v262 = vpack.c.bf16 %v176, %v136
    %v263 = vpack.c.bf16 %v177, %v137
    %v264 = vpack.c.bf16 %v178, %v138
    %v265 = vpack.c.bf16 %v179, %v139
    %v266 = vpack.c.bf16 %v180, %v140
    %v267 = vpack.c.bf16 %v181, %v141
    %v268 = vpack.c.bf16 %v182, %v142
    %v269 = vpack.c.bf16 %v183, %v143
    %v270 = vpack.c.bf16 %v215, %v67
    %v271 = vpack.c.bf16 %v216, %v71
    %v272 = vpack.c.bf16 %v217, %v75
    %v273 = vpack.c.bf16 %v218, %v79
    %v274 = vpack.c.bf16 %v219, %v83
    %v275 = vpack.c.bf16 %v220, %v87
    %v276 = vpack.c.bf16 %v221, %v91
    %v277 = vpack.c.bf16 %v222, %v95
    %v278 = vpack.c.bf16 %v254, %v254
    %v279 = vpack.c.bf16 %v255, %v255
    %v280 = vpack.c.bf16 %v256, %v256
    %v281 = vpack.c.bf16 %v257, %v257
    %v282 = vpack.c.bf16 %v258, %v258
    %v283 = vpack.c.bf16 %v259, %v259
    %v284 = vpack.c.bf16 %v260, %v260
    %v285 = vpack.c.bf16 %v261, %v261
    %v286 = vld [vmem:[#allocation5] sm:$0xf]
    %v287 = vld [vmem:[#allocation5 + $0x4] sm:$0xf]
    %v288 = vld [vmem:[%s3] sm:$0xff]
    %v289 = vld [vmem:[%s3 + $0x8] sm:$0xff]
    %291 = vset.pattern.permute.xlu0 0
    %292 = vperm.xlu0 %291, %v288
    %v293 = vpop.permute.xlu0 %292
    %296 = vset.pattern.permute.xlu0 0
    %297 = vperm.xlu0 %296, %v289
    %v298 = vpop.permute.xlu0 %297
    %v301 = vunpack.c.l.b16 %v286
    %v302 = vunpack.c.l.b16 %v287
    %v303 = vpack.c.b16 %v302, %v301
    %vm304 = vcmask 326656
    %v306 = vsel %vm304, %v303, 0
    %vm308 = vcmask 1043456
    %v310 = vsel %vm308, %v278, 0
    %v313 = vsel %vm308, %v279, 0
    %v316 = vsel %vm308, %v280, 0
    %v319 = vsel %vm308, %v281, 0
    %v322 = vsel %vm308, %v282, 0
    %v325 = vsel %vm308, %v283, 0
    %v328 = vsel %vm308, %v284, 0
    %v331 = vsel %vm308, %v285, 0
    %333 = vmatprep.subr.bf16.mxu0 0
    %334 = vmatpush1.bf16.msra.mxu0 0
    %335 = vmatprep.subr.bf16.mxu0 0
    %336 = vmatpush1.bf16.msra.mxu0 0
    %337 = vmatprep.subr.bf16.mxu0 0
    %338 = vmatpush1.bf16.msra.mxu0 0
    %339 = vmatprep.subr.bf16.mxu0 0
    %340 = vmatpush1.bf16.msra.mxu0 0
    %341 = vmatprep.subr.bf16.mxu0 0
    %342 = vmatpush1.bf16.msra.mxu0 0
    %343 = vmatprep.subr.bf16.mxu0 %v313
    %344 = vmatpush1.bf16.msra.mxu0 %v310
    %345 = vmatprep.subr.bf16.mxu0 %v271
    %346 = vmatpush1.bf16.msra.mxu0 %v270
    %347 = vmatprep.subr.bf16.mxu0 %v263
    %348 = vmatpush1.bf16.msra.mxu0 %v262
    %349 = vmatprep.subr.bf16.mxu0 0
    %350 = vmatpush2.bf16.msra.mxu0 0
    %351 = vmatprep.subr.bf16.mxu0 0
    %352 = vmatpush2.bf16.msra.mxu0 0
    %353 = vmatprep.subr.bf16.mxu0 0
    %354 = vmatpush2.bf16.msra.mxu0 0
    %355 = vmatprep.subr.bf16.mxu0 0
    %356 = vmatpush2.bf16.msra.mxu0 0
    %357 = vmatprep.subr.bf16.mxu0 0
    %358 = vmatpush2.bf16.msra.mxu0 0
    %359 = vmatprep.subr.bf16.mxu0 0
    %360 = vmatpush2.bf16.msra.mxu0 0
    %361 = vmatprep.subr.bf16.mxu0 0
    %362 = vmatpush2.bf16.msra.mxu0 0
    %363 = vmatprep.subr.bf16.mxu0 0
    %364 = vmatpush2.bf16.msra.mxu0 0
    %365 = vmatprep.mubr.bf16.mxu0 0
    %366 = vmatmul.mubr.bf16.gmra.mxu0 %v306
    %v367 = vpop.f32.mrf.mxu0
    %v368 = vadd.f32 %v293, %v367
    %v369 = vpop.f32.mrf.mxu0
    %v370 = vadd.f32 %v293, %v369
    %v371 = vpop.f32.mrf.mxu0
    %v372 = vpop.f32.mrf.mxu0
    %373 = vdwg.mxu0
    %374 = vmatprep.subr.bf16.mxu0 0
    %375 = vmatpush1.bf16.msra.mxu0 0
    %376 = vmatprep.subr.bf16.mxu0 0
    %377 = vmatpush1.bf16.msra.mxu0 0
    %378 = vmatprep.subr.bf16.mxu0 0
    %379 = vmatpush1.bf16.msra.mxu0 0
    %380 = vmatprep.subr.bf16.mxu0 0
    %381 = vmatpush1.bf16.msra.mxu0 0
    %382 = vmatprep.subr.bf16.mxu0 0
    %383 = vmatpush1.bf16.msra.mxu0 0
    %384 = vmatprep.subr.bf16.mxu0 %v319
    %385 = vmatpush1.bf16.msra.mxu0 %v316
    %386 = vmatprep.subr.bf16.mxu0 %v273
    %387 = vmatpush1.bf16.msra.mxu0 %v272
    %388 = vmatprep.subr.bf16.mxu0 %v265
    %389 = vmatpush1.bf16.msra.mxu0 %v264
    %390 = vmatprep.subr.bf16.mxu0 0
    %391 = vmatpush2.bf16.msra.mxu0 0
    %392 = vmatprep.subr.bf16.mxu0 0
    %393 = vmatpush2.bf16.msra.mxu0 0
    %394 = vmatprep.subr.bf16.mxu0 0
    %395 = vmatpush2.bf16.msra.mxu0 0
    %396 = vmatprep.subr.bf16.mxu0 0
    %397 = vmatpush2.bf16.msra.mxu0 0
    %398 = vmatprep.subr.bf16.mxu0 0
    %399 = vmatpush2.bf16.msra.mxu0 0
    %400 = vmatprep.subr.bf16.mxu0 0
    %401 = vmatpush2.bf16.msra.mxu0 0
    %402 = vmatprep.subr.bf16.mxu0 0
    %403 = vmatpush2.bf16.msra.mxu0 0
    %404 = vmatprep.subr.bf16.mxu0 0
    %405 = vmatpush2.bf16.msra.mxu0 0
    %406 = vmatprep.mubr.bf16.mxu0 0
    %407 = vmatmul.mubr.bf16.gmra.mxu0 %v306
    %v408 = vpop.f32.mrf.mxu0
    %v409 = vadd.f32 %v293, %v408
    %v410 = vpop.f32.mrf.mxu0
    %v411 = vadd.f32 %v293, %v410
    %v412 = vpop.f32.mrf.mxu0
    %v413 = vpop.f32.mrf.mxu0
    %414 = vdwg.mxu0
    %415 = vmatprep.subr.bf16.mxu0 0
    %416 = vmatpush1.bf16.msra.mxu0 0
    %417 = vmatprep.subr.bf16.mxu0 0
    %418 = vmatpush1.bf16.msra.mxu0 0
    %419 = vmatprep.subr.bf16.mxu0 0
    %420 = vmatpush1.bf16.msra.mxu0 0
    %421 = vmatprep.subr.bf16.mxu0 0
    %422 = vmatpush1.bf16.msra.mxu0 0
    %423 = vmatprep.subr.bf16.mxu0 0
    %424 = vmatpush1.bf16.msra.mxu0 0
    %425 = vmatprep.subr.bf16.mxu0 %v325
    %426 = vmatpush1.bf16.msra.mxu0 %v322
    %427 = vmatprep.subr.bf16.mxu0 %v275
    %428 = vmatpush1.bf16.msra.mxu0 %v274
    %429 = vmatprep.subr.bf16.mxu0 %v267
    %430 = vmatpush1.bf16.msra.mxu0 %v266
    %431 = vmatprep.subr.bf16.mxu0 0
    %432 = vmatpush2.bf16.msra.mxu0 0
    %433 = vmatprep.subr.bf16.mxu0 0
    %434 = vmatpush2.bf16.msra.mxu0 0
    %435 = vmatprep.subr.bf16.mxu0 0
    %436 = vmatpush2.bf16.msra.mxu0 0
    %437 = vmatprep.subr.bf16.mxu0 0
    %438 = vmatpush2.bf16.msra.mxu0 0
    %439 = vmatprep.subr.bf16.mxu0 0
    %440 = vmatpush2.bf16.msra.mxu0 0
    %441 = vmatprep.subr.bf16.mxu0 0
    %442 = vmatpush2.bf16.msra.mxu0 0
    %443 = vmatprep.subr.bf16.mxu0 0
    %444 = vmatpush2.bf16.msra.mxu0 0
    %445 = vmatprep.subr.bf16.mxu0 0
    %446 = vmatpush2.bf16.msra.mxu0 0
    %447 = vmatprep.mubr.bf16.mxu0 0
    %448 = vmatmul.mubr.bf16.gmra.mxu0 %v306
    %v449 = vpop.f32.mrf.mxu0
    %v450 = vadd.f32 %v293, %v449
    %v451 = vpop.f32.mrf.mxu0
    %v452 = vadd.f32 %v293, %v451
    %v453 = vpop.f32.mrf.mxu0
    %v454 = vpop.f32.mrf.mxu0
    %455 = vdwg.mxu0
    %456 = vmatprep.subr.bf16.mxu0 0
    %457 = vmatpush1.bf16.msra.mxu0 0
    %458 = vmatprep.subr.bf16.mxu0 0
    %459 = vmatpush1.bf16.msra.mxu0 0
    %460 = vmatprep.subr.bf16.mxu0 0
    %461 = vmatpush1.bf16.msra.mxu0 0
    %462 = vmatprep.subr.bf16.mxu0 0
    %463 = vmatpush1.bf16.msra.mxu0 0
    %464 = vmatprep.subr.bf16.mxu0 0
    %465 = vmatpush1.bf16.msra.mxu0 0
    %466 = vmatprep.subr.bf16.mxu0 %v331
    %467 = vmatpush1.bf16.msra.mxu0 %v328
    %468 = vmatprep.subr.bf16.mxu0 %v277
    %469 = vmatpush1.bf16.msra.mxu0 %v276
    %470 = vmatprep.subr.bf16.mxu0 %v269
    %471 = vmatpush1.bf16.msra.mxu0 %v268
    %472 = vmatprep.subr.bf16.mxu0 0
    %473 = vmatpush2.bf16.msra.mxu0 0
    %474 = vmatprep.subr.bf16.mxu0 0
    %475 = vmatpush2.bf16.msra.mxu0 0
    %476 = vmatprep.subr.bf16.mxu0 0
    %477 = vmatpush2.bf16.msra.mxu0 0
    %478 = vmatprep.subr.bf16.mxu0 0
    %479 = vmatpush2.bf16.msra.mxu0 0
    %480 = vmatprep.subr.bf16.mxu0 0
    %481 = vmatpush2.bf16.msra.mxu0 0
    %482 = vmatprep.subr.bf16.mxu0 0
    %483 = vmatpush2.bf16.msra.mxu0 0
    %484 = vmatprep.subr.bf16.mxu0 0
    %485 = vmatpush2.bf16.msra.mxu0 0
    %486 = vmatprep.subr.bf16.mxu0 0
    %487 = vmatpush2.bf16.msra.mxu0 0
    %488 = vmatprep.mubr.bf16.mxu0 0
    %489 = vmatmul.mubr.bf16.gmra.mxu0 %v306
    %v490 = vpop.f32.mrf.mxu0
    %v491 = vadd.f32 %v293, %v490
    %v492 = vpop.f32.mrf.mxu0
    %v493 = vadd.f32 %v293, %v492
    %v494 = vpop.f32.mrf.mxu0
    %v495 = vpop.f32.mrf.mxu0
    %496 = vdwg.mxu0
    %v497 = vmax.f32 %v368, 0.0
    %v498 = vmax.f32 %v370, 0.0
    %v499 = vmax.f32 %v409, 0.0
    %v500 = vmax.f32 %v411, 0.0
    %v501 = vmax.f32 %v450, 0.0
    %v502 = vmax.f32 %v452, 0.0
    %v503 = vmax.f32 %v491, 0.0
    %v504 = vmax.f32 %v493, 0.0
    %505 = vrot.lane.b32.xlu0 %v497, 2
    %v506 = vpop.permute.xlu0 %505
    %507 = vrot.lane.b32.xlu0 %v498, 2
    %v508 = vpop.permute.xlu0 %507
    %509 = vrot.lane.b32.xlu0 %v499, 2
    %v510 = vpop.permute.xlu0 %509
    %511 = vrot.lane.b32.xlu0 %v500, 2
    %v512 = vpop.permute.xlu0 %511
    %513 = vrot.lane.b32.xlu0 %v501, 2
    %v514 = vpop.permute.xlu0 %513
    %515 = vrot.lane.b32.xlu0 %v502, 2
    %v516 = vpop.permute.xlu0 %515
    %517 = vrot.lane.b32.xlu0 %v503, 2
    %v518 = vpop.permute.xlu0 %517
    %519 = vrot.lane.b32.xlu0 %v504, 2
    %v520 = vpop.permute.xlu0 %519
    %v521 = vsel %vm120, %v518, %v520
    %v522 = vsel %vm120, %v516, %v518
    %v523 = vsel %vm120, %v514, %v516
    %v524 = vsel %vm120, %v512, %v514
    %v525 = vsel %vm120, %v510, %v512
    %v526 = vsel %vm120, %v508, %v510
    %v527 = vsel %vm120, %v506, %v508
    %v528 = vsel %vm120, %v520, %v506
    %v529 = vmul.f32 %v528, %v135
    %v530 = vmul.f32 %v527, %v135
    %v531 = vmul.f32 %v526, %v135
    %v532 = vmul.f32 %v525, %v135
    %v533 = vmul.f32 %v524, %v135
    %v534 = vmul.f32 %v523, %v135
    %v535 = vmul.f32 %v522, %v135
    %v536 = vmul.f32 %v521, %v135
    %537 = vrot.lane.b32.xlu0 %v497, 1
    %v538 = vpop.permute.xlu0 %537
    %539 = vrot.lane.b32.xlu0 %v498, 1
    %v540 = vpop.permute.xlu0 %539
    %541 = vrot.lane.b32.xlu0 %v499, 1
    %v542 = vpop.permute.xlu0 %541
    %543 = vrot.lane.b32.xlu0 %v500, 1
    %v544 = vpop.permute.xlu0 %543
    %545 = vrot.lane.b32.xlu0 %v501, 1
    %v546 = vpop.permute.xlu0 %545
    %547 = vrot.lane.b32.xlu0 %v502, 1
    %v548 = vpop.permute.xlu0 %547
    %549 = vrot.lane.b32.xlu0 %v503, 1
    %v550 = vpop.permute.xlu0 %549
    %551 = vrot.lane.b32.xlu0 %v504, 1
    %v552 = vpop.permute.xlu0 %551
    %v553 = vsel %vm160, %v550, %v552
    %v554 = vsel %vm160, %v548, %v550
    %v555 = vsel %vm160, %v546, %v548
    %v556 = vsel %vm160, %v544, %v546
    %v557 = vsel %vm160, %v542, %v544
    %v558 = vsel %vm160, %v540, %v542
    %v559 = vsel %vm160, %v538, %v540
    %v560 = vsel %vm160, %v552, %v538
    %v561 = vmul.f32 %v560, %v175
    %v562 = vmul.f32 %v559, %v175
    %v563 = vmul.f32 %v558, %v175
    %v564 = vmul.f32 %v557, %v175
    %v565 = vmul.f32 %v556, %v175
    %v566 = vmul.f32 %v555, %v175
    %v567 = vmul.f32 %v554, %v175
    %v568 = vmul.f32 %v553, %v175
    %569 = vrot.lane.b32.xlu0 %v497, 127
    %v570 = vpop.permute.xlu0 %569
    %571 = vrot.lane.b32.xlu0 %v498, 127
    %v572 = vpop.permute.xlu0 %571
    %573 = vrot.lane.b32.xlu0 %v499, 127
    %v574 = vpop.permute.xlu0 %573
    %575 = vrot.lane.b32.xlu0 %v500, 127
    %v576 = vpop.permute.xlu0 %575
    %577 = vrot.lane.b32.xlu0 %v501, 127
    %v578 = vpop.permute.xlu0 %577
    %579 = vrot.lane.b32.xlu0 %v502, 127
    %v580 = vpop.permute.xlu0 %579
    %581 = vrot.lane.b32.xlu0 %v503, 127
    %v582 = vpop.permute.xlu0 %581
    %583 = vrot.lane.b32.xlu0 %v504, 127
    %v584 = vpop.permute.xlu0 %583
    %v585 = vsel %vm200, %v582, %v584
    %v586 = vsel %vm200, %v580, %v582
    %v587 = vsel %vm200, %v578, %v580
    %v588 = vsel %vm200, %v576, %v578
    %v589 = vsel %vm200, %v574, %v576
    %v590 = vsel %vm200, %v572, %v574
    %v591 = vsel %vm200, %v570, %v572
    %v592 = vsel %vm200, %v584, %v570
    %v593 = vmul.f32 %v591, %v214
    %v594 = vmul.f32 %v590, %v214
    %v595 = vmul.f32 %v589, %v214
    %v596 = vmul.f32 %v588, %v214
    %v597 = vmul.f32 %v587, %v214
    %v598 = vmul.f32 %v586, %v214
    %v599 = vmul.f32 %v585, %v214
    %v600 = vmul.f32 %v592, %v214
    %601 = vrot.lane.b32.xlu0 %v497, 126
    %v602 = vpop.permute.xlu0 %601
    %603 = vrot.lane.b32.xlu0 %v498, 126
    %v604 = vpop.permute.xlu0 %603
    %605 = vrot.lane.b32.xlu0 %v499, 126
    %v606 = vpop.permute.xlu0 %605
    %607 = vrot.lane.b32.xlu0 %v500, 126
    %v608 = vpop.permute.xlu0 %607
    %609 = vrot.lane.b32.xlu0 %v501, 126
    %v610 = vpop.permute.xlu0 %609
    %611 = vrot.lane.b32.xlu0 %v502, 126
    %v612 = vpop.permute.xlu0 %611
    %613 = vrot.lane.b32.xlu0 %v503, 126
    %v614 = vpop.permute.xlu0 %613
    %615 = vrot.lane.b32.xlu0 %v504, 126
    %v616 = vpop.permute.xlu0 %615
    %v617 = vsel %vm239, %v614, %v616
    %v618 = vsel %vm239, %v612, %v614
    %v619 = vsel %vm239, %v610, %v612
    %v620 = vsel %vm239, %v608, %v610
    %v621 = vsel %vm239, %v606, %v608
    %v622 = vsel %vm239, %v604, %v606
    %v623 = vsel %vm239, %v602, %v604
    %v624 = vsel %vm239, %v616, %v602
    %v625 = vmul.f32 %v623, %v253
    %v626 = vmul.f32 %v622, %v253
    %v627 = vmul.f32 %v621, %v253
    %v628 = vmul.f32 %v620, %v253
    %v629 = vmul.f32 %v619, %v253
    %v630 = vmul.f32 %v618, %v253
    %v631 = vmul.f32 %v617, %v253
    %v632 = vmul.f32 %v624, %v253
    %v633 = vpack.c.bf16 %v561, %v529
    %v634 = vpack.c.bf16 %v562, %v530
    %v635 = vpack.c.bf16 %v563, %v531
    %v636 = vpack.c.bf16 %v564, %v532
    %v637 = vpack.c.bf16 %v565, %v533
    %v638 = vpack.c.bf16 %v566, %v534
    %v639 = vpack.c.bf16 %v567, %v535
    %v640 = vpack.c.bf16 %v568, %v536
    %v641 = vpack.c.bf16 %v593, %v497
    %v642 = vpack.c.bf16 %v594, %v498
    %v643 = vpack.c.bf16 %v595, %v499
    %v644 = vpack.c.bf16 %v596, %v500
    %v645 = vpack.c.bf16 %v597, %v501
    %v646 = vpack.c.bf16 %v598, %v502
    %v647 = vpack.c.bf16 %v599, %v503
    %v648 = vpack.c.bf16 %v600, %v504
    %v649 = vpack.c.bf16 %v625, %v625
    %v650 = vpack.c.bf16 %v626, %v626
    %v651 = vpack.c.bf16 %v627, %v627
    %v652 = vpack.c.bf16 %v628, %v628
    %v653 = vpack.c.bf16 %v629, %v629
    %v654 = vpack.c.bf16 %v630, %v630
    %v655 = vpack.c.bf16 %v631, %v631
    %v656 = vpack.c.bf16 %v632, %v632
    %s657 = scalar_lea.vmem [#allocation5], 8
    %v658 = vld [vmem:[%s657] sm:$0xf]
    %v659 = vld [vmem:[%s657 + $0x4] sm:$0xf]
    %s660 = scalar_lea.vmem %s3, 16
    %v661 = vld [vmem:[%s660] sm:$0xff]
    %v662 = vld [vmem:[%s660 + $0x8] sm:$0xff]
    %664 = vset.pattern.permute.xlu0 0
    %665 = vperm.xlu0 %664, %v661
    %v666 = vpop.permute.xlu0 %665
    %669 = vset.pattern.permute.xlu0 0
    %670 = vperm.xlu0 %669, %v662
    %v671 = vpop.permute.xlu0 %670
    %v675 = vunpack.c.l.b16 %v658
    %v676 = vunpack.c.l.b16 %v659
    %v677 = vpack.c.b16 %v676, %v675
    %v679 = vsel %vm304, %v677, 0
    %v682 = vsel %vm308, %v649, 0
    %v685 = vsel %vm308, %v650, 0
    %v688 = vsel %vm308, %v651, 0
    %v691 = vsel %vm308, %v652, 0
    %v694 = vsel %vm308, %v653, 0
    %v697 = vsel %vm308, %v654, 0
    %v700 = vsel %vm308, %v655, 0
    %v703 = vsel %vm308, %v656, 0
    %705 = vmatprep.subr.bf16.mxu0 0
    %706 = vmatpush1.bf16.msra.mxu0 0
    %707 = vmatprep.subr.bf16.mxu0 0
    %708 = vmatpush1.bf16.msra.mxu0 0
    %709 = vmatprep.subr.bf16.mxu0 0
    %710 = vmatpush1.bf16.msra.mxu0 0
    %711 = vmatprep.subr.bf16.mxu0 0
    %712 = vmatpush1.bf16.msra.mxu0 0
    %713 = vmatprep.subr.bf16.mxu0 0
    %714 = vmatpush1.bf16.msra.mxu0 0
    %715 = vmatprep.subr.bf16.mxu0 %v685
    %716 = vmatpush1.bf16.msra.mxu0 %v682
    %717 = vmatprep.subr.bf16.mxu0 %v642
    %718 = vmatpush1.bf16.msra.mxu0 %v641
    %719 = vmatprep.subr.bf16.mxu0 %v634
    %720 = vmatpush1.bf16.msra.mxu0 %v633
    %721 = vmatprep.subr.bf16.mxu0 0
    %722 = vmatpush2.bf16.msra.mxu0 0
    %723 = vmatprep.subr.bf16.mxu0 0
    %724 = vmatpush2.bf16.msra.mxu0 0
    %725 = vmatprep.subr.bf16.mxu0 0
    %726 = vmatpush2.bf16.msra.mxu0 0
    %727 = vmatprep.subr.bf16.mxu0 0
    %728 = vmatpush2.bf16.msra.mxu0 0
    %729 = vmatprep.subr.bf16.mxu0 0
    %730 = vmatpush2.bf16.msra.mxu0 0
    %731 = vmatprep.subr.bf16.mxu0 0
    %732 = vmatpush2.bf16.msra.mxu0 0
    %733 = vmatprep.subr.bf16.mxu0 0
    %734 = vmatpush2.bf16.msra.mxu0 0
    %735 = vmatprep.subr.bf16.mxu0 0
    %736 = vmatpush2.bf16.msra.mxu0 0
    %737 = vmatprep.mubr.bf16.mxu0 0
    %738 = vmatmul.mubr.bf16.gmra.mxu0 %v679
    %v739 = vpop.f32.mrf.mxu0
    %v740 = vadd.f32 %v666, %v739
    %v741 = vpop.f32.mrf.mxu0
    %v742 = vadd.f32 %v666, %v741
    %v743 = vpop.f32.mrf.mxu0
    %v744 = vadd.f32 %v671, %v743
    %v745 = vpop.f32.mrf.mxu0
    %v746 = vadd.f32 %v671, %v745
    %747 = vdwg.mxu0
    %748 = vmatprep.subr.bf16.mxu0 0
    %749 = vmatpush1.bf16.msra.mxu0 0
    %750 = vmatprep.subr.bf16.mxu0 0
    %751 = vmatpush1.bf16.msra.mxu0 0
    %752 = vmatprep.subr.bf16.mxu0 0
    %753 = vmatpush1.bf16.msra.mxu0 0
    %754 = vmatprep.subr.bf16.mxu0 0
    %755 = vmatpush1.bf16.msra.mxu0 0
    %756 = vmatprep.subr.bf16.mxu0 0
    %757 = vmatpush1.bf16.msra.mxu0 0
    %758 = vmatprep.subr.bf16.mxu0 %v691
    %759 = vmatpush1.bf16.msra.mxu0 %v688
    %760 = vmatprep.subr.bf16.mxu0 %v644
    %761 = vmatpush1.bf16.msra.mxu0 %v643
    %762 = vmatprep.subr.bf16.mxu0 %v636
    %763 = vmatpush1.bf16.msra.mxu0 %v635
    %764 = vmatprep.subr.bf16.mxu0 0
    %765 = vmatpush2.bf16.msra.mxu0 0
    %766 = vmatprep.subr.bf16.mxu0 0
    %767 = vmatpush2.bf16.msra.mxu0 0
    %768 = vmatprep.subr.bf16.mxu0 0
    %769 = vmatpush2.bf16.msra.mxu0 0
    %770 = vmatprep.subr.bf16.mxu0 0
    %771 = vmatpush2.bf16.msra.mxu0 0
    %772 = vmatprep.subr.bf16.mxu0 0
    %773 = vmatpush2.bf16.msra.mxu0 0
    %774 = vmatprep.subr.bf16.mxu0 0
    %775 = vmatpush2.bf16.msra.mxu0 0
    %776 = vmatprep.subr.bf16.mxu0 0
    %777 = vmatpush2.bf16.msra.mxu0 0
    %778 = vmatprep.subr.bf16.mxu0 0
    %779 = vmatpush2.bf16.msra.mxu0 0
    %780 = vmatprep.mubr.bf16.mxu0 0
    %781 = vmatmul.mubr.bf16.gmra.mxu0 %v679
    %v782 = vpop.f32.mrf.mxu0
    %v783 = vadd.f32 %v666, %v782
    %v784 = vpop.f32.mrf.mxu0
    %v785 = vadd.f32 %v666, %v784
    %v786 = vpop.f32.mrf.mxu0
    %v787 = vadd.f32 %v671, %v786
    %v788 = vpop.f32.mrf.mxu0
    %v789 = vadd.f32 %v671, %v788
    %790 = vdwg.mxu0
    %791 = vmatprep.subr.bf16.mxu0 0
    %792 = vmatpush1.bf16.msra.mxu0 0
    %793 = vmatprep.subr.bf16.mxu0 0
    %794 = vmatpush1.bf16.msra.mxu0 0
    %795 = vmatprep.subr.bf16.mxu0 0
    %796 = vmatpush1.bf16.msra.mxu0 0
    %797 = vmatprep.subr.bf16.mxu0 0
    %798 = vmatpush1.bf16.msra.mxu0 0
    %799 = vmatprep.subr.bf16.mxu0 0
    %800 = vmatpush1.bf16.msra.mxu0 0
    %801 = vmatprep.subr.bf16.mxu0 %v697
    %802 = vmatpush1.bf16.msra.mxu0 %v694
    %803 = vmatprep.subr.bf16.mxu0 %v646
    %804 = vmatpush1.bf16.msra.mxu0 %v645
    %805 = vmatprep.subr.bf16.mxu0 %v638
    %806 = vmatpush1.bf16.msra.mxu0 %v637
    %807 = vmatprep.subr.bf16.mxu0 0
    %808 = vmatpush2.bf16.msra.mxu0 0
    %809 = vmatprep.subr.bf16.mxu0 0
    %810 = vmatpush2.bf16.msra.mxu0 0
    %811 = vmatprep.subr.bf16.mxu0 0
    %812 = vmatpush2.bf16.msra.mxu0 0
    %813 = vmatprep.subr.bf16.mxu0 0
    %814 = vmatpush2.bf16.msra.mxu0 0
    %815 = vmatprep.subr.bf16.mxu0 0
    %816 = vmatpush2.bf16.msra.mxu0 0
    %817 = vmatprep.subr.bf16.mxu0 0
    %818 = vmatpush2.bf16.msra.mxu0 0
    %819 = vmatprep.subr.bf16.mxu0 0
    %820 = vmatpush2.bf16.msra.mxu0 0
    %821 = vmatprep.subr.bf16.mxu0 0
    %822 = vmatpush2.bf16.msra.mxu0 0
    %823 = vmatprep.mubr.bf16.mxu0 0
    %824 = vmatmul.mubr.bf16.gmra.mxu0 %v679
    %v825 = vpop.f32.mrf.mxu0
    %v826 = vadd.f32 %v666, %v825
    %v827 = vpop.f32.mrf.mxu0
    %v828 = vadd.f32 %v666, %v827
    %v829 = vpop.f32.mrf.mxu0
    %v830 = vadd.f32 %v671, %v829
    %v831 = vpop.f32.mrf.mxu0
    %v832 = vadd.f32 %v671, %v831
    %833 = vdwg.mxu0
    %834 = vmatprep.subr.bf16.mxu0 0
    %835 = vmatpush1.bf16.msra.mxu0 0
    %836 = vmatprep.subr.bf16.mxu0 0
    %837 = vmatpush1.bf16.msra.mxu0 0
    %838 = vmatprep.subr.bf16.mxu0 0
    %839 = vmatpush1.bf16.msra.mxu0 0
    %840 = vmatprep.subr.bf16.mxu0 0
    %841 = vmatpush1.bf16.msra.mxu0 0
    %842 = vmatprep.subr.bf16.mxu0 0
    %843 = vmatpush1.bf16.msra.mxu0 0
    %844 = vmatprep.subr.bf16.mxu0 %v703
    %845 = vmatpush1.bf16.msra.mxu0 %v700
    %846 = vmatprep.subr.bf16.mxu0 %v648
    %847 = vmatpush1.bf16.msra.mxu0 %v647
    %848 = vmatprep.subr.bf16.mxu0 %v640
    %849 = vmatpush1.bf16.msra.mxu0 %v639
    %850 = vmatprep.subr.bf16.mxu0 0
    %851 = vmatpush2.bf16.msra.mxu0 0
    %852 = vmatprep.subr.bf16.mxu0 0
    %853 = vmatpush2.bf16.msra.mxu0 0
    %854 = vmatprep.subr.bf16.mxu0 0
    %855 = vmatpush2.bf16.msra.mxu0 0
    %856 = vmatprep.subr.bf16.mxu0 0
    %857 = vmatpush2.bf16.msra.mxu0 0
    %858 = vmatprep.subr.bf16.mxu0 0
    %859 = vmatpush2.bf16.msra.mxu0 0
    %860 = vmatprep.subr.bf16.mxu0 0
    %861 = vmatpush2.bf16.msra.mxu0 0
    %862 = vmatprep.subr.bf16.mxu0 0
    %863 = vmatpush2.bf16.msra.mxu0 0
    %864 = vmatprep.subr.bf16.mxu0 0
    %865 = vmatpush2.bf16.msra.mxu0 0
    %866 = vmatprep.mubr.bf16.mxu0 0
    %867 = vmatmul.mubr.bf16.gmra.mxu0 %v679
    %v868 = vpop.f32.mrf.mxu0
    %v869 = vadd.f32 %v666, %v868
    %v870 = vpop.f32.mrf.mxu0
    %v871 = vadd.f32 %v666, %v870
    %v872 = vpop.f32.mrf.mxu0
    %v873 = vadd.f32 %v671, %v872
    %v874 = vpop.f32.mrf.mxu0
    %v875 = vadd.f32 %v671, %v874
    %876 = vdwg.mxu0
    %v877 = vmax.f32 %v740, 0.0
    %v878 = vmax.f32 %v742, 0.0
    %v879 = vmax.f32 %v783, 0.0
    %v880 = vmax.f32 %v785, 0.0
    %v881 = vmax.f32 %v826, 0.0
    %v882 = vmax.f32 %v828, 0.0
    %v883 = vmax.f32 %v869, 0.0
    %v884 = vmax.f32 %v871, 0.0
    %v885 = vmax.f32 %v744, 0.0
    %v886 = vmax.f32 %v746, 0.0
    %v887 = vmax.f32 %v787, 0.0
    %v888 = vmax.f32 %v789, 0.0
    %v889 = vmax.f32 %v830, 0.0
    %v890 = vmax.f32 %v832, 0.0
    %v891 = vmax.f32 %v873, 0.0
    %v892 = vmax.f32 %v875, 0.0
    %893 = vrot.lane.b32.xlu0 %v877, 2
    %v894 = vpop.permute.xlu0 %893
    %895 = vrot.lane.b32.xlu0 %v885, 2
    %v896 = vpop.permute.xlu0 %895
    %897 = vrot.lane.b32.xlu0 %v878, 2
    %v898 = vpop.permute.xlu0 %897
    %899 = vrot.lane.b32.xlu0 %v886, 2
    %v900 = vpop.permute.xlu0 %899
    %901 = vrot.lane.b32.xlu0 %v879, 2
    %v902 = vpop.permute.xlu0 %901
    %903 = vrot.lane.b32.xlu0 %v887, 2
    %v904 = vpop.permute.xlu0 %903
    %905 = vrot.lane.b32.xlu0 %v880, 2
    %v906 = vpop.permute.xlu0 %905
    %907 = vrot.lane.b32.xlu0 %v888, 2
    %v908 = vpop.permute.xlu0 %907
    %909 = vrot.lane.b32.xlu0 %v881, 2
    %v910 = vpop.permute.xlu0 %909
    %911 = vrot.lane.b32.xlu0 %v889, 2
    %v912 = vpop.permute.xlu0 %911
    %913 = vrot.lane.b32.xlu0 %v882, 2
    %v914 = vpop.permute.xlu0 %913
    %915 = vrot.lane.b32.xlu0 %v890, 2
    %v916 = vpop.permute.xlu0 %915
    %917 = vrot.lane.b32.xlu0 %v883, 2
    %v918 = vpop.permute.xlu0 %917
    %919 = vrot.lane.b32.xlu0 %v891, 2
    %v920 = vpop.permute.xlu0 %919
    %921 = vrot.lane.b32.xlu0 %v884, 2
    %v922 = vpop.permute.xlu0 %921
    %923 = vrot.lane.b32.xlu0 %v892, 2
    %v924 = vpop.permute.xlu0 %923
    %v925 = vsel %vm120, %v918, %v922
    %v926 = vsel %vm120, %v920, %v924
    %v927 = vsel %vm120, %v914, %v918
    %v928 = vsel %vm120, %v916, %v920
    %v929 = vsel %vm120, %v910, %v914
    %v930 = vsel %vm120, %v912, %v916
    %v931 = vsel %vm120, %v906, %v910
    %v932 = vsel %vm120, %v908, %v912
    %v933 = vsel %vm120, %v902, %v906
    %v934 = vsel %vm120, %v904, %v908
    %v935 = vsel %vm120, %v898, %v902
    %v936 = vsel %vm120, %v900, %v904
    %v937 = vsel %vm120, %v894, %v898
    %v938 = vsel %vm120, %v896, %v900
    %v939 = vsel %vm120, %v922, %v894
    %v940 = vsel %vm120, %v924, %v896
    %v941 = vmul.f32 %v939, %v135
    %v942 = vmul.f32 %v937, %v135
    %v943 = vmul.f32 %v935, %v135
    %v944 = vmul.f32 %v933, %v135
    %v945 = vmul.f32 %v931, %v135
    %v946 = vmul.f32 %v929, %v135
    %v947 = vmul.f32 %v927, %v135
    %v948 = vmul.f32 %v925, %v135
    %v949 = vmul.f32 %v940, %v135
    %v950 = vmul.f32 %v938, %v135
    %v951 = vmul.f32 %v936, %v135
    %v952 = vmul.f32 %v934, %v135
    %v953 = vmul.f32 %v932, %v135
    %v954 = vmul.f32 %v930, %v135
    %v955 = vmul.f32 %v928, %v135
    %v956 = vmul.f32 %v926, %v135
    %957 = vrot.lane.b32.xlu0 %v877, 1
    %v958 = vpop.permute.xlu0 %957
    %959 = vrot.lane.b32.xlu0 %v885, 1
    %v960 = vpop.permute.xlu0 %959
    %961 = vrot.lane.b32.xlu0 %v878, 1
    %v962 = vpop.permute.xlu0 %961
    %963 = vrot.lane.b32.xlu0 %v886, 1
    %v964 = vpop.permute.xlu0 %963
    %965 = vrot.lane.b32.xlu0 %v879, 1
    %v966 = vpop.permute.xlu0 %965
    %967 = vrot.lane.b32.xlu0 %v887, 1
    %v968 = vpop.permute.xlu0 %967
    %969 = vrot.lane.b32.xlu0 %v880, 1
    %v970 = vpop.permute.xlu0 %969
    %971 = vrot.lane.b32.xlu0 %v888, 1
    %v972 = vpop.permute.xlu0 %971
    %973 = vrot.lane.b32.xlu0 %v881, 1
    %v974 = vpop.permute.xlu0 %973
    %975 = vrot.lane.b32.xlu0 %v889, 1
    %v976 = vpop.permute.xlu0 %975
    %977 = vrot.lane.b32.xlu0 %v882, 1
    %v978 = vpop.permute.xlu0 %977
    %979 = vrot.lane.b32.xlu0 %v890, 1
    %v980 = vpop.permute.xlu0 %979
    %981 = vrot.lane.b32.xlu0 %v883, 1
    %v982 = vpop.permute.xlu0 %981
    %983 = vrot.lane.b32.xlu0 %v891, 1
    %v984 = vpop.permute.xlu0 %983
    %985 = vrot.lane.b32.xlu0 %v884, 1
    %v986 = vpop.permute.xlu0 %985
    %987 = vrot.lane.b32.xlu0 %v892, 1
    %v988 = vpop.permute.xlu0 %987
    %v989 = vsel %vm160, %v982, %v986
    %v990 = vsel %vm160, %v984, %v988
    %v991 = vsel %vm160, %v978, %v982
    %v992 = vsel %vm160, %v980, %v984
    %v993 = vsel %vm160, %v974, %v978
    %v994 = vsel %vm160, %v976, %v980
    %v995 = vsel %vm160, %v970, %v974
    %v996 = vsel %vm160, %v972, %v976
    %v997 = vsel %vm160, %v966, %v970
    %v998 = vsel %vm160, %v968, %v972
    %v999 = vsel %vm160, %v962, %v966
    %v1000 = vsel %vm160, %v964, %v968
    %v1001 = vsel %vm160, %v958, %v962
    %v1002 = vsel %vm160, %v960, %v964
    %v1003 = vsel %vm160, %v986, %v958
    %v1004 = vsel %vm160, %v988, %v960
    %v1005 = vmul.f32 %v1003, %v175
    %v1006 = vmul.f32 %v1001, %v175
    %v1007 = vmul.f32 %v999, %v175
    %v1008 = vmul.f32 %v997, %v175
    %v1009 = vmul.f32 %v995, %v175
    %v1010 = vmul.f32 %v993, %v175
    %v1011 = vmul.f32 %v991, %v175
    %v1012 = vmul.f32 %v989, %v175
    %v1013 = vmul.f32 %v1004, %v175
    %v1014 = vmul.f32 %v1002, %v175
    %v1015 = vmul.f32 %v1000, %v175
    %v1016 = vmul.f32 %v998, %v175
    %v1017 = vmul.f32 %v996, %v175
    %v1018 = vmul.f32 %v994, %v175
    %v1019 = vmul.f32 %v992, %v175
    %v1020 = vmul.f32 %v990, %v175
    %1021 = vrot.lane.b32.xlu0 %v877, 127
    %v1022 = vpop.permute.xlu0 %1021
    %1023 = vrot.lane.b32.xlu0 %v885, 127
    %v1024 = vpop.permute.xlu0 %1023
    %1025 = vrot.lane.b32.xlu0 %v878, 127
    %v1026 = vpop.permute.xlu0 %1025
    %1027 = vrot.lane.b32.xlu0 %v886, 127
    %v1028 = vpop.permute.xlu0 %1027
    %1029 = vrot.lane.b32.xlu0 %v879, 127
    %v1030 = vpop.permute.xlu0 %1029
    %1031 = vrot.lane.b32.xlu0 %v887, 127
    %v1032 = vpop.permute.xlu0 %1031
    %1033 = vrot.lane.b32.xlu0 %v880, 127
    %v1034 = vpop.permute.xlu0 %1033
    %1035 = vrot.lane.b32.xlu0 %v888, 127
    %v1036 = vpop.permute.xlu0 %1035
    %1037 = vrot.lane.b32.xlu0 %v881, 127
    %v1038 = vpop.permute.xlu0 %1037
    %1039 = vrot.lane.b32.xlu0 %v889, 127
    %v1040 = vpop.permute.xlu0 %1039
    %1041 = vrot.lane.b32.xlu0 %v882, 127
    %v1042 = vpop.permute.xlu0 %1041
    %1043 = vrot.lane.b32.xlu0 %v890, 127
    %v1044 = vpop.permute.xlu0 %1043
    %1045 = vrot.lane.b32.xlu0 %v883, 127
    %v1046 = vpop.permute.xlu0 %1045
    %1047 = vrot.lane.b32.xlu0 %v891, 127
    %v1048 = vpop.permute.xlu0 %1047
    %1049 = vrot.lane.b32.xlu0 %v884, 127
    %v1050 = vpop.permute.xlu0 %1049
    %1051 = vrot.lane.b32.xlu0 %v892, 127
    %v1052 = vpop.permute.xlu0 %1051
    %v1053 = vsel %vm200, %v1046, %v1050
    %v1054 = vsel %vm200, %v1048, %v1052
    %v1055 = vsel %vm200, %v1042, %v1046
    %v1056 = vsel %vm200, %v1044, %v1048
    %v1057 = vsel %vm200, %v1038, %v1042
    %v1058 = vsel %vm200, %v1040, %v1044
    %v1059 = vsel %vm200, %v1034, %v1038
    %v1060 = vsel %vm200, %v1036, %v1040
    %v1061 = vsel %vm200, %v1030, %v1034
    %v1062 = vsel %vm200, %v1032, %v1036
    %v1063 = vsel %vm200, %v1026, %v1030
    %v1064 = vsel %vm200, %v1028, %v1032
    %v1065 = vsel %vm200, %v1022, %v1026
    %v1066 = vsel %vm200, %v1024, %v1028
    %v1067 = vsel %vm200, %v1050, %v1022
    %v1068 = vsel %vm200, %v1052, %v1024
    %v1069 = vmul.f32 %v1065, %v214
    %v1070 = vmul.f32 %v1063, %v214
    %v1071 = vmul.f32 %v1061, %v214
    %v1072 = vmul.f32 %v1059, %v214
    %v1073 = vmul.f32 %v1057, %v214
    %v1074 = vmul.f32 %v1055, %v214
    %v1075 = vmul.f32 %v1053, %v214
    %v1076 = vmul.f32 %v1067, %v214
    %v1077 = vmul.f32 %v1066, %v214
    %v1078 = vmul.f32 %v1064, %v214
    %v1079 = vmul.f32 %v1062, %v214
    %v1080 = vmul.f32 %v1060, %v214
    %v1081 = vmul.f32 %v1058, %v214
    %v1082 = vmul.f32 %v1056, %v214
    %v1083 = vmul.f32 %v1054, %v214
    %v1084 = vmul.f32 %v1068, %v214
    %1085 = vrot.lane.b32.xlu0 %v877, 126
    %v1086 = vpop.permute.xlu0 %1085
    %1087 = vrot.lane.b32.xlu0 %v885, 126
    %v1088 = vpop.permute.xlu0 %1087
    %1089 = vrot.lane.b32.xlu0 %v878, 126
    %v1090 = vpop.permute.xlu0 %1089
    %1091 = vrot.lane.b32.xlu0 %v886, 126
    %v1092 = vpop.permute.xlu0 %1091
    %1093 = vrot.lane.b32.xlu0 %v879, 126
    %v1094 = vpop.permute.xlu0 %1093
    %1095 = vrot.lane.b32.xlu0 %v887, 126
    %v1096 = vpop.permute.xlu0 %1095
    %1097 = vrot.lane.b32.xlu0 %v880, 126
    %v1098 = vpop.permute.xlu0 %1097
    %1099 = vrot.lane.b32.xlu0 %v888, 126
    %v1100 = vpop.permute.xlu0 %1099
    %1101 = vrot.lane.b32.xlu0 %v881, 126
    %v1102 = vpop.permute.xlu0 %1101
    %1103 = vrot.lane.b32.xlu0 %v889, 126
    %v1104 = vpop.permute.xlu0 %1103
    %1105 = vrot.lane.b32.xlu0 %v882, 126
    %v1106 = vpop.permute.xlu0 %1105
    %1107 = vrot.lane.b32.xlu0 %v890, 126
    %v1108 = vpop.permute.xlu0 %1107
    %1109 = vrot.lane.b32.xlu0 %v883, 126
    %v1110 = vpop.permute.xlu0 %1109
    %1111 = vrot.lane.b32.xlu0 %v891, 126
    %v1112 = vpop.permute.xlu0 %1111
    %1113 = vrot.lane.b32.xlu0 %v884, 126
    %v1114 = vpop.permute.xlu0 %1113
    %1115 = vrot.lane.b32.xlu0 %v892, 126
    %v1116 = vpop.permute.xlu0 %1115
    %v1117 = vsel %vm239, %v1110, %v1114
    %v1118 = vsel %vm239, %v1112, %v1116
    %v1119 = vsel %vm239, %v1106, %v1110
    %v1120 = vsel %vm239, %v1108, %v1112
    %v1121 = vsel %vm239, %v1102, %v1106
    %v1122 = vsel %vm239, %v1104, %v1108
    %v1123 = vsel %vm239, %v1098, %v1102
    %v1124 = vsel %vm239, %v1100, %v1104
    %v1125 = vsel %vm239, %v1094, %v1098
    %v1126 = vsel %vm239, %v1096, %v1100
    %v1127 = vsel %vm239, %v1090, %v1094
    %v1128 = vsel %vm239, %v1092, %v1096
    %v1129 = vsel %vm239, %v1086, %v1090
    %v1130 = vsel %vm239, %v1088, %v1092
    %v1131 = vsel %vm239, %v1114, %v1086
    %v1132 = vsel %vm239, %v1116, %v1088
    %v1133 = vmul.f32 %v1129, %v253
    %v1134 = vmul.f32 %v1127, %v253
    %v1135 = vmul.f32 %v1125, %v253
    %v1136 = vmul.f32 %v1123, %v253
    %v1137 = vmul.f32 %v1121, %v253
    %v1138 = vmul.f32 %v1119, %v253
    %v1139 = vmul.f32 %v1117, %v253
    %v1140 = vmul.f32 %v1131, %v253
    %v1141 = vmul.f32 %v1130, %v253
    %v1142 = vmul.f32 %v1128, %v253
    %v1143 = vmul.f32 %v1126, %v253
    %v1144 = vmul.f32 %v1124, %v253
    %v1145 = vmul.f32 %v1122, %v253
    %v1146 = vmul.f32 %v1120, %v253
    %v1147 = vmul.f32 %v1118, %v253
    %v1148 = vmul.f32 %v1132, %v253
    %v1149 = vpack.c.bf16 %v949, %v941
    %v1150 = vpack.c.bf16 %v950, %v942
    %v1151 = vpack.c.bf16 %v951, %v943
    %v1152 = vpack.c.bf16 %v952, %v944
    %v1153 = vpack.c.bf16 %v953, %v945
    %v1154 = vpack.c.bf16 %v954, %v946
    %v1155 = vpack.c.bf16 %v955, %v947
    %v1156 = vpack.c.bf16 %v956, %v948
    %v1157 = vpack.c.bf16 %v1013, %v1005
    %v1158 = vpack.c.bf16 %v1014, %v1006
    %v1159 = vpack.c.bf16 %v1015, %v1007
    %v1160 = vpack.c.bf16 %v1016, %v1008
    %v1161 = vpack.c.bf16 %v1017, %v1009
    %v1162 = vpack.c.bf16 %v1018, %v1010
    %v1163 = vpack.c.bf16 %v1019, %v1011
    %v1164 = vpack.c.bf16 %v1020, %v1012
    %v1165 = vpack.c.bf16 %v885, %v877
    %v1166 = vpack.c.bf16 %v886, %v878
    %v1167 = vpack.c.bf16 %v887, %v879
    %v1168 = vpack.c.bf16 %v888, %v880
    %v1169 = vpack.c.bf16 %v889, %v881
    %v1170 = vpack.c.bf16 %v890, %v882
    %v1171 = vpack.c.bf16 %v891, %v883
    %v1172 = vpack.c.bf16 %v892, %v884
    %v1173 = vpack.c.bf16 %v1077, %v1069
    %v1174 = vpack.c.bf16 %v1078, %v1070
    %v1175 = vpack.c.bf16 %v1079, %v1071
    %v1176 = vpack.c.bf16 %v1080, %v1072
    %v1177 = vpack.c.bf16 %v1081, %v1073
    %v1178 = vpack.c.bf16 %v1082, %v1074
    %v1179 = vpack.c.bf16 %v1083, %v1075
    %v1180 = vpack.c.bf16 %v1084, %v1076
    %v1181 = vpack.c.bf16 %v1141, %v1133
    %v1182 = vpack.c.bf16 %v1142, %v1134
    %v1183 = vpack.c.bf16 %v1143, %v1135
    %v1184 = vpack.c.bf16 %v1144, %v1136
    %v1185 = vpack.c.bf16 %v1145, %v1137
    %v1186 = vpack.c.bf16 %v1146, %v1138
    %v1187 = vpack.c.bf16 %v1147, %v1139
    %v1188 = vpack.c.bf16 %v1148, %v1140
    %v1189 = vld [vmem:[%s2] sm:$0xf]
    %v1190 = vld [vmem:[%s2 + $0x4] sm:$0xf]
    %s1191 = scalar_lea.vmem %s3, 32
    %v1192 = vld [vmem:[%s1191] sm:$0xff]
    %v1193 = vld [vmem:[%s1191 + $0x8] sm:$0xff]
    %1195 = vset.pattern.permute.xlu0 0
    %1196 = vperm.xlu0 %1195, %v1192
    %v1197 = vpop.permute.xlu0 %1196
    %1200 = vset.pattern.permute.xlu0 0
    %1201 = vperm.xlu0 %1200, %v1193
    %v1202 = vpop.permute.xlu0 %1201
    %v1205 = vunpack.c.l.b16 %v1189
    %v1206 = vunpack.c.l.b16 %v1190
    %v1207 = vpack.c.b16 %v1206, %v1205
    %vm1208 = vcmask 654336
    %v1210 = vsel %vm1208, %v1207, 0
    %1212 = vmatprep.subr.bf16.mxu0 0
    %1213 = vmatpush1.bf16.msra.mxu0 0
    %1214 = vmatprep.subr.bf16.mxu0 0
    %1215 = vmatpush1.bf16.msra.mxu0 0
    %1216 = vmatprep.subr.bf16.mxu0 0
    %1217 = vmatpush1.bf16.msra.mxu0 0
    %1218 = vmatprep.subr.bf16.mxu0 %v1182
    %1219 = vmatpush1.bf16.msra.mxu0 %v1181
    %1220 = vmatprep.subr.bf16.mxu0 %v1174
    %1221 = vmatpush1.bf16.msra.mxu0 %v1173
    %1222 = vmatprep.subr.bf16.mxu0 %v1166
    %1223 = vmatpush1.bf16.msra.mxu0 %v1165
    %1224 = vmatprep.subr.bf16.mxu0 %v1158
    %1225 = vmatpush1.bf16.msra.mxu0 %v1157
    %1226 = vmatprep.subr.bf16.mxu0 %v1150
    %1227 = vmatpush1.bf16.msra.mxu0 %v1149
    %1228 = vmatprep.subr.bf16.mxu0 0
    %1229 = vmatpush2.bf16.msra.mxu0 0
    %1230 = vmatprep.subr.bf16.mxu0 0
    %1231 = vmatpush2.bf16.msra.mxu0 0
    %1232 = vmatprep.subr.bf16.mxu0 0
    %1233 = vmatpush2.bf16.msra.mxu0 0
    %1234 = vmatprep.subr.bf16.mxu0 0
    %1235 = vmatpush2.bf16.msra.mxu0 0
    %1236 = vmatprep.subr.bf16.mxu0 0
    %1237 = vmatpush2.bf16.msra.mxu0 0
    %1238 = vmatprep.subr.bf16.mxu0 0
    %1239 = vmatpush2.bf16.msra.mxu0 0
    %1240 = vmatprep.subr.bf16.mxu0 0
    %1241 = vmatpush2.bf16.msra.mxu0 0
    %1242 = vmatprep.subr.bf16.mxu0 0
    %1243 = vmatpush2.bf16.msra.mxu0 0
    %1244 = vmatprep.mubr.bf16.mxu0 0
    %1245 = vmatmul.mubr.bf16.gmra.mxu0 %v1210
    %v1246 = vpop.f32.mrf.mxu0
    %v1247 = vadd.f32 %v1197, %v1246
    %v1248 = vpop.f32.mrf.mxu0
    %v1249 = vadd.f32 %v1197, %v1248
    %v1250 = vpop.f32.mrf.mxu0
    %v1251 = vpop.f32.mrf.mxu0
    %1252 = vdwg.mxu0
    %1253 = vmatprep.subr.bf16.mxu0 0
    %1254 = vmatpush1.bf16.msra.mxu0 0
    %1255 = vmatprep.subr.bf16.mxu0 0
    %1256 = vmatpush1.bf16.msra.mxu0 0
    %1257 = vmatprep.subr.bf16.mxu0 0
    %1258 = vmatpush1.bf16.msra.mxu0 0
    %1259 = vmatprep.subr.bf16.mxu0 %v1184
    %1260 = vmatpush1.bf16.msra.mxu0 %v1183
    %1261 = vmatprep.subr.bf16.mxu0 %v1176
    %1262 = vmatpush1.bf16.msra.mxu0 %v1175
    %1263 = vmatprep.subr.bf16.mxu0 %v1168
    %1264 = vmatpush1.bf16.msra.mxu0 %v1167
    %1265 = vmatprep.subr.bf16.mxu0 %v1160
    %1266 = vmatpush1.bf16.msra.mxu0 %v1159
    %1267 = vmatprep.subr.bf16.mxu0 %v1152
    %1268 = vmatpush1.bf16.msra.mxu0 %v1151
    %1269 = vmatprep.subr.bf16.mxu0 0
    %1270 = vmatpush2.bf16.msra.mxu0 0
    %1271 = vmatprep.subr.bf16.mxu0 0
    %1272 = vmatpush2.bf16.msra.mxu0 0
    %1273 = vmatprep.subr.bf16.mxu0 0
    %1274 = vmatpush2.bf16.msra.mxu0 0
    %1275 = vmatprep.subr.bf16.mxu0 0
    %1276 = vmatpush2.bf16.msra.mxu0 0
    %1277 = vmatprep.subr.bf16.mxu0 0
    %1278 = vmatpush2.bf16.msra.mxu0 0
    %1279 = vmatprep.subr.bf16.mxu0 0
    %1280 = vmatpush2.bf16.msra.mxu0 0
    %1281 = vmatprep.subr.bf16.mxu0 0
    %1282 = vmatpush2.bf16.msra.mxu0 0
    %1283 = vmatprep.subr.bf16.mxu0 0
    %1284 = vmatpush2.bf16.msra.mxu0 0
    %1285 = vmatprep.mubr.bf16.mxu0 0
    %1286 = vmatmul.mubr.bf16.gmra.mxu0 %v1210
    %v1287 = vpop.f32.mrf.mxu0
    %v1288 = vadd.f32 %v1197, %v1287
    %v1289 = vpop.f32.mrf.mxu0
    %v1290 = vadd.f32 %v1197, %v1289
    %v1291 = vpop.f32.mrf.mxu0
    %v1292 = vpop.f32.mrf.mxu0
    %1293 = vdwg.mxu0
    %1294 = vmatprep.subr.bf16.mxu0 0
    %1295 = vmatpush1.bf16.msra.mxu0 0
    %1296 = vmatprep.subr.bf16.mxu0 0
    %1297 = vmatpush1.bf16.msra.mxu0 0
    %1298 = vmatprep.subr.bf16.mxu0 0
    %1299 = vmatpush1.bf16.msra.mxu0 0
    %1300 = vmatprep.subr.bf16.mxu0 %v1186
    %1301 = vmatpush1.bf16.msra.mxu0 %v1185
    %1302 = vmatprep.subr.bf16.mxu0 %v1178
    %1303 = vmatpush1.bf16.msra.mxu0 %v1177
    %1304 = vmatprep.subr.bf16.mxu0 %v1170
    %1305 = vmatpush1.bf16.msra.mxu0 %v1169
    %1306 = vmatprep.subr.bf16.mxu0 %v1162
    %1307 = vmatpush1.bf16.msra.mxu0 %v1161
    %1308 = vmatprep.subr.bf16.mxu0 %v1154
    %1309 = vmatpush1.bf16.msra.mxu0 %v1153
    %1310 = vmatprep.subr.bf16.mxu0 0
    %1311 = vmatpush2.bf16.msra.mxu0 0
    %1312 = vmatprep.subr.bf16.mxu0 0
    %1313 = vmatpush2.bf16.msra.mxu0 0
    %1314 = vmatprep.subr.bf16.mxu0 0
    %1315 = vmatpush2.bf16.msra.mxu0 0
    %1316 = vmatprep.subr.bf16.mxu0 0
    %1317 = vmatpush2.bf16.msra.mxu0 0
    %1318 = vmatprep.subr.bf16.mxu0 0
    %1319 = vmatpush2.bf16.msra.mxu0 0
    %1320 = vmatprep.subr.bf16.mxu0 0
    %1321 = vmatpush2.bf16.msra.mxu0 0
    %1322 = vmatprep.subr.bf16.mxu0 0
    %1323 = vmatpush2.bf16.msra.mxu0 0
    %1324 = vmatprep.subr.bf16.mxu0 0
    %1325 = vmatpush2.bf16.msra.mxu0 0
    %1326 = vmatprep.mubr.bf16.mxu0 0
    %1327 = vmatmul.mubr.bf16.gmra.mxu0 %v1210
    %v1328 = vpop.f32.mrf.mxu0
    %v1329 = vadd.f32 %v1197, %v1328
    %v1330 = vpop.f32.mrf.mxu0
    %v1331 = vadd.f32 %v1197, %v1330
    %v1332 = vpop.f32.mrf.mxu0
    %v1333 = vpop.f32.mrf.mxu0
    %1334 = vdwg.mxu0
    %1335 = vmatprep.subr.bf16.mxu0 0
    %1336 = vmatpush1.bf16.msra.mxu0 0
    %1337 = vmatprep.subr.bf16.mxu0 0
    %1338 = vmatpush1.bf16.msra.mxu0 0
    %1339 = vmatprep.subr.bf16.mxu0 0
    %1340 = vmatpush1.bf16.msra.mxu0 0
    %1341 = vmatprep.subr.bf16.mxu0 %v1188
    %1342 = vmatpush1.bf16.msra.mxu0 %v1187
    %1343 = vmatprep.subr.bf16.mxu0 %v1180
    %1344 = vmatpush1.bf16.msra.mxu0 %v1179
    %1345 = vmatprep.subr.bf16.mxu0 %v1172
    %1346 = vmatpush1.bf16.msra.mxu0 %v1171
    %1347 = vmatprep.subr.bf16.mxu0 %v1164
    %1348 = vmatpush1.bf16.msra.mxu0 %v1163
    %1349 = vmatprep.subr.bf16.mxu0 %v1156
    %1350 = vmatpush1.bf16.msra.mxu0 %v1155
    %1351 = vmatprep.subr.bf16.mxu0 0
    %1352 = vmatpush2.bf16.msra.mxu0 0
    %1353 = vmatprep.subr.bf16.mxu0 0
    %1354 = vmatpush2.bf16.msra.mxu0 0
    %1355 = vmatprep.subr.bf16.mxu0 0
    %1356 = vmatpush2.bf16.msra.mxu0 0
    %1357 = vmatprep.subr.bf16.mxu0 0
    %1358 = vmatpush2.bf16.msra.mxu0 0
    %1359 = vmatprep.subr.bf16.mxu0 0
    %1360 = vmatpush2.bf16.msra.mxu0 0
    %1361 = vmatprep.subr.bf16.mxu0 0
    %1362 = vmatpush2.bf16.msra.mxu0 0
    %1363 = vmatprep.subr.bf16.mxu0 0
    %1364 = vmatpush2.bf16.msra.mxu0 0
    %1365 = vmatprep.subr.bf16.mxu0 0
    %1366 = vmatpush2.bf16.msra.mxu0 0
    %1367 = vmatprep.mubr.bf16.mxu0 0
    %1368 = vmatmul.mubr.bf16.gmra.mxu0 %v1210
    %v1369 = vpop.f32.mrf.mxu0
    %v1370 = vadd.f32 %v1197, %v1369
    %v1371 = vpop.f32.mrf.mxu0
    %v1372 = vadd.f32 %v1197, %v1371
    %v1373 = vpop.f32.mrf.mxu0
    %v1374 = vpop.f32.mrf.mxu0
    %1375 = vdwg.mxu0
    %v1376 = vmax.f32 %v1247, 0.0
    %v1377 = vmax.f32 %v1249, 0.0
    %v1378 = vmax.f32 %v1288, 0.0
    %v1379 = vmax.f32 %v1290, 0.0
    %v1380 = vmax.f32 %v1329, 0.0
    %v1381 = vmax.f32 %v1331, 0.0
    %v1382 = vmax.f32 %v1370, 0.0
    %v1383 = vmax.f32 %v1372, 0.0
    %v1385 = vrot.slane %v1377, 7
    %v1388 = vrot.slane %v1378, 6
    %v1391 = vrot.slane %v1379, 5
    %v1394 = vrot.slane %v1380, 4
    %v1397 = vrot.slane %v1381, 3
    %v1400 = vrot.slane %v1382, 2
    %v1403 = vrot.slane %v1383, 1
    %vm1405 = vcmask 1040384
    %v1406 = vsel %vm1405, %v1376, %v1385
    %vm1407 = vcmask 1041408
    %v1408 = vsel %vm1407, %v1406, %v1388
    %vm1409 = vcmask 1042432
    %v1410 = vsel %vm1409, %v1408, %v1391
    %v1411 = vsel %vm308, %v1410, %v1394
    %vm1412 = vcmask 1044480
    %v1413 = vsel %vm1412, %v1411, %v1397
    %vm1414 = vcmask 1045504
    %v1415 = vsel %vm1414, %v1413, %v1400
    %vm1416 = vcmask 1046528
    %v1417 = vsel %vm1416, %v1415, %v1403
    %v1418 = vpack.c.bf16 %v1417, %v1417
    %v1419 = vld [vmem:[%s4] sm:$0xf]
    %v1420 = vld [vmem:[%s4 + $0x4] sm:$0xf]
    %v1421 = vld [vmem:[%s4 + $0x8] sm:$0xf]
    %v1422 = vld [vmem:[%s4 + $0xc] sm:$0xf]
    %v1423 = vld [vmem:[%s4 + $0x10] sm:$0xf]
    %v1424 = vld [vmem:[%s4 + $0x14] sm:$0xf]
    %v1425 = vld [vmem:[%s4 + $0x18] sm:$0xf]
    %v1426 = vld [vmem:[%s4 + $0x1c] sm:$0xf]
    %v1427 = vld [vmem:[%s4 + $0x20] sm:$0xf]
    %v1428 = vld [vmem:[%s4 + $0x24] sm:$0xf]
    %v1429 = vld [vmem:[%s4 + $0x28] sm:$0xf]
    %v1430 = vld [vmem:[%s4 + $0x2c] sm:$0xf]
    %v1431 = vld [vmem:[%s4 + $0x30] sm:$0xf]
    %v1432 = vld [vmem:[%s4 + $0x34] sm:$0xf]
    %v1433 = vld [vmem:[%s4 + $0x38] sm:$0xf]
    %v1434 = vld [vmem:[%s4 + $0x3c] sm:$0xf]
    %v1435 = vld [vmem:[%s5] sm:$0x1]
    %v1437 = vlaneseq
    %v1438 = vshrl.u32 %v1437, 7
    %v1439 = vsub.s32 0, %v1438
    %v1440 = vrot.slane %v1435, %v1439
    %v1458 = vunpack.c.l.b16 %v1419
    %v1459 = vunpack.c.l.b16 %v1420
    %v1460 = vunpack.c.l.b16 %v1421
    %v1461 = vunpack.c.l.b16 %v1422
    %v1462 = vunpack.c.l.b16 %v1423
    %v1463 = vunpack.c.l.b16 %v1424
    %v1464 = vunpack.c.l.b16 %v1425
    %v1465 = vunpack.c.l.b16 %v1426
    %v1466 = vunpack.c.l.b16 %v1427
    %v1467 = vunpack.c.l.b16 %v1428
    %v1468 = vunpack.c.l.b16 %v1429
    %v1469 = vunpack.c.l.b16 %v1430
    %v1470 = vunpack.c.l.b16 %v1431
    %v1471 = vunpack.c.l.b16 %v1432
    %v1472 = vunpack.c.l.b16 %v1433
    %v1473 = vunpack.c.l.b16 %v1434
    %v1474 = vpack.c.b16 %v1459, %v1458
    %v1475 = vpack.c.b16 %v1461, %v1460
    %v1476 = vpack.c.b16 %v1463, %v1462
    %v1477 = vpack.c.b16 %v1465, %v1464
    %v1478 = vpack.c.b16 %v1467, %v1466
    %v1479 = vpack.c.b16 %v1469, %v1468
    %v1480 = vpack.c.b16 %v1471, %v1470
    %v1481 = vpack.c.b16 %v1473, %v1472
    %1490 = vmatprep.subr.bf16.mxu0 0
    %1491 = vmatpush1.bf16.msra.mxu0 %v1481
    %1492 = vmatprep.subr.bf16.mxu0 0
    %1493 = vmatpush1.bf16.msra.mxu0 %v1480
    %1494 = vmatprep.subr.bf16.mxu0 0
    %1495 = vmatpush1.bf16.msra.mxu0 %v1479
    %1496 = vmatprep.subr.bf16.mxu0 0
    %1497 = vmatpush1.bf16.msra.mxu0 %v1478
    %1498 = vmatprep.subr.bf16.mxu0 0
    %1499 = vmatpush1.bf16.msra.mxu0 %v1477
    %1500 = vmatprep.subr.bf16.mxu0 0
    %1501 = vmatpush1.bf16.msra.mxu0 %v1476
    %1502 = vmatprep.subr.bf16.mxu0 0
    %1503 = vmatpush1.bf16.msra.mxu0 %v1475
    %1504 = vmatprep.subr.bf16.mxu0 0
    %1505 = vmatpush1.bf16.msra.mxu0 %v1474
    %1506 = vmatprep.subr.bf16.mxu0 0
    %1507 = vmatpush2.bf16.msra.mxu0 0
    %1508 = vmatprep.subr.bf16.mxu0 0
    %1509 = vmatpush2.bf16.msra.mxu0 0
    %1510 = vmatprep.subr.bf16.mxu0 0
    %1511 = vmatpush2.bf16.msra.mxu0 0
    %1512 = vmatprep.subr.bf16.mxu0 0
    %1513 = vmatpush2.bf16.msra.mxu0 0
    %1514 = vmatprep.subr.bf16.mxu0 0
    %1515 = vmatpush2.bf16.msra.mxu0 0
    %1516 = vmatprep.subr.bf16.mxu0 0
    %1517 = vmatpush2.bf16.msra.mxu0 0
    %1518 = vmatprep.subr.bf16.mxu0 0
    %1519 = vmatpush2.bf16.msra.mxu0 0
    %1520 = vmatprep.subr.bf16.mxu0 0
    %1521 = vmatpush2.bf16.msra.mxu0 0
    %1522 = vmatprep.mubr.bf16.mxu0 0
    %1523 = vmatmul.mubr.bf16.gmra.mxu0 %v1418
    %v1524 = vpop.f32.mrf.mxu0
    %v1525 = vadd.f32 %v1440, %v1524
    %v1526 = vpop.f32.mrf.mxu0
    %v1527 = vpop.f32.mrf.mxu0
    %v1528 = vpop.f32.mrf.mxu0
    %1529 = vdwg.mxu0
    %v1530 = vmax.f32 %v1525, 0.0
    %v1532 = vrot.slane %v1530, 1
    %v1534 = vrot.slane %v1530, 2
    %v1536 = vrot.slane %v1530, 3
    %v1538 = vrot.slane %v1530, 4
    %v1540 = vrot.slane %v1530, 5
    %v1542 = vrot.slane %v1530, 6
    %v1544 = vrot.slane %v1530, 7
    %v1546 = vlaneseq
    %v1547 = vshrl.u32 %v1546, 7
    %v1548 = vsub.s32 0, %v1547
    %v1549 = vrot.slane %v1530, %v1548
    %v1550 = vlaneseq
    %v1551 = vshrl.u32 %v1550, 7
    %v1552 = vsub.s32 0, %v1551
    %v1553 = vrot.slane %v1532, %v1552
    %v1554 = vlaneseq
    %v1555 = vshrl.u32 %v1554, 7
    %v1556 = vsub.s32 0, %v1555
    %v1557 = vrot.slane %v1534, %v1556
    %v1558 = vlaneseq
    %v1559 = vshrl.u32 %v1558, 7
    %v1560 = vsub.s32 0, %v1559
    %v1561 = vrot.slane %v1536, %v1560
    %v1562 = vlaneseq
    %v1563 = vshrl.u32 %v1562, 7
    %v1564 = vsub.s32 0, %v1563
    %v1565 = vrot.slane %v1538, %v1564
    %v1566 = vlaneseq
    %v1567 = vshrl.u32 %v1566, 7
    %v1568 = vsub.s32 0, %v1567
    %v1569 = vrot.slane %v1540, %v1568
    %v1570 = vlaneseq
    %v1571 = vshrl.u32 %v1570, 7
    %v1572 = vsub.s32 0, %v1571
    %v1573 = vrot.slane %v1542, %v1572
    %v1574 = vlaneseq
    %v1575 = vshrl.u32 %v1574, 7
    %v1576 = vsub.s32 0, %v1575
    %v1577 = vrot.slane %v1544, %v1576
    %1578 = vrot.lane.b32.xlu0 %v1549, 2
    %v1579 = vpop.permute.xlu0 %1578
    %1580 = vrot.lane.b32.xlu0 %v1553, 2
    %v1581 = vpop.permute.xlu0 %1580
    %1582 = vrot.lane.b32.xlu0 %v1557, 2
    %v1583 = vpop.permute.xlu0 %1582
    %1584 = vrot.lane.b32.xlu0 %v1561, 2
    %v1585 = vpop.permute.xlu0 %1584
    %1586 = vrot.lane.b32.xlu0 %v1565, 2
    %v1587 = vpop.permute.xlu0 %1586
    %1588 = vrot.lane.b32.xlu0 %v1569, 2
    %v1589 = vpop.permute.xlu0 %1588
    %1590 = vrot.lane.b32.xlu0 %v1573, 2
    %v1591 = vpop.permute.xlu0 %1590
    %1592 = vrot.lane.b32.xlu0 %v1577, 2
    %v1593 = vpop.permute.xlu0 %1592
    %v1594 = vsel %vm120, %v1591, %v1593
    %v1595 = vsel %vm120, %v1589, %v1591
    %v1596 = vsel %vm120, %v1587, %v1589
    %v1597 = vsel %vm120, %v1585, %v1587
    %v1598 = vsel %vm120, %v1583, %v1585
    %v1599 = vsel %vm120, %v1581, %v1583
    %v1600 = vsel %vm120, %v1579, %v1581
    %v1601 = vsel %vm120, %v1593, %v1579
    %v1602 = vmul.f32 %v1601, %v135
    %v1603 = vmul.f32 %v1600, %v135
    %v1604 = vmul.f32 %v1599, %v135
    %v1605 = vmul.f32 %v1598, %v135
    %v1606 = vmul.f32 %v1597, %v135
    %v1607 = vmul.f32 %v1596, %v135
    %v1608 = vmul.f32 %v1595, %v135
    %v1609 = vmul.f32 %v1594, %v135
    %1610 = vrot.lane.b32.xlu0 %v1549, 1
    %v1611 = vpop.permute.xlu0 %1610
    %1612 = vrot.lane.b32.xlu0 %v1553, 1
    %v1613 = vpop.permute.xlu0 %1612
    %1614 = vrot.lane.b32.xlu0 %v1557, 1
    %v1615 = vpop.permute.xlu0 %1614
    %1616 = vrot.lane.b32.xlu0 %v1561, 1
    %v1617 = vpop.permute.xlu0 %1616
    %1618 = vrot.lane.b32.xlu0 %v1565, 1
    %v1619 = vpop.permute.xlu0 %1618
    %1620 = vrot.lane.b32.xlu0 %v1569, 1
    %v1621 = vpop.permute.xlu0 %1620
    %1622 = vrot.lane.b32.xlu0 %v1573, 1
    %v1623 = vpop.permute.xlu0 %1622
    %1624 = vrot.lane.b32.xlu0 %v1577, 1
    %v1625 = vpop.permute.xlu0 %1624
    %v1626 = vsel %vm160, %v1623, %v1625
    %v1627 = vsel %vm160, %v1621, %v1623
    %v1628 = vsel %vm160, %v1619, %v1621
    %v1629 = vsel %vm160, %v1617, %v1619
    %v1630 = vsel %vm160, %v1615, %v1617
    %v1631 = vsel %vm160, %v1613, %v1615
    %v1632 = vsel %vm160, %v1611, %v1613
    %v1633 = vsel %vm160, %v1625, %v1611
    %v1634 = vmul.f32 %v1633, %v175
    %v1635 = vmul.f32 %v1632, %v175
    %v1636 = vmul.f32 %v1631, %v175
    %v1637 = vmul.f32 %v1630, %v175
    %v1638 = vmul.f32 %v1629, %v175
    %v1639 = vmul.f32 %v1628, %v175
    %v1640 = vmul.f32 %v1627, %v175
    %v1641 = vmul.f32 %v1626, %v175
    %1642 = vrot.lane.b32.xlu0 %v1549, 127
    %v1643 = vpop.permute.xlu0 %1642
    %1644 = vrot.lane.b32.xlu0 %v1553, 127
    %v1645 = vpop.permute.xlu0 %1644
    %1646 = vrot.lane.b32.xlu0 %v1557, 127
    %v1647 = vpop.permute.xlu0 %1646
    %1648 = vrot.lane.b32.xlu0 %v1561, 127
    %v1649 = vpop.permute.xlu0 %1648
    %1650 = vrot.lane.b32.xlu0 %v1565, 127
    %v1651 = vpop.permute.xlu0 %1650
    %1652 = vrot.lane.b32.xlu0 %v1569, 127
    %v1653 = vpop.permute.xlu0 %1652
    %1654 = vrot.lane.b32.xlu0 %v1573, 127
    %v1655 = vpop.permute.xlu0 %1654
    %1656 = vrot.lane.b32.xlu0 %v1577, 127
    %v1657 = vpop.permute.xlu0 %1656
    %v1658 = vsel %vm200, %v1655, %v1657
    %v1659 = vsel %vm200, %v1653, %v1655
    %v1660 = vsel %vm200, %v1651, %v1653
    %v1661 = vsel %vm200, %v1649, %v1651
    %v1662 = vsel %vm200, %v1647, %v1649
    %v1663 = vsel %vm200, %v1645, %v1647
    %v1664 = vsel %vm200, %v1643, %v1645
    %v1665 = vsel %vm200, %v1657, %v1643
    %v1666 = vmul.f32 %v1664, %v214
    %v1667 = vmul.f32 %v1663, %v214
    %v1668 = vmul.f32 %v1662, %v214
    %v1669 = vmul.f32 %v1661, %v214
    %v1670 = vmul.f32 %v1660, %v214
    %v1671 = vmul.f32 %v1659, %v214
    %v1672 = vmul.f32 %v1658, %v214
    %v1673 = vmul.f32 %v1665, %v214
    %1674 = vrot.lane.b32.xlu0 %v1549, 126
    %v1675 = vpop.permute.xlu0 %1674
    %1676 = vrot.lane.b32.xlu0 %v1553, 126
    %v1677 = vpop.permute.xlu0 %1676
    %1678 = vrot.lane.b32.xlu0 %v1557, 126
    %v1679 = vpop.permute.xlu0 %1678
    %1680 = vrot.lane.b32.xlu0 %v1561, 126
    %v1681 = vpop.permute.xlu0 %1680
    %1682 = vrot.lane.b32.xlu0 %v1565, 126
    %v1683 = vpop.permute.xlu0 %1682
    %1684 = vrot.lane.b32.xlu0 %v1569, 126
    %v1685 = vpop.permute.xlu0 %1684
    %1686 = vrot.lane.b32.xlu0 %v1573, 126
    %v1687 = vpop.permute.xlu0 %1686
    %1688 = vrot.lane.b32.xlu0 %v1577, 126
    %v1689 = vpop.permute.xlu0 %1688
    %v1690 = vsel %vm239, %v1687, %v1689
    %v1691 = vsel %vm239, %v1685, %v1687
    %v1692 = vsel %vm239, %v1683, %v1685
    %v1693 = vsel %vm239, %v1681, %v1683
    %v1694 = vsel %vm239, %v1679, %v1681
    %v1695 = vsel %vm239, %v1677, %v1679
    %v1696 = vsel %vm239, %v1675, %v1677
    %v1697 = vsel %vm239, %v1689, %v1675
    %v1698 = vmul.f32 %v1696, %v253
    %v1699 = vmul.f32 %v1695, %v253
    %v1700 = vmul.f32 %v1694, %v253
    %v1701 = vmul.f32 %v1693, %v253
    %v1702 = vmul.f32 %v1692, %v253
    %v1703 = vmul.f32 %v1691, %v253
    %v1704 = vmul.f32 %v1690, %v253
    %v1705 = vmul.f32 %v1697, %v253
    %v1706 = vpack.c.bf16 %v1634, %v1602
    %v1707 = vpack.c.bf16 %v1635, %v1603
    %v1708 = vpack.c.bf16 %v1636, %v1604
    %v1709 = vpack.c.bf16 %v1637, %v1605
    %v1710 = vpack.c.bf16 %v1638, %v1606
    %v1711 = vpack.c.bf16 %v1639, %v1607
    %v1712 = vpack.c.bf16 %v1640, %v1608
    %v1713 = vpack.c.bf16 %v1641, %v1609
    %v1714 = vpack.c.bf16 %v1666, %v1549
    %v1715 = vpack.c.bf16 %v1667, %v1553
    %v1716 = vpack.c.bf16 %v1668, %v1557
    %v1717 = vpack.c.bf16 %v1669, %v1561
    %v1718 = vpack.c.bf16 %v1670, %v1565
    %v1719 = vpack.c.bf16 %v1671, %v1569
    %v1720 = vpack.c.bf16 %v1672, %v1573
    %v1721 = vpack.c.bf16 %v1673, %v1577
    %v1722 = vpack.c.bf16 %v1698, %v1698
    %v1723 = vpack.c.bf16 %v1699, %v1699
    %v1724 = vpack.c.bf16 %v1700, %v1700
    %v1725 = vpack.c.bf16 %v1701, %v1701
    %v1726 = vpack.c.bf16 %v1702, %v1702
    %v1727 = vpack.c.bf16 %v1703, %v1703
    %v1728 = vpack.c.bf16 %v1704, %v1704
    %v1729 = vpack.c.bf16 %v1705, %v1705
    %s1730 = scalar_lea.vmem [#allocation5], 16
    %v1731 = vld [vmem:[%s1730] sm:$0xf]
    %v1732 = vld [vmem:[%s1730 + $0x4] sm:$0xf]
    %s1733 = scalar_lea.vmem %s3, 48
    %v1734 = vld [vmem:[%s1733] sm:$0xff]
    %v1735 = vld [vmem:[%s1733 + $0x8] sm:$0xff]
    %1737 = vset.pattern.permute.xlu0 0
    %1738 = vperm.xlu0 %1737, %v1734
    %v1739 = vpop.permute.xlu0 %1738
    %1742 = vset.pattern.permute.xlu0 0
    %1743 = vperm.xlu0 %1742, %v1735
    %v1744 = vpop.permute.xlu0 %1743
    %v1748 = vunpack.c.l.b16 %v1731
    %v1749 = vunpack.c.l.b16 %v1732
    %v1750 = vpack.c.b16 %v1749, %v1748
    %v1752 = vsel %vm304, %v1750, 0
    %v1755 = vsel %vm308, %v1722, 0
    %v1758 = vsel %vm308, %v1723, 0
    %v1761 = vsel %vm308, %v1724, 0
    %v1764 = vsel %vm308, %v1725, 0
    %v1767 = vsel %vm308, %v1726, 0
    %v1770 = vsel %vm308, %v1727, 0
    %v1773 = vsel %vm308, %v1728, 0
    %v1776 = vsel %vm308, %v1729, 0
    %1778 = vmatprep.subr.bf16.mxu0 0
    %1779 = vmatpush1.bf16.msra.mxu0 0
    %1780 = vmatprep.subr.bf16.mxu0 0
    %1781 = vmatpush1.bf16.msra.mxu0 0
    %1782 = vmatprep.subr.bf16.mxu0 0
    %1783 = vmatpush1.bf16.msra.mxu0 0
    %1784 = vmatprep.subr.bf16.mxu0 0
    %1785 = vmatpush1.bf16.msra.mxu0 0
    %1786 = vmatprep.subr.bf16.mxu0 0
    %1787 = vmatpush1.bf16.msra.mxu0 0
    %1788 = vmatprep.subr.bf16.mxu0 %v1758
    %1789 = vmatpush1.bf16.msra.mxu0 %v1755
    %1790 = vmatprep.subr.bf16.mxu0 %v1715
    %1791 = vmatpush1.bf16.msra.mxu0 %v1714
    %1792 = vmatprep.subr.bf16.mxu0 %v1707
    %1793 = vmatpush1.bf16.msra.mxu0 %v1706
    %1794 = vmatprep.subr.bf16.mxu0 0
    %1795 = vmatpush2.bf16.msra.mxu0 0
    %1796 = vmatprep.subr.bf16.mxu0 0
    %1797 = vmatpush2.bf16.msra.mxu0 0
    %1798 = vmatprep.subr.bf16.mxu0 0
    %1799 = vmatpush2.bf16.msra.mxu0 0
    %1800 = vmatprep.subr.bf16.mxu0 0
    %1801 = vmatpush2.bf16.msra.mxu0 0
    %1802 = vmatprep.subr.bf16.mxu0 0
    %1803 = vmatpush2.bf16.msra.mxu0 0
    %1804 = vmatprep.subr.bf16.mxu0 0
    %1805 = vmatpush2.bf16.msra.mxu0 0
    %1806 = vmatprep.subr.bf16.mxu0 0
    %1807 = vmatpush2.bf16.msra.mxu0 0
    %1808 = vmatprep.subr.bf16.mxu0 0
    %1809 = vmatpush2.bf16.msra.mxu0 0
    %1810 = vmatprep.mubr.bf16.mxu0 0
    %1811 = vmatmul.mubr.bf16.gmra.mxu0 %v1752
    %v1812 = vpop.f32.mrf.mxu0
    %v1813 = vadd.f32 %v1739, %v1812
    %v1814 = vpop.f32.mrf.mxu0
    %v1815 = vadd.f32 %v1739, %v1814
    %v1816 = vpop.f32.mrf.mxu0
    %v1817 = vadd.f32 %v1744, %v1816
    %v1818 = vpop.f32.mrf.mxu0
    %v1819 = vadd.f32 %v1744, %v1818
    %1820 = vdwg.mxu0
    %1821 = vmatprep.subr.bf16.mxu0 0
    %1822 = vmatpush1.bf16.msra.mxu0 0
    %1823 = vmatprep.subr.bf16.mxu0 0
    %1824 = vmatpush1.bf16.msra.mxu0 0
    %1825 = vmatprep.subr.bf16.mxu0 0
    %1826 = vmatpush1.bf16.msra.mxu0 0
    %1827 = vmatprep.subr.bf16.mxu0 0
    %1828 = vmatpush1.bf16.msra.mxu0 0
    %1829 = vmatprep.subr.bf16.mxu0 0
    %1830 = vmatpush1.bf16.msra.mxu0 0
    %1831 = vmatprep.subr.bf16.mxu0 %v1764
    %1832 = vmatpush1.bf16.msra.mxu0 %v1761
    %1833 = vmatprep.subr.bf16.mxu0 %v1717
    %1834 = vmatpush1.bf16.msra.mxu0 %v1716
    %1835 = vmatprep.subr.bf16.mxu0 %v1709
    %1836 = vmatpush1.bf16.msra.mxu0 %v1708
    %1837 = vmatprep.subr.bf16.mxu0 0
    %1838 = vmatpush2.bf16.msra.mxu0 0
    %1839 = vmatprep.subr.bf16.mxu0 0
    %1840 = vmatpush2.bf16.msra.mxu0 0
    %1841 = vmatprep.subr.bf16.mxu0 0
    %1842 = vmatpush2.bf16.msra.mxu0 0
    %1843 = vmatprep.subr.bf16.mxu0 0
    %1844 = vmatpush2.bf16.msra.mxu0 0
    %1845 = vmatprep.subr.bf16.mxu0 0
    %1846 = vmatpush2.bf16.msra.mxu0 0
    %1847 = vmatprep.subr.bf16.mxu0 0
    %1848 = vmatpush2.bf16.msra.mxu0 0
    %1849 = vmatprep.subr.bf16.mxu0 0
    %1850 = vmatpush2.bf16.msra.mxu0 0
    %1851 = vmatprep.subr.bf16.mxu0 0
    %1852 = vmatpush2.bf16.msra.mxu0 0
    %1853 = vmatprep.mubr.bf16.mxu0 0
    %1854 = vmatmul.mubr.bf16.gmra.mxu0 %v1752
    %v1855 = vpop.f32.mrf.mxu0
    %v1856 = vadd.f32 %v1739, %v1855
    %v1857 = vpop.f32.mrf.mxu0
    %v1858 = vadd.f32 %v1739, %v1857
    %v1859 = vpop.f32.mrf.mxu0
    %v1860 = vadd.f32 %v1744, %v1859
    %v1861 = vpop.f32.mrf.mxu0
    %v1862 = vadd.f32 %v1744, %v1861
    %1863 = vdwg.mxu0
    %1864 = vmatprep.subr.bf16.mxu0 0
    %1865 = vmatpush1.bf16.msra.mxu0 0
    %1866 = vmatprep.subr.bf16.mxu0 0
    %1867 = vmatpush1.bf16.msra.mxu0 0
    %1868 = vmatprep.subr.bf16.mxu0 0
    %1869 = vmatpush1.bf16.msra.mxu0 0
    %1870 = vmatprep.subr.bf16.mxu0 0
    %1871 = vmatpush1.bf16.msra.mxu0 0
    %1872 = vmatprep.subr.bf16.mxu0 0
    %1873 = vmatpush1.bf16.msra.mxu0 0
    %1874 = vmatprep.subr.bf16.mxu0 %v1770
    %1875 = vmatpush1.bf16.msra.mxu0 %v1767
    %1876 = vmatprep.subr.bf16.mxu0 %v1719
    %1877 = vmatpush1.bf16.msra.mxu0 %v1718
    %1878 = vmatprep.subr.bf16.mxu0 %v1711
    %1879 = vmatpush1.bf16.msra.mxu0 %v1710
    %1880 = vmatprep.subr.bf16.mxu0 0
    %1881 = vmatpush2.bf16.msra.mxu0 0
    %1882 = vmatprep.subr.bf16.mxu0 0
    %1883 = vmatpush2.bf16.msra.mxu0 0
    %1884 = vmatprep.subr.bf16.mxu0 0
    %1885 = vmatpush2.bf16.msra.mxu0 0
    %1886 = vmatprep.subr.bf16.mxu0 0
    %1887 = vmatpush2.bf16.msra.mxu0 0
    %1888 = vmatprep.subr.bf16.mxu0 0
    %1889 = vmatpush2.bf16.msra.mxu0 0
    %1890 = vmatprep.subr.bf16.mxu0 0
    %1891 = vmatpush2.bf16.msra.mxu0 0
    %1892 = vmatprep.subr.bf16.mxu0 0
    %1893 = vmatpush2.bf16.msra.mxu0 0
    %1894 = vmatprep.subr.bf16.mxu0 0
    %1895 = vmatpush2.bf16.msra.mxu0 0
    %1896 = vmatprep.mubr.bf16.mxu0 0
    %1897 = vmatmul.mubr.bf16.gmra.mxu0 %v1752
    %v1898 = vpop.f32.mrf.mxu0
    %v1899 = vadd.f32 %v1739, %v1898
    %v1900 = vpop.f32.mrf.mxu0
    %v1901 = vadd.f32 %v1739, %v1900
    %v1902 = vpop.f32.mrf.mxu0
    %v1903 = vadd.f32 %v1744, %v1902
    %v1904 = vpop.f32.mrf.mxu0
    %v1905 = vadd.f32 %v1744, %v1904
    %1906 = vdwg.mxu0
    %1907 = vmatprep.subr.bf16.mxu0 0
    %1908 = vmatpush1.bf16.msra.mxu0 0
    %1909 = vmatprep.subr.bf16.mxu0 0
    %1910 = vmatpush1.bf16.msra.mxu0 0
    %1911 = vmatprep.subr.bf16.mxu0 0
    %1912 = vmatpush1.bf16.msra.mxu0 0
    %1913 = vmatprep.subr.bf16.mxu0 0
    %1914 = vmatpush1.bf16.msra.mxu0 0
    %1915 = vmatprep.subr.bf16.mxu0 0
    %1916 = vmatpush1.bf16.msra.mxu0 0
    %1917 = vmatprep.subr.bf16.mxu0 %v1776
    %1918 = vmatpush1.bf16.msra.mxu0 %v1773
    %1919 = vmatprep.subr.bf16.mxu0 %v1721
    %1920 = vmatpush1.bf16.msra.mxu0 %v1720
    %1921 = vmatprep.subr.bf16.mxu0 %v1713
    %1922 = vmatpush1.bf16.msra.mxu0 %v1712
    %1923 = vmatprep.subr.bf16.mxu0 0
    %1924 = vmatpush2.bf16.msra.mxu0 0
    %1925 = vmatprep.subr.bf16.mxu0 0
    %1926 = vmatpush2.bf16.msra.mxu0 0
    %1927 = vmatprep.subr.bf16.mxu0 0
    %1928 = vmatpush2.bf16.msra.mxu0 0
    %1929 = vmatprep.subr.bf16.mxu0 0
    %1930 = vmatpush2.bf16.msra.mxu0 0
    %1931 = vmatprep.subr.bf16.mxu0 0
    %1932 = vmatpush2.bf16.msra.mxu0 0
    %1933 = vmatprep.subr.bf16.mxu0 0
    %1934 = vmatpush2.bf16.msra.mxu0 0
    %1935 = vmatprep.subr.bf16.mxu0 0
    %1936 = vmatpush2.bf16.msra.mxu0 0
    %1937 = vmatprep.subr.bf16.mxu0 0
    %1938 = vmatpush2.bf16.msra.mxu0 0
    %1939 = vmatprep.mubr.bf16.mxu0 0
    %1940 = vmatmul.mubr.bf16.gmra.mxu0 %v1752
    %v1941 = vpop.f32.mrf.mxu0
    %v1942 = vadd.f32 %v1739, %v1941
    %v1943 = vpop.f32.mrf.mxu0
    %v1944 = vadd.f32 %v1739, %v1943
    %v1945 = vpop.f32.mrf.mxu0
    %v1946 = vadd.f32 %v1744, %v1945
    %v1947 = vpop.f32.mrf.mxu0
    %v1948 = vadd.f32 %v1744, %v1947
    %1949 = vdwg.mxu0
    %v1950 = vmax.f32 %v1813, 0.0
    %v1951 = vmax.f32 %v1815, 0.0
    %v1952 = vmax.f32 %v1856, 0.0
    %v1953 = vmax.f32 %v1858, 0.0
    %v1954 = vmax.f32 %v1899, 0.0
    %v1955 = vmax.f32 %v1901, 0.0
    %v1956 = vmax.f32 %v1942, 0.0
    %v1957 = vmax.f32 %v1944, 0.0
    %v1958 = vmax.f32 %v1817, 0.0
    %v1959 = vmax.f32 %v1819, 0.0
    %v1960 = vmax.f32 %v1860, 0.0
    %v1961 = vmax.f32 %v1862, 0.0
    %v1962 = vmax.f32 %v1903, 0.0
    %v1963 = vmax.f32 %v1905, 0.0
    %v1964 = vmax.f32 %v1946, 0.0
    %v1965 = vmax.f32 %v1948, 0.0
    %1966 = vrot.lane.b32.xlu0 %v1950, 2
    %v1967 = vpop.permute.xlu0 %1966
    %1968 = vrot.lane.b32.xlu0 %v1958, 2
    %v1969 = vpop.permute.xlu0 %1968
    %1970 = vrot.lane.b32.xlu0 %v1951, 2
    %v1971 = vpop.permute.xlu0 %1970
    %1972 = vrot.lane.b32.xlu0 %v1959, 2
    %v1973 = vpop.permute.xlu0 %1972
    %1974 = vrot.lane.b32.xlu0 %v1952, 2
    %v1975 = vpop.permute.xlu0 %1974
    %1976 = vrot.lane.b32.xlu0 %v1960, 2
    %v1977 = vpop.permute.xlu0 %1976
    %1978 = vrot.lane.b32.xlu0 %v1953, 2
    %v1979 = vpop.permute.xlu0 %1978
    %1980 = vrot.lane.b32.xlu0 %v1961, 2
    %v1981 = vpop.permute.xlu0 %1980
    %1982 = vrot.lane.b32.xlu0 %v1954, 2
    %v1983 = vpop.permute.xlu0 %1982
    %1984 = vrot.lane.b32.xlu0 %v1962, 2
    %v1985 = vpop.permute.xlu0 %1984
    %1986 = vrot.lane.b32.xlu0 %v1955, 2
    %v1987 = vpop.permute.xlu0 %1986
    %1988 = vrot.lane.b32.xlu0 %v1963, 2
    %v1989 = vpop.permute.xlu0 %1988
    %1990 = vrot.lane.b32.xlu0 %v1956, 2
    %v1991 = vpop.permute.xlu0 %1990
    %1992 = vrot.lane.b32.xlu0 %v1964, 2
    %v1993 = vpop.permute.xlu0 %1992
    %1994 = vrot.lane.b32.xlu0 %v1957, 2
    %v1995 = vpop.permute.xlu0 %1994
    %1996 = vrot.lane.b32.xlu0 %v1965, 2
    %v1997 = vpop.permute.xlu0 %1996
    %v1998 = vsel %vm120, %v1991, %v1995
    %v1999 = vsel %vm120, %v1993, %v1997
    %v2000 = vsel %vm120, %v1987, %v1991
    %v2001 = vsel %vm120, %v1989, %v1993
    %v2002 = vsel %vm120, %v1983, %v1987
    %v2003 = vsel %vm120, %v1985, %v1989
    %v2004 = vsel %vm120, %v1979, %v1983
    %v2005 = vsel %vm120, %v1981, %v1985
    %v2006 = vsel %vm120, %v1975, %v1979
    %v2007 = vsel %vm120, %v1977, %v1981
    %v2008 = vsel %vm120, %v1971, %v1975
    %v2009 = vsel %vm120, %v1973, %v1977
    %v2010 = vsel %vm120, %v1967, %v1971
    %v2011 = vsel %vm120, %v1969, %v1973
    %v2012 = vsel %vm120, %v1995, %v1967
    %v2013 = vsel %vm120, %v1997, %v1969
    %v2014 = vmul.f32 %v2012, %v135
    %v2015 = vmul.f32 %v2010, %v135
    %v2016 = vmul.f32 %v2008, %v135
    %v2017 = vmul.f32 %v2006, %v135
    %v2018 = vmul.f32 %v2004, %v135
    %v2019 = vmul.f32 %v2002, %v135
    %v2020 = vmul.f32 %v2000, %v135
    %v2021 = vmul.f32 %v1998, %v135
    %v2022 = vmul.f32 %v2013, %v135
    %v2023 = vmul.f32 %v2011, %v135
    %v2024 = vmul.f32 %v2009, %v135
    %v2025 = vmul.f32 %v2007, %v135
    %v2026 = vmul.f32 %v2005, %v135
    %v2027 = vmul.f32 %v2003, %v135
    %v2028 = vmul.f32 %v2001, %v135
    %v2029 = vmul.f32 %v1999, %v135
    %2030 = vrot.lane.b32.xlu0 %v1950, 1
    %v2031 = vpop.permute.xlu0 %2030
    %2032 = vrot.lane.b32.xlu0 %v1958, 1
    %v2033 = vpop.permute.xlu0 %2032
    %2034 = vrot.lane.b32.xlu0 %v1951, 1
    %v2035 = vpop.permute.xlu0 %2034
    %2036 = vrot.lane.b32.xlu0 %v1959, 1
    %v2037 = vpop.permute.xlu0 %2036
    %2038 = vrot.lane.b32.xlu0 %v1952, 1
    %v2039 = vpop.permute.xlu0 %2038
    %2040 = vrot.lane.b32.xlu0 %v1960, 1
    %v2041 = vpop.permute.xlu0 %2040
    %2042 = vrot.lane.b32.xlu0 %v1953, 1
    %v2043 = vpop.permute.xlu0 %2042
    %2044 = vrot.lane.b32.xlu0 %v1961, 1
    %v2045 = vpop.permute.xlu0 %2044
    %2046 = vrot.lane.b32.xlu0 %v1954, 1
    %v2047 = vpop.permute.xlu0 %2046
    %2048 = vrot.lane.b32.xlu0 %v1962, 1
    %v2049 = vpop.permute.xlu0 %2048
    %2050 = vrot.lane.b32.xlu0 %v1955, 1
    %v2051 = vpop.permute.xlu0 %2050
    %2052 = vrot.lane.b32.xlu0 %v1963, 1
    %v2053 = vpop.permute.xlu0 %2052
    %2054 = vrot.lane.b32.xlu0 %v1956, 1
    %v2055 = vpop.permute.xlu0 %2054
    %2056 = vrot.lane.b32.xlu0 %v1964, 1
    %v2057 = vpop.permute.xlu0 %2056
    %2058 = vrot.lane.b32.xlu0 %v1957, 1
    %v2059 = vpop.permute.xlu0 %2058
    %2060 = vrot.lane.b32.xlu0 %v1965, 1
    %v2061 = vpop.permute.xlu0 %2060
    %v2062 = vsel %vm160, %v2055, %v2059
    %v2063 = vsel %vm160, %v2057, %v2061
    %v2064 = vsel %vm160, %v2051, %v2055
    %v2065 = vsel %vm160, %v2053, %v2057
    %v2066 = vsel %vm160, %v2047, %v2051
    %v2067 = vsel %vm160, %v2049, %v2053
    %v2068 = vsel %vm160, %v2043, %v2047
    %v2069 = vsel %vm160, %v2045, %v2049
    %v2070 = vsel %vm160, %v2039, %v2043
    %v2071 = vsel %vm160, %v2041, %v2045
    %v2072 = vsel %vm160, %v2035, %v2039
    %v2073 = vsel %vm160, %v2037, %v2041
    %v2074 = vsel %vm160, %v2031, %v2035
    %v2075 = vsel %vm160, %v2033, %v2037
    %v2076 = vsel %vm160, %v2059, %v2031
    %v2077 = vsel %vm160, %v2061, %v2033
    %v2078 = vmul.f32 %v2076, %v175
    %v2079 = vmul.f32 %v2074, %v175
    %v2080 = vmul.f32 %v2072, %v175
    %v2081 = vmul.f32 %v2070, %v175
    %v2082 = vmul.f32 %v2068, %v175
    %v2083 = vmul.f32 %v2066, %v175
    %v2084 = vmul.f32 %v2064, %v175
    %v2085 = vmul.f32 %v2062, %v175
    %v2086 = vmul.f32 %v2077, %v175
    %v2087 = vmul.f32 %v2075, %v175
    %v2088 = vmul.f32 %v2073, %v175
    %v2089 = vmul.f32 %v2071, %v175
    %v2090 = vmul.f32 %v2069, %v175
    %v2091 = vmul.f32 %v2067, %v175
    %v2092 = vmul.f32 %v2065, %v175
    %v2093 = vmul.f32 %v2063, %v175
    %2094 = vrot.lane.b32.xlu0 %v1950, 127
    %v2095 = vpop.permute.xlu0 %2094
    %2096 = vrot.lane.b32.xlu0 %v1958, 127
    %v2097 = vpop.permute.xlu0 %2096
    %2098 = vrot.lane.b32.xlu0 %v1951, 127
    %v2099 = vpop.permute.xlu0 %2098
    %2100 = vrot.lane.b32.xlu0 %v1959, 127
    %v2101 = vpop.permute.xlu0 %2100
    %2102 = vrot.lane.b32.xlu0 %v1952, 127
    %v2103 = vpop.permute.xlu0 %2102
    %2104 = vrot.lane.b32.xlu0 %v1960, 127
    %v2105 = vpop.permute.xlu0 %2104
    %2106 = vrot.lane.b32.xlu0 %v1953, 127
    %v2107 = vpop.permute.xlu0 %2106
    %2108 = vrot.lane.b32.xlu0 %v1961, 127
    %v2109 = vpop.permute.xlu0 %2108
    %2110 = vrot.lane.b32.xlu0 %v1954, 127
    %v2111 = vpop.permute.xlu0 %2110
    %2112 = vrot.lane.b32.xlu0 %v1962, 127
    %v2113 = vpop.permute.xlu0 %2112
    %2114 = vrot.lane.b32.xlu0 %v1955, 127
    %v2115 = vpop.permute.xlu0 %2114
    %2116 = vrot.lane.b32.xlu0 %v1963, 127
    %v2117 = vpop.permute.xlu0 %2116
    %2118 = vrot.lane.b32.xlu0 %v1956, 127
    %v2119 = vpop.permute.xlu0 %2118
    %2120 = vrot.lane.b32.xlu0 %v1964, 127
    %v2121 = vpop.permute.xlu0 %2120
    %2122 = vrot.lane.b32.xlu0 %v1957, 127
    %v2123 = vpop.permute.xlu0 %2122
    %2124 = vrot.lane.b32.xlu0 %v1965, 127
    %v2125 = vpop.permute.xlu0 %2124
    %v2126 = vsel %vm200, %v2119, %v2123
    %v2127 = vsel %vm200, %v2121, %v2125
    %v2128 = vsel %vm200, %v2115, %v2119
    %v2129 = vsel %vm200, %v2117, %v2121
    %v2130 = vsel %vm200, %v2111, %v2115
    %v2131 = vsel %vm200, %v2113, %v2117
    %v2132 = vsel %vm200, %v2107, %v2111
    %v2133 = vsel %vm200, %v2109, %v2113
    %v2134 = vsel %vm200, %v2103, %v2107
    %v2135 = vsel %vm200, %v2105, %v2109
    %v2136 = vsel %vm200, %v2099, %v2103
    %v2137 = vsel %vm200, %v2101, %v2105
    %v2138 = vsel %vm200, %v2095, %v2099
    %v2139 = vsel %vm200, %v2097, %v2101
    %v2140 = vsel %vm200, %v2123, %v2095
    %v2141 = vsel %vm200, %v2125, %v2097
    %v2142 = vmul.f32 %v2138, %v214
    %v2143 = vmul.f32 %v2136, %v214
    %v2144 = vmul.f32 %v2134, %v214
    %v2145 = vmul.f32 %v2132, %v214
    %v2146 = vmul.f32 %v2130, %v214
    %v2147 = vmul.f32 %v2128, %v214
    %v2148 = vmul.f32 %v2126, %v214
    %v2149 = vmul.f32 %v2140, %v214
    %v2150 = vmul.f32 %v2139, %v214
    %v2151 = vmul.f32 %v2137, %v214
    %v2152 = vmul.f32 %v2135, %v214
    %v2153 = vmul.f32 %v2133, %v214
    %v2154 = vmul.f32 %v2131, %v214
    %v2155 = vmul.f32 %v2129, %v214
    %v2156 = vmul.f32 %v2127, %v214
    %v2157 = vmul.f32 %v2141, %v214
    %2158 = vrot.lane.b32.xlu0 %v1950, 126
    %v2159 = vpop.permute.xlu0 %2158
    %2160 = vrot.lane.b32.xlu0 %v1958, 126
    %v2161 = vpop.permute.xlu0 %2160
    %2162 = vrot.lane.b32.xlu0 %v1951, 126
    %v2163 = vpop.permute.xlu0 %2162
    %2164 = vrot.lane.b32.xlu0 %v1959, 126
    %v2165 = vpop.permute.xlu0 %2164
    %2166 = vrot.lane.b32.xlu0 %v1952, 126
    %v2167 = vpop.permute.xlu0 %2166
    %2168 = vrot.lane.b32.xlu0 %v1960, 126
    %v2169 = vpop.permute.xlu0 %2168
    %2170 = vrot.lane.b32.xlu0 %v1953, 126
    %v2171 = vpop.permute.xlu0 %2170
    %2172 = vrot.lane.b32.xlu0 %v1961, 126
    %v2173 = vpop.permute.xlu0 %2172
    %2174 = vrot.lane.b32.xlu0 %v1954, 126
    %v2175 = vpop.permute.xlu0 %2174
    %2176 = vrot.lane.b32.xlu0 %v1962, 126
    %v2177 = vpop.permute.xlu0 %2176
    %2178 = vrot.lane.b32.xlu0 %v1955, 126
    %v2179 = vpop.permute.xlu0 %2178
    %2180 = vrot.lane.b32.xlu0 %v1963, 126
    %v2181 = vpop.permute.xlu0 %2180
    %2182 = vrot.lane.b32.xlu0 %v1956, 126
    %v2183 = vpop.permute.xlu0 %2182
    %2184 = vrot.lane.b32.xlu0 %v1964, 126
    %v2185 = vpop.permute.xlu0 %2184
    %2186 = vrot.lane.b32.xlu0 %v1957, 126
    %v2187 = vpop.permute.xlu0 %2186
    %2188 = vrot.lane.b32.xlu0 %v1965, 126
    %v2189 = vpop.permute.xlu0 %2188
    %v2190 = vsel %vm239, %v2183, %v2187
    %v2191 = vsel %vm239, %v2185, %v2189
    %v2192 = vsel %vm239, %v2179, %v2183
    %v2193 = vsel %vm239, %v2181, %v2185
    %v2194 = vsel %vm239, %v2175, %v2179
    %v2195 = vsel %vm239, %v2177, %v2181
    %v2196 = vsel %vm239, %v2171, %v2175
    %v2197 = vsel %vm239, %v2173, %v2177
    %v2198 = vsel %vm239, %v2167, %v2171
    %v2199 = vsel %vm239, %v2169, %v2173
    %v2200 = vsel %vm239, %v2163, %v2167
    %v2201 = vsel %vm239, %v2165, %v2169
    %v2202 = vsel %vm239, %v2159, %v2163
    %v2203 = vsel %vm239, %v2161, %v2165
    %v2204 = vsel %vm239, %v2187, %v2159
    %v2205 = vsel %vm239, %v2189, %v2161
    %v2206 = vmul.f32 %v2202, %v253
    %v2207 = vmul.f32 %v2200, %v253
    %v2208 = vmul.f32 %v2198, %v253
    %v2209 = vmul.f32 %v2196, %v253
    %v2210 = vmul.f32 %v2194, %v253
    %v2211 = vmul.f32 %v2192, %v253
    %v2212 = vmul.f32 %v2190, %v253
    %v2213 = vmul.f32 %v2204, %v253
    %v2214 = vmul.f32 %v2203, %v253
    %v2215 = vmul.f32 %v2201, %v253
    %v2216 = vmul.f32 %v2199, %v253
    %v2217 = vmul.f32 %v2197, %v253
    %v2218 = vmul.f32 %v2195, %v253
    %v2219 = vmul.f32 %v2193, %v253
    %v2220 = vmul.f32 %v2191, %v253
    %v2221 = vmul.f32 %v2205, %v253
    %v2222 = vpack.c.bf16 %v2022, %v2014
    %v2223 = vpack.c.bf16 %v2023, %v2015
    %v2224 = vpack.c.bf16 %v2024, %v2016
    %v2225 = vpack.c.bf16 %v2025, %v2017
    %v2226 = vpack.c.bf16 %v2026, %v2018
    %v2227 = vpack.c.bf16 %v2027, %v2019
    %v2228 = vpack.c.bf16 %v2028, %v2020
    %v2229 = vpack.c.bf16 %v2029, %v2021
    %v2230 = vpack.c.bf16 %v2086, %v2078
    %v2231 = vpack.c.bf16 %v2087, %v2079
    %v2232 = vpack.c.bf16 %v2088, %v2080
    %v2233 = vpack.c.bf16 %v2089, %v2081
    %v2234 = vpack.c.bf16 %v2090, %v2082
    %v2235 = vpack.c.bf16 %v2091, %v2083
    %v2236 = vpack.c.bf16 %v2092, %v2084
    %v2237 = vpack.c.bf16 %v2093, %v2085
    %v2238 = vpack.c.bf16 %v1958, %v1950
    %v2239 = vpack.c.bf16 %v1959, %v1951
    %v2240 = vpack.c.bf16 %v1960, %v1952
    %v2241 = vpack.c.bf16 %v1961, %v1953
    %v2242 = vpack.c.bf16 %v1962, %v1954
    %v2243 = vpack.c.bf16 %v1963, %v1955
    %v2244 = vpack.c.bf16 %v1964, %v1956
    %v2245 = vpack.c.bf16 %v1965, %v1957
    %v2246 = vpack.c.bf16 %v2150, %v2142
    %v2247 = vpack.c.bf16 %v2151, %v2143
    %v2248 = vpack.c.bf16 %v2152, %v2144
    %v2249 = vpack.c.bf16 %v2153, %v2145
    %v2250 = vpack.c.bf16 %v2154, %v2146
    %v2251 = vpack.c.bf16 %v2155, %v2147
    %v2252 = vpack.c.bf16 %v2156, %v2148
    %v2253 = vpack.c.bf16 %v2157, %v2149
    %v2254 = vpack.c.bf16 %v2214, %v2206
    %v2255 = vpack.c.bf16 %v2215, %v2207
    %v2256 = vpack.c.bf16 %v2216, %v2208
    %v2257 = vpack.c.bf16 %v2217, %v2209
    %v2258 = vpack.c.bf16 %v2218, %v2210
    %v2259 = vpack.c.bf16 %v2219, %v2211
    %v2260 = vpack.c.bf16 %v2220, %v2212
    %v2261 = vpack.c.bf16 %v2221, %v2213
    %s2262 = scalar_lea.vmem %s2, 8
    %v2263 = vld [vmem:[%s2262] sm:$0xf]
    %v2264 = vld [vmem:[%s2262 + $0x4] sm:$0xf]
    %s2265 = scalar_lea.vmem %s3, 64
    %v2266 = vld [vmem:[%s2265] sm:$0xff]
    %v2267 = vld [vmem:[%s2265 + $0x8] sm:$0xff]
    %2269 = vset.pattern.permute.xlu0 0
    %2270 = vperm.xlu0 %2269, %v2266
    %v2271 = vpop.permute.xlu0 %2270
    %2274 = vset.pattern.permute.xlu0 0
    %2275 = vperm.xlu0 %2274, %v2267
    %v2276 = vpop.permute.xlu0 %2275
    %v2279 = vunpack.c.l.b16 %v2263
    %v2280 = vunpack.c.l.b16 %v2264
    %v2281 = vpack.c.b16 %v2280, %v2279
    %v2283 = vsel %vm1208, %v2281, 0
    %2285 = vmatprep.subr.bf16.mxu0 0
    %2286 = vmatpush1.bf16.msra.mxu0 0
    %2287 = vmatprep.subr.bf16.mxu0 0
    %2288 = vmatpush1.bf16.msra.mxu0 0
    %2289 = vmatprep.subr.bf16.mxu0 0
    %2290 = vmatpush1.bf16.msra.mxu0 0
    %2291 = vmatprep.subr.bf16.mxu0 %v2255
    %2292 = vmatpush1.bf16.msra.mxu0 %v2254
    %2293 = vmatprep.subr.bf16.mxu0 %v2247
    %2294 = vmatpush1.bf16.msra.mxu0 %v2246
    %2295 = vmatprep.subr.bf16.mxu0 %v2239
    %2296 = vmatpush1.bf16.msra.mxu0 %v2238
    %2297 = vmatprep.subr.bf16.mxu0 %v2231
    %2298 = vmatpush1.bf16.msra.mxu0 %v2230
    %2299 = vmatprep.subr.bf16.mxu0 %v2223
    %2300 = vmatpush1.bf16.msra.mxu0 %v2222
    %2301 = vmatprep.subr.bf16.mxu0 0
    %2302 = vmatpush2.bf16.msra.mxu0 0
    %2303 = vmatprep.subr.bf16.mxu0 0
    %2304 = vmatpush2.bf16.msra.mxu0 0
    %2305 = vmatprep.subr.bf16.mxu0 0
    %2306 = vmatpush2.bf16.msra.mxu0 0
    %2307 = vmatprep.subr.bf16.mxu0 0
    %2308 = vmatpush2.bf16.msra.mxu0 0
    %2309 = vmatprep.subr.bf16.mxu0 0
    %2310 = vmatpush2.bf16.msra.mxu0 0
    %2311 = vmatprep.subr.bf16.mxu0 0
    %2312 = vmatpush2.bf16.msra.mxu0 0
    %2313 = vmatprep.subr.bf16.mxu0 0
    %2314 = vmatpush2.bf16.msra.mxu0 0
    %2315 = vmatprep.subr.bf16.mxu0 0
    %2316 = vmatpush2.bf16.msra.mxu0 0
    %2317 = vmatprep.mubr.bf16.mxu0 0
    %2318 = vmatmul.mubr.bf16.gmra.mxu0 %v2283
    %v2319 = vpop.f32.mrf.mxu0
    %v2320 = vadd.f32 %v2271, %v2319
    %v2321 = vpop.f32.mrf.mxu0
    %v2322 = vadd.f32 %v2271, %v2321
    %v2323 = vpop.f32.mrf.mxu0
    %v2324 = vpop.f32.mrf.mxu0
    %2325 = vdwg.mxu0
    %2326 = vmatprep.subr.bf16.mxu0 0
    %2327 = vmatpush1.bf16.msra.mxu0 0
    %2328 = vmatprep.subr.bf16.mxu0 0
    %2329 = vmatpush1.bf16.msra.mxu0 0
    %2330 = vmatprep.subr.bf16.mxu0 0
    %2331 = vmatpush1.bf16.msra.mxu0 0
    %2332 = vmatprep.subr.bf16.mxu0 %v2257
    %2333 = vmatpush1.bf16.msra.mxu0 %v2256
    %2334 = vmatprep.subr.bf16.mxu0 %v2249
    %2335 = vmatpush1.bf16.msra.mxu0 %v2248
    %2336 = vmatprep.subr.bf16.mxu0 %v2241
    %2337 = vmatpush1.bf16.msra.mxu0 %v2240
    %2338 = vmatprep.subr.bf16.mxu0 %v2233
    %2339 = vmatpush1.bf16.msra.mxu0 %v2232
    %2340 = vmatprep.subr.bf16.mxu0 %v2225
    %2341 = vmatpush1.bf16.msra.mxu0 %v2224
    %2342 = vmatprep.subr.bf16.mxu0 0
    %2343 = vmatpush2.bf16.msra.mxu0 0
    %2344 = vmatprep.subr.bf16.mxu0 0
    %2345 = vmatpush2.bf16.msra.mxu0 0
    %2346 = vmatprep.subr.bf16.mxu0 0
    %2347 = vmatpush2.bf16.msra.mxu0 0
    %2348 = vmatprep.subr.bf16.mxu0 0
    %2349 = vmatpush2.bf16.msra.mxu0 0
    %2350 = vmatprep.subr.bf16.mxu0 0
    %2351 = vmatpush2.bf16.msra.mxu0 0
    %2352 = vmatprep.subr.bf16.mxu0 0
    %2353 = vmatpush2.bf16.msra.mxu0 0
    %2354 = vmatprep.subr.bf16.mxu0 0
    %2355 = vmatpush2.bf16.msra.mxu0 0
    %2356 = vmatprep.subr.bf16.mxu0 0
    %2357 = vmatpush2.bf16.msra.mxu0 0
    %2358 = vmatprep.mubr.bf16.mxu0 0
    %2359 = vmatmul.mubr.bf16.gmra.mxu0 %v2283
    %v2360 = vpop.f32.mrf.mxu0
    %v2361 = vadd.f32 %v2271, %v2360
    %v2362 = vpop.f32.mrf.mxu0
    %v2363 = vadd.f32 %v2271, %v2362
    %v2364 = vpop.f32.mrf.mxu0
    %v2365 = vpop.f32.mrf.mxu0
    %2366 = vdwg.mxu0
    %2367 = vmatprep.subr.bf16.mxu0 0
    %2368 = vmatpush1.bf16.msra.mxu0 0
    %2369 = vmatprep.subr.bf16.mxu0 0
    %2370 = vmatpush1.bf16.msra.mxu0 0
    %2371 = vmatprep.subr.bf16.mxu0 0
    %2372 = vmatpush1.bf16.msra.mxu0 0
    %2373 = vmatprep.subr.bf16.mxu0 %v2259
    %2374 = vmatpush1.bf16.msra.mxu0 %v2258
    %2375 = vmatprep.subr.bf16.mxu0 %v2251
    %2376 = vmatpush1.bf16.msra.mxu0 %v2250
    %2377 = vmatprep.subr.bf16.mxu0 %v2243
    %2378 = vmatpush1.bf16.msra.mxu0 %v2242
    %2379 = vmatprep.subr.bf16.mxu0 %v2235
    %2380 = vmatpush1.bf16.msra.mxu0 %v2234
    %2381 = vmatprep.subr.bf16.mxu0 %v2227
    %2382 = vmatpush1.bf16.msra.mxu0 %v2226
    %2383 = vmatprep.subr.bf16.mxu0 0
    %2384 = vmatpush2.bf16.msra.mxu0 0
    %2385 = vmatprep.subr.bf16.mxu0 0
    %2386 = vmatpush2.bf16.msra.mxu0 0
    %2387 = vmatprep.subr.bf16.mxu0 0
    %2388 = vmatpush2.bf16.msra.mxu0 0
    %2389 = vmatprep.subr.bf16.mxu0 0
    %2390 = vmatpush2.bf16.msra.mxu0 0
    %2391 = vmatprep.subr.bf16.mxu0 0
    %2392 = vmatpush2.bf16.msra.mxu0 0
    %2393 = vmatprep.subr.bf16.mxu0 0
    %2394 = vmatpush2.bf16.msra.mxu0 0
    %2395 = vmatprep.subr.bf16.mxu0 0
    %2396 = vmatpush2.bf16.msra.mxu0 0
    %2397 = vmatprep.subr.bf16.mxu0 0
    %2398 = vmatpush2.bf16.msra.mxu0 0
    %2399 = vmatprep.mubr.bf16.mxu0 0
    %2400 = vmatmul.mubr.bf16.gmra.mxu0 %v2283
    %v2401 = vpop.f32.mrf.mxu0
    %v2402 = vadd.f32 %v2271, %v2401
    %v2403 = vpop.f32.mrf.mxu0
    %v2404 = vadd.f32 %v2271, %v2403
    %v2405 = vpop.f32.mrf.mxu0
    %v2406 = vpop.f32.mrf.mxu0
    %2407 = vdwg.mxu0
    %2408 = vmatprep.subr.bf16.mxu0 0
    %2409 = vmatpush1.bf16.msra.mxu0 0
    %2410 = vmatprep.subr.bf16.mxu0 0
    %2411 = vmatpush1.bf16.msra.mxu0 0
    %2412 = vmatprep.subr.bf16.mxu0 0
    %2413 = vmatpush1.bf16.msra.mxu0 0
    %2414 = vmatprep.subr.bf16.mxu0 %v2261
    %2415 = vmatpush1.bf16.msra.mxu0 %v2260
    %2416 = vmatprep.subr.bf16.mxu0 %v2253
    %2417 = vmatpush1.bf16.msra.mxu0 %v2252
    %2418 = vmatprep.subr.bf16.mxu0 %v2245
    %2419 = vmatpush1.bf16.msra.mxu0 %v2244
    %2420 = vmatprep.subr.bf16.mxu0 %v2237
    %2421 = vmatpush1.bf16.msra.mxu0 %v2236
    %2422 = vmatprep.subr.bf16.mxu0 %v2229
    %2423 = vmatpush1.bf16.msra.mxu0 %v2228
    %2424 = vmatprep.subr.bf16.mxu0 0
    %2425 = vmatpush2.bf16.msra.mxu0 0
    %2426 = vmatprep.subr.bf16.mxu0 0
    %2427 = vmatpush2.bf16.msra.mxu0 0
    %2428 = vmatprep.subr.bf16.mxu0 0
    %2429 = vmatpush2.bf16.msra.mxu0 0
    %2430 = vmatprep.subr.bf16.mxu0 0
    %2431 = vmatpush2.bf16.msra.mxu0 0
    %2432 = vmatprep.subr.bf16.mxu0 0
    %2433 = vmatpush2.bf16.msra.mxu0 0
    %2434 = vmatprep.subr.bf16.mxu0 0
    %2435 = vmatpush2.bf16.msra.mxu0 0
    %2436 = vmatprep.subr.bf16.mxu0 0
    %2437 = vmatpush2.bf16.msra.mxu0 0
    %2438 = vmatprep.subr.bf16.mxu0 0
    %2439 = vmatpush2.bf16.msra.mxu0 0
    %2440 = vmatprep.mubr.bf16.mxu0 0
    %2441 = vmatmul.mubr.bf16.gmra.mxu0 %v2283
    %v2442 = vpop.f32.mrf.mxu0
    %v2443 = vadd.f32 %v2271, %v2442
    %v2444 = vpop.f32.mrf.mxu0
    %v2445 = vadd.f32 %v2271, %v2444
    %v2446 = vpop.f32.mrf.mxu0
    %v2447 = vpop.f32.mrf.mxu0
    %2448 = vdwg.mxu0
    %v2449 = vmax.f32 %v2320, 0.0
    %v2450 = vmax.f32 %v2322, 0.0
    %v2451 = vmax.f32 %v2361, 0.0
    %v2452 = vmax.f32 %v2363, 0.0
    %v2453 = vmax.f32 %v2402, 0.0
    %v2454 = vmax.f32 %v2404, 0.0
    %v2455 = vmax.f32 %v2443, 0.0
    %v2456 = vmax.f32 %v2445, 0.0
    %2457 = vrot.lane.b32.xlu0 %v2449, 2
    %v2458 = vpop.permute.xlu0 %2457
    %2459 = vrot.lane.b32.xlu0 %v2450, 2
    %v2460 = vpop.permute.xlu0 %2459
    %2461 = vrot.lane.b32.xlu0 %v2451, 2
    %v2462 = vpop.permute.xlu0 %2461
    %2463 = vrot.lane.b32.xlu0 %v2452, 2
    %v2464 = vpop.permute.xlu0 %2463
    %2465 = vrot.lane.b32.xlu0 %v2453, 2
    %v2466 = vpop.permute.xlu0 %2465
    %2467 = vrot.lane.b32.xlu0 %v2454, 2
    %v2468 = vpop.permute.xlu0 %2467
    %2469 = vrot.lane.b32.xlu0 %v2455, 2
    %v2470 = vpop.permute.xlu0 %2469
    %2471 = vrot.lane.b32.xlu0 %v2456, 2
    %v2472 = vpop.permute.xlu0 %2471
    %v2473 = vsel %vm120, %v2470, %v2472
    %v2474 = vsel %vm120, %v2468, %v2470
    %v2475 = vsel %vm120, %v2466, %v2468
    %v2476 = vsel %vm120, %v2464, %v2466
    %v2477 = vsel %vm120, %v2462, %v2464
    %v2478 = vsel %vm120, %v2460, %v2462
    %v2479 = vsel %vm120, %v2458, %v2460
    %v2480 = vsel %vm120, %v2472, %v2458
    %v2481 = vmul.f32 %v2480, %v135
    %v2482 = vmul.f32 %v2479, %v135
    %v2483 = vmul.f32 %v2478, %v135
    %v2484 = vmul.f32 %v2477, %v135
    %v2485 = vmul.f32 %v2476, %v135
    %v2486 = vmul.f32 %v2475, %v135
    %v2487 = vmul.f32 %v2474, %v135
    %v2488 = vmul.f32 %v2473, %v135
    %2489 = vrot.lane.b32.xlu0 %v2449, 1
    %v2490 = vpop.permute.xlu0 %2489
    %2491 = vrot.lane.b32.xlu0 %v2450, 1
    %v2492 = vpop.permute.xlu0 %2491
    %2493 = vrot.lane.b32.xlu0 %v2451, 1
    %v2494 = vpop.permute.xlu0 %2493
    %2495 = vrot.lane.b32.xlu0 %v2452, 1
    %v2496 = vpop.permute.xlu0 %2495
    %2497 = vrot.lane.b32.xlu0 %v2453, 1
    %v2498 = vpop.permute.xlu0 %2497
    %2499 = vrot.lane.b32.xlu0 %v2454, 1
    %v2500 = vpop.permute.xlu0 %2499
    %2501 = vrot.lane.b32.xlu0 %v2455, 1
    %v2502 = vpop.permute.xlu0 %2501
    %2503 = vrot.lane.b32.xlu0 %v2456, 1
    %v2504 = vpop.permute.xlu0 %2503
    %v2505 = vsel %vm160, %v2502, %v2504
    %v2506 = vsel %vm160, %v2500, %v2502
    %v2507 = vsel %vm160, %v2498, %v2500
    %v2508 = vsel %vm160, %v2496, %v2498
    %v2509 = vsel %vm160, %v2494, %v2496
    %v2510 = vsel %vm160, %v2492, %v2494
    %v2511 = vsel %vm160, %v2490, %v2492
    %v2512 = vsel %vm160, %v2504, %v2490
    %v2513 = vmul.f32 %v2512, %v175
    %v2514 = vmul.f32 %v2511, %v175
    %v2515 = vmul.f32 %v2510, %v175
    %v2516 = vmul.f32 %v2509, %v175
    %v2517 = vmul.f32 %v2508, %v175
    %v2518 = vmul.f32 %v2507, %v175
    %v2519 = vmul.f32 %v2506, %v175
    %v2520 = vmul.f32 %v2505, %v175
    %2521 = vrot.lane.b32.xlu0 %v2449, 127
    %v2522 = vpop.permute.xlu0 %2521
    %2523 = vrot.lane.b32.xlu0 %v2450, 127
    %v2524 = vpop.permute.xlu0 %2523
    %2525 = vrot.lane.b32.xlu0 %v2451, 127
    %v2526 = vpop.permute.xlu0 %2525
    %2527 = vrot.lane.b32.xlu0 %v2452, 127
    %v2528 = vpop.permute.xlu0 %2527
    %2529 = vrot.lane.b32.xlu0 %v2453, 127
    %v2530 = vpop.permute.xlu0 %2529
    %2531 = vrot.lane.b32.xlu0 %v2454, 127
    %v2532 = vpop.permute.xlu0 %2531
    %2533 = vrot.lane.b32.xlu0 %v2455, 127
    %v2534 = vpop.permute.xlu0 %2533
    %2535 = vrot.lane.b32.xlu0 %v2456, 127
    %v2536 = vpop.permute.xlu0 %2535
    %v2537 = vsel %vm200, %v2534, %v2536
    %v2538 = vsel %vm200, %v2532, %v2534
    %v2539 = vsel %vm200, %v2530, %v2532
    %v2540 = vsel %vm200, %v2528, %v2530
    %v2541 = vsel %vm200, %v2526, %v2528
    %v2542 = vsel %vm200, %v2524, %v2526
    %v2543 = vsel %vm200, %v2522, %v2524
    %v2544 = vsel %vm200, %v2536, %v2522
    %v2545 = vmul.f32 %v2543, %v214
    %v2546 = vmul.f32 %v2542, %v214
    %v2547 = vmul.f32 %v2541, %v214
    %v2548 = vmul.f32 %v2540, %v214
    %v2549 = vmul.f32 %v2539, %v214
    %v2550 = vmul.f32 %v2538, %v214
    %v2551 = vmul.f32 %v2537, %v214
    %v2552 = vmul.f32 %v2544, %v214
    %2553 = vrot.lane.b32.xlu0 %v2449, 126
    %v2554 = vpop.permute.xlu0 %2553
    %2555 = vrot.lane.b32.xlu0 %v2450, 126
    %v2556 = vpop.permute.xlu0 %2555
    %2557 = vrot.lane.b32.xlu0 %v2451, 126
    %v2558 = vpop.permute.xlu0 %2557
    %2559 = vrot.lane.b32.xlu0 %v2452, 126
    %v2560 = vpop.permute.xlu0 %2559
    %2561 = vrot.lane.b32.xlu0 %v2453, 126
    %v2562 = vpop.permute.xlu0 %2561
    %2563 = vrot.lane.b32.xlu0 %v2454, 126
    %v2564 = vpop.permute.xlu0 %2563
    %2565 = vrot.lane.b32.xlu0 %v2455, 126
    %v2566 = vpop.permute.xlu0 %2565
    %2567 = vrot.lane.b32.xlu0 %v2456, 126
    %v2568 = vpop.permute.xlu0 %2567
    %v2569 = vsel %vm239, %v2566, %v2568
    %v2570 = vsel %vm239, %v2564, %v2566
    %v2571 = vsel %vm239, %v2562, %v2564
    %v2572 = vsel %vm239, %v2560, %v2562
    %v2573 = vsel %vm239, %v2558, %v2560
    %v2574 = vsel %vm239, %v2556, %v2558
    %v2575 = vsel %vm239, %v2554, %v2556
    %v2576 = vsel %vm239, %v2568, %v2554
    %v2577 = vmul.f32 %v2575, %v253
    %v2578 = vmul.f32 %v2574, %v253
    %v2579 = vmul.f32 %v2573, %v253
    %v2580 = vmul.f32 %v2572, %v253
    %v2581 = vmul.f32 %v2571, %v253
    %v2582 = vmul.f32 %v2570, %v253
    %v2583 = vmul.f32 %v2569, %v253
    %v2584 = vmul.f32 %v2576, %v253
    %v2585 = vpack.c.bf16 %v2513, %v2481
    %v2586 = vpack.c.bf16 %v2514, %v2482
    %v2587 = vpack.c.bf16 %v2515, %v2483
    %v2588 = vpack.c.bf16 %v2516, %v2484
    %v2589 = vpack.c.bf16 %v2517, %v2485
    %v2590 = vpack.c.bf16 %v2518, %v2486
    %v2591 = vpack.c.bf16 %v2519, %v2487
    %v2592 = vpack.c.bf16 %v2520, %v2488
    %v2593 = vpack.c.bf16 %v2545, %v2449
    %v2594 = vpack.c.bf16 %v2546, %v2450
    %v2595 = vpack.c.bf16 %v2547, %v2451
    %v2596 = vpack.c.bf16 %v2548, %v2452
    %v2597 = vpack.c.bf16 %v2549, %v2453
    %v2598 = vpack.c.bf16 %v2550, %v2454
    %v2599 = vpack.c.bf16 %v2551, %v2455
    %v2600 = vpack.c.bf16 %v2552, %v2456
    %v2601 = vpack.c.bf16 %v2577, %v2577
    %v2602 = vpack.c.bf16 %v2578, %v2578
    %v2603 = vpack.c.bf16 %v2579, %v2579
    %v2604 = vpack.c.bf16 %v2580, %v2580
    %v2605 = vpack.c.bf16 %v2581, %v2581
    %v2606 = vpack.c.bf16 %v2582, %v2582
    %v2607 = vpack.c.bf16 %v2583, %v2583
    %v2608 = vpack.c.bf16 %v2584, %v2584
    %s2609 = scalar_lea.vmem [#allocation5], 24
    %v2610 = vld [vmem:[%s2609] sm:$0xf]
    %v2611 = vld [vmem:[%s2609 + $0x4] sm:$0xf]
    %s2612 = scalar_lea.vmem %s3, 80
    %v2613 = vld [vmem:[%s2612] sm:$0xff]
    %v2614 = vld [vmem:[%s2612 + $0x8] sm:$0xff]
    %2616 = vset.pattern.permute.xlu0 0
    %2617 = vperm.xlu0 %2616, %v2613
    %v2618 = vpop.permute.xlu0 %2617
    %2621 = vset.pattern.permute.xlu0 0
    %2622 = vperm.xlu0 %2621, %v2614
    %v2623 = vpop.permute.xlu0 %2622
    %v2626 = vunpack.c.l.b16 %v2610
    %v2627 = vunpack.c.l.b16 %v2611
    %v2628 = vpack.c.b16 %v2627, %v2626
    %v2630 = vsel %vm304, %v2628, 0
    %v2633 = vsel %vm308, %v2601, 0
    %v2636 = vsel %vm308, %v2602, 0
    %v2639 = vsel %vm308, %v2603, 0
    %v2642 = vsel %vm308, %v2604, 0
    %v2645 = vsel %vm308, %v2605, 0
    %v2648 = vsel %vm308, %v2606, 0
    %v2651 = vsel %vm308, %v2607, 0
    %v2654 = vsel %vm308, %v2608, 0
    %2656 = vmatprep.subr.bf16.mxu0 0
    %2657 = vmatpush1.bf16.msra.mxu0 0
    %2658 = vmatprep.subr.bf16.mxu0 0
    %2659 = vmatpush1.bf16.msra.mxu0 0
    %2660 = vmatprep.subr.bf16.mxu0 0
    %2661 = vmatpush1.bf16.msra.mxu0 0
    %2662 = vmatprep.subr.bf16.mxu0 0
    %2663 = vmatpush1.bf16.msra.mxu0 0
    %2664 = vmatprep.subr.bf16.mxu0 0
    %2665 = vmatpush1.bf16.msra.mxu0 0
    %2666 = vmatprep.subr.bf16.mxu0 %v2636
    %2667 = vmatpush1.bf16.msra.mxu0 %v2633
    %2668 = vmatprep.subr.bf16.mxu0 %v2594
    %2669 = vmatpush1.bf16.msra.mxu0 %v2593
    %2670 = vmatprep.subr.bf16.mxu0 %v2586
    %2671 = vmatpush1.bf16.msra.mxu0 %v2585
    %2672 = vmatprep.subr.bf16.mxu0 0
    %2673 = vmatpush2.bf16.msra.mxu0 0
    %2674 = vmatprep.subr.bf16.mxu0 0
    %2675 = vmatpush2.bf16.msra.mxu0 0
    %2676 = vmatprep.subr.bf16.mxu0 0
    %2677 = vmatpush2.bf16.msra.mxu0 0
    %2678 = vmatprep.subr.bf16.mxu0 0
    %2679 = vmatpush2.bf16.msra.mxu0 0
    %2680 = vmatprep.subr.bf16.mxu0 0
    %2681 = vmatpush2.bf16.msra.mxu0 0
    %2682 = vmatprep.subr.bf16.mxu0 0
    %2683 = vmatpush2.bf16.msra.mxu0 0
    %2684 = vmatprep.subr.bf16.mxu0 0
    %2685 = vmatpush2.bf16.msra.mxu0 0
    %2686 = vmatprep.subr.bf16.mxu0 0
    %2687 = vmatpush2.bf16.msra.mxu0 0
    %2688 = vmatprep.mubr.bf16.mxu0 0
    %2689 = vmatmul.mubr.bf16.gmra.mxu0 %v2630
    %v2690 = vpop.f32.mrf.mxu0
    %v2691 = vadd.f32 %v2618, %v2690
    %v2692 = vpop.f32.mrf.mxu0
    %v2693 = vadd.f32 %v2618, %v2692
    %v2694 = vpop.f32.mrf.mxu0
    %v2695 = vpop.f32.mrf.mxu0
    %2696 = vdwg.mxu0
    %2697 = vmatprep.subr.bf16.mxu0 0
    %2698 = vmatpush1.bf16.msra.mxu0 0
    %2699 = vmatprep.subr.bf16.mxu0 0
    %2700 = vmatpush1.bf16.msra.mxu0 0
    %2701 = vmatprep.subr.bf16.mxu0 0
    %2702 = vmatpush1.bf16.msra.mxu0 0
    %2703 = vmatprep.subr.bf16.mxu0 0
    %2704 = vmatpush1.bf16.msra.mxu0 0
    %2705 = vmatprep.subr.bf16.mxu0 0
    %2706 = vmatpush1.bf16.msra.mxu0 0
    %2707 = vmatprep.subr.bf16.mxu0 %v2642
    %2708 = vmatpush1.bf16.msra.mxu0 %v2639
    %2709 = vmatprep.subr.bf16.mxu0 %v2596
    %2710 = vmatpush1.bf16.msra.mxu0 %v2595
    %2711 = vmatprep.subr.bf16.mxu0 %v2588
    %2712 = vmatpush1.bf16.msra.mxu0 %v2587
    %2713 = vmatprep.subr.bf16.mxu0 0
    %2714 = vmatpush2.bf16.msra.mxu0 0
    %2715 = vmatprep.subr.bf16.mxu0 0
    %2716 = vmatpush2.bf16.msra.mxu0 0
    %2717 = vmatprep.subr.bf16.mxu0 0
    %2718 = vmatpush2.bf16.msra.mxu0 0
    %2719 = vmatprep.subr.bf16.mxu0 0
    %2720 = vmatpush2.bf16.msra.mxu0 0
    %2721 = vmatprep.subr.bf16.mxu0 0
    %2722 = vmatpush2.bf16.msra.mxu0 0
    %2723 = vmatprep.subr.bf16.mxu0 0
    %2724 = vmatpush2.bf16.msra.mxu0 0
    %2725 = vmatprep.subr.bf16.mxu0 0
    %2726 = vmatpush2.bf16.msra.mxu0 0
    %2727 = vmatprep.subr.bf16.mxu0 0
    %2728 = vmatpush2.bf16.msra.mxu0 0
    %2729 = vmatprep.mubr.bf16.mxu0 0
    %2730 = vmatmul.mubr.bf16.gmra.mxu0 %v2630
    %v2731 = vpop.f32.mrf.mxu0
    %v2732 = vadd.f32 %v2618, %v2731
    %v2733 = vpop.f32.mrf.mxu0
    %v2734 = vadd.f32 %v2618, %v2733
    %v2735 = vpop.f32.mrf.mxu0
    %v2736 = vpop.f32.mrf.mxu0
    %2737 = vdwg.mxu0
    %2738 = vmatprep.subr.bf16.mxu0 0
    %2739 = vmatpush1.bf16.msra.mxu0 0
    %2740 = vmatprep.subr.bf16.mxu0 0
    %2741 = vmatpush1.bf16.msra.mxu0 0
    %2742 = vmatprep.subr.bf16.mxu0 0
    %2743 = vmatpush1.bf16.msra.mxu0 0
    %2744 = vmatprep.subr.bf16.mxu0 0
    %2745 = vmatpush1.bf16.msra.mxu0 0
    %2746 = vmatprep.subr.bf16.mxu0 0
    %2747 = vmatpush1.bf16.msra.mxu0 0
    %2748 = vmatprep.subr.bf16.mxu0 %v2648
    %2749 = vmatpush1.bf16.msra.mxu0 %v2645
    %2750 = vmatprep.subr.bf16.mxu0 %v2598
    %2751 = vmatpush1.bf16.msra.mxu0 %v2597
    %2752 = vmatprep.subr.bf16.mxu0 %v2590
    %2753 = vmatpush1.bf16.msra.mxu0 %v2589
    %2754 = vmatprep.subr.bf16.mxu0 0
    %2755 = vmatpush2.bf16.msra.mxu0 0
    %2756 = vmatprep.subr.bf16.mxu0 0
    %2757 = vmatpush2.bf16.msra.mxu0 0
    %2758 = vmatprep.subr.bf16.mxu0 0
    %2759 = vmatpush2.bf16.msra.mxu0 0
    %2760 = vmatprep.subr.bf16.mxu0 0
    %2761 = vmatpush2.bf16.msra.mxu0 0
    %2762 = vmatprep.subr.bf16.mxu0 0
    %2763 = vmatpush2.bf16.msra.mxu0 0
    %2764 = vmatprep.subr.bf16.mxu0 0
    %2765 = vmatpush2.bf16.msra.mxu0 0
    %2766 = vmatprep.subr.bf16.mxu0 0
    %2767 = vmatpush2.bf16.msra.mxu0 0
    %2768 = vmatprep.subr.bf16.mxu0 0
    %2769 = vmatpush2.bf16.msra.mxu0 0
    %2770 = vmatprep.mubr.bf16.mxu0 0
    %2771 = vmatmul.mubr.bf16.gmra.mxu0 %v2630
    %v2772 = vpop.f32.mrf.mxu0
    %v2773 = vadd.f32 %v2618, %v2772
    %v2774 = vpop.f32.mrf.mxu0
    %v2775 = vadd.f32 %v2618, %v2774
    %v2776 = vpop.f32.mrf.mxu0
    %v2777 = vpop.f32.mrf.mxu0
    %2778 = vdwg.mxu0
    %2779 = vmatprep.subr.bf16.mxu0 0
    %2780 = vmatpush1.bf16.msra.mxu0 0
    %2781 = vmatprep.subr.bf16.mxu0 0
    %2782 = vmatpush1.bf16.msra.mxu0 0
    %2783 = vmatprep.subr.bf16.mxu0 0
    %2784 = vmatpush1.bf16.msra.mxu0 0
    %2785 = vmatprep.subr.bf16.mxu0 0
    %2786 = vmatpush1.bf16.msra.mxu0 0
    %2787 = vmatprep.subr.bf16.mxu0 0
    %2788 = vmatpush1.bf16.msra.mxu0 0
    %2789 = vmatprep.subr.bf16.mxu0 %v2654
    %2790 = vmatpush1.bf16.msra.mxu0 %v2651
    %2791 = vmatprep.subr.bf16.mxu0 %v2600
    %2792 = vmatpush1.bf16.msra.mxu0 %v2599
    %2793 = vmatprep.subr.bf16.mxu0 %v2592
    %2794 = vmatpush1.bf16.msra.mxu0 %v2591
    %2795 = vmatprep.subr.bf16.mxu0 0
    %2796 = vmatpush2.bf16.msra.mxu0 0
    %2797 = vmatprep.subr.bf16.mxu0 0
    %2798 = vmatpush2.bf16.msra.mxu0 0
    %2799 = vmatprep.subr.bf16.mxu0 0
    %2800 = vmatpush2.bf16.msra.mxu0 0
    %2801 = vmatprep.subr.bf16.mxu0 0
    %2802 = vmatpush2.bf16.msra.mxu0 0
    %2803 = vmatprep.subr.bf16.mxu0 0
    %2804 = vmatpush2.bf16.msra.mxu0 0
    %2805 = vmatprep.subr.bf16.mxu0 0
    %2806 = vmatpush2.bf16.msra.mxu0 0
    %2807 = vmatprep.subr.bf16.mxu0 0
    %2808 = vmatpush2.bf16.msra.mxu0 0
    %2809 = vmatprep.subr.bf16.mxu0 0
    %2810 = vmatpush2.bf16.msra.mxu0 0
    %2811 = vmatprep.mubr.bf16.mxu0 0
    %2812 = vmatmul.mubr.bf16.gmra.mxu0 %v2630
    %v2813 = vpop.f32.mrf.mxu0
    %v2814 = vadd.f32 %v2618, %v2813
    %v2815 = vpop.f32.mrf.mxu0
    %v2816 = vadd.f32 %v2618, %v2815
    %v2817 = vpop.f32.mrf.mxu0
    %v2818 = vpop.f32.mrf.mxu0
    %2819 = vdwg.mxu0
    %v2828 = vcombine.low %v2691, %v2693
    %v2829 = vcombine.low %v2732, %v2734
    %v2830 = vcombine.low %v2773, %v2775
    %v2831 = vcombine.low %v2814, %v2816
    %v2833 = vunpack.c.l.s4 1966171168
    %v2834 = vunpack.c.0.s8 %v2833
    %v2835 = vlaneseq
    %v2836 = vshrl.u32 %v2835, 7
    %v2837 = vsub.s32 %v2834, %v2836
    %v2838 = vrot.slane %v2828, %v2837
    %v2840 = vunpack.c.l.s4 1966171168
    %v2841 = vunpack.c.0.s8 %v2840
    %v2842 = vlaneseq
    %v2843 = vshrl.u32 %v2842, 7
    %v2844 = vsub.s32 %v2841, %v2843
    %v2845 = vrot.slane %v2829, %v2844
    %v2847 = vunpack.c.l.s4 1966171168
    %v2848 = vunpack.c.0.s8 %v2847
    %v2849 = vlaneseq
    %v2850 = vshrl.u32 %v2849, 7
    %v2851 = vsub.s32 %v2848, %v2850
    %v2852 = vrot.slane %v2830, %v2851
    %v2854 = vunpack.c.l.s4 1966171168
    %v2855 = vunpack.c.0.s8 %v2854
    %v2856 = vlaneseq
    %v2857 = vshrl.u32 %v2856, 7
    %v2858 = vsub.s32 %v2855, %v2857
    %v2859 = vrot.slane %v2831, %v2858
    %v2860 = vcombine.low %v2838, %v2845
    %v2861 = vcombine.low %v2852, %v2859
    %v2863 = vunpack.c.l.s4 1966171168
    %v2864 = vunpack.c.0.s8 %v2863
    %v2865 = vlaneseq
    %v2866 = vshrl.u32 %v2865, 7
    %v2867 = vsub.s32 %v2864, %v2866
    %v2868 = vrot.slane %v2860, %v2867
    %v2870 = vunpack.c.l.s4 1966171168
    %v2871 = vunpack.c.0.s8 %v2870
    %v2872 = vlaneseq
    %v2873 = vshrl.u32 %v2872, 7
    %v2874 = vsub.s32 %v2871, %v2873
    %v2875 = vrot.slane %v2861, %v2874
    %v2876 = vcombine.low %v2868, %v2875
    %2878 = vst [vmem:[#allocation7] sm:$0xff] %v2876
    %v2879 = vlaneseq
    %v2880 = vshrl.u32 %v2879, 7
    %v2881 = vsub.s32 0, %v2880
    %v2882 = vrot.slane %v2691, %v2881
    %v2883 = vlaneseq
    %v2884 = vshrl.u32 %v2883, 7
    %v2885 = vsub.s32 0, %v2884
    %v2886 = vrot.slane %v2693, %v2885
    %v2887 = vlaneseq
    %v2888 = vshrl.u32 %v2887, 7
    %v2889 = vsub.s32 0, %v2888
    %v2890 = vrot.slane %v2732, %v2889
    %v2891 = vlaneseq
    %v2892 = vshrl.u32 %v2891, 7
    %v2893 = vsub.s32 0, %v2892
    %v2894 = vrot.slane %v2734, %v2893
    %v2895 = vlaneseq
    %v2896 = vshrl.u32 %v2895, 7
    %v2897 = vsub.s32 0, %v2896
    %v2898 = vrot.slane %v2773, %v2897
    %v2899 = vlaneseq
    %v2900 = vshrl.u32 %v2899, 7
    %v2901 = vsub.s32 0, %v2900
    %v2902 = vrot.slane %v2775, %v2901
    %v2903 = vlaneseq
    %v2904 = vshrl.u32 %v2903, 7
    %v2905 = vsub.s32 0, %v2904
    %v2906 = vrot.slane %v2814, %v2905
    %v2907 = vlaneseq
    %v2908 = vshrl.u32 %v2907, 7
    %v2909 = vsub.s32 0, %v2908
    %v2910 = vrot.slane %v2816, %v2909
    %2911 = vrot.lane.b32.xlu0 %v2882, 2
    %v2912 = vpop.permute.xlu0 %2911
    %2913 = vrot.lane.b32.xlu0 %v2886, 2
    %v2914 = vpop.permute.xlu0 %2913
    %2915 = vrot.lane.b32.xlu0 %v2890, 2
    %v2916 = vpop.permute.xlu0 %2915
    %2917 = vrot.lane.b32.xlu0 %v2894, 2
    %v2918 = vpop.permute.xlu0 %2917
    %2919 = vrot.lane.b32.xlu0 %v2898, 2
    %v2920 = vpop.permute.xlu0 %2919
    %2921 = vrot.lane.b32.xlu0 %v2902, 2
    %v2922 = vpop.permute.xlu0 %2921
    %2923 = vrot.lane.b32.xlu0 %v2906, 2
    %v2924 = vpop.permute.xlu0 %2923
    %2925 = vrot.lane.b32.xlu0 %v2910, 2
    %v2926 = vpop.permute.xlu0 %2925
    %v2927 = vsel %vm120, %v2924, %v2926
    %v2928 = vsel %vm120, %v2922, %v2924
    %v2929 = vsel %vm120, %v2920, %v2922
    %v2930 = vsel %vm120, %v2918, %v2920
    %v2931 = vsel %vm120, %v2916, %v2918
    %v2932 = vsel %vm120, %v2914, %v2916
    %v2933 = vsel %vm120, %v2912, %v2914
    %v2934 = vsel %vm120, %v2926, %v2912
    %v2935 = vmul.f32 %v2934, %v135
    %v2936 = vmul.f32 %v2933, %v135
    %v2937 = vmul.f32 %v2932, %v135
    %v2938 = vmul.f32 %v2931, %v135
    %v2939 = vmul.f32 %v2930, %v135
    %v2940 = vmul.f32 %v2929, %v135
    %v2941 = vmul.f32 %v2928, %v135
    %v2942 = vmul.f32 %v2927, %v135
    %2943 = vrot.lane.b32.xlu0 %v2882, 1
    %v2944 = vpop.permute.xlu0 %2943
    %2945 = vrot.lane.b32.xlu0 %v2886, 1
    %v2946 = vpop.permute.xlu0 %2945
    %2947 = vrot.lane.b32.xlu0 %v2890, 1
    %v2948 = vpop.permute.xlu0 %2947
    %2949 = vrot.lane.b32.xlu0 %v2894, 1
    %v2950 = vpop.permute.xlu0 %2949
    %2951 = vrot.lane.b32.xlu0 %v2898, 1
    %v2952 = vpop.permute.xlu0 %2951
    %2953 = vrot.lane.b32.xlu0 %v2902, 1
    %v2954 = vpop.permute.xlu0 %2953
    %2955 = vrot.lane.b32.xlu0 %v2906, 1
    %v2956 = vpop.permute.xlu0 %2955
    %2957 = vrot.lane.b32.xlu0 %v2910, 1
    %v2958 = vpop.permute.xlu0 %2957
    %v2959 = vsel %vm160, %v2956, %v2958
    %v2960 = vsel %vm160, %v2954, %v2956
    %v2961 = vsel %vm160, %v2952, %v2954
    %v2962 = vsel %vm160, %v2950, %v2952
    %v2963 = vsel %vm160, %v2948, %v2950
    %v2964 = vsel %vm160, %v2946, %v2948
    %v2965 = vsel %vm160, %v2944, %v2946
    %v2966 = vsel %vm160, %v2958, %v2944
    %v2967 = vmul.f32 %v2966, %v175
    %v2968 = vmul.f32 %v2965, %v175
    %v2969 = vmul.f32 %v2964, %v175
    %v2970 = vmul.f32 %v2963, %v175
    %v2971 = vmul.f32 %v2962, %v175
    %v2972 = vmul.f32 %v2961, %v175
    %v2973 = vmul.f32 %v2960, %v175
    %v2974 = vmul.f32 %v2959, %v175
    %2975 = vrot.lane.b32.xlu0 %v2882, 127
    %v2976 = vpop.permute.xlu0 %2975
    %2977 = vrot.lane.b32.xlu0 %v2886, 127
    %v2978 = vpop.permute.xlu0 %2977
    %2979 = vrot.lane.b32.xlu0 %v2890, 127
    %v2980 = vpop.permute.xlu0 %2979
    %2981 = vrot.lane.b32.xlu0 %v2894, 127
    %v2982 = vpop.permute.xlu0 %2981
    %2983 = vrot.lane.b32.xlu0 %v2898, 127
    %v2984 = vpop.permute.xlu0 %2983
    %2985 = vrot.lane.b32.xlu0 %v2902, 127
    %v2986 = vpop.permute.xlu0 %2985
    %2987 = vrot.lane.b32.xlu0 %v2906, 127
    %v2988 = vpop.permute.xlu0 %2987
    %2989 = vrot.lane.b32.xlu0 %v2910, 127
    %v2990 = vpop.permute.xlu0 %2989
    %v2991 = vsel %vm200, %v2988, %v2990
    %v2992 = vsel %vm200, %v2986, %v2988
    %v2993 = vsel %vm200, %v2984, %v2986
    %v2994 = vsel %vm200, %v2982, %v2984
    %v2995 = vsel %vm200, %v2980, %v2982
    %v2996 = vsel %vm200, %v2978, %v2980
    %v2997 = vsel %vm200, %v2976, %v2978
    %v2998 = vsel %vm200, %v2990, %v2976
    %v2999 = vmul.f32 %v2997, %v214
    %v3000 = vmul.f32 %v2996, %v214
    %v3001 = vmul.f32 %v2995, %v214
    %v3002 = vmul.f32 %v2994, %v214
    %v3003 = vmul.f32 %v2993, %v214
    %v3004 = vmul.f32 %v2992, %v214
    %v3005 = vmul.f32 %v2991, %v214
    %v3006 = vmul.f32 %v2998, %v214
    %3007 = vrot.lane.b32.xlu0 %v2882, 126
    %v3008 = vpop.permute.xlu0 %3007
    %3009 = vrot.lane.b32.xlu0 %v2886, 126
    %v3010 = vpop.permute.xlu0 %3009
    %3011 = vrot.lane.b32.xlu0 %v2890, 126
    %v3012 = vpop.permute.xlu0 %3011
    %3013 = vrot.lane.b32.xlu0 %v2894, 126
    %v3014 = vpop.permute.xlu0 %3013
    %3015 = vrot.lane.b32.xlu0 %v2898, 126
    %v3016 = vpop.permute.xlu0 %3015
    %3017 = vrot.lane.b32.xlu0 %v2902, 126
    %v3018 = vpop.permute.xlu0 %3017
    %3019 = vrot.lane.b32.xlu0 %v2906, 126
    %v3020 = vpop.permute.xlu0 %3019
    %3021 = vrot.lane.b32.xlu0 %v2910, 126
    %v3022 = vpop.permute.xlu0 %3021
    %v3023 = vsel %vm239, %v3020, %v3022
    %v3024 = vsel %vm239, %v3018, %v3020
    %v3025 = vsel %vm239, %v3016, %v3018
    %v3026 = vsel %vm239, %v3014, %v3016
    %v3027 = vsel %vm239, %v3012, %v3014
    %v3028 = vsel %vm239, %v3010, %v3012
    %v3029 = vsel %vm239, %v3008, %v3010
    %v3030 = vsel %vm239, %v3022, %v3008
    %v3031 = vmul.f32 %v3029, %v253
    %v3032 = vmul.f32 %v3028, %v253
    %v3033 = vmul.f32 %v3027, %v253
    %v3034 = vmul.f32 %v3026, %v253
    %v3035 = vmul.f32 %v3025, %v253
    %v3036 = vmul.f32 %v3024, %v253
    %v3037 = vmul.f32 %v3023, %v253
    %v3038 = vmul.f32 %v3030, %v253
    %v3039 = vpack.c.bf16 %v2967, %v2935
    %v3040 = vpack.c.bf16 %v2968, %v2936
    %v3041 = vpack.c.bf16 %v2969, %v2937
    %v3042 = vpack.c.bf16 %v2970, %v2938
    %v3043 = vpack.c.bf16 %v2971, %v2939
    %v3044 = vpack.c.bf16 %v2972, %v2940
    %v3045 = vpack.c.bf16 %v2973, %v2941
    %v3046 = vpack.c.bf16 %v2974, %v2942
    %v3047 = vpack.c.bf16 %v2999, %v2882
    %v3048 = vpack.c.bf16 %v3000, %v2886
    %v3049 = vpack.c.bf16 %v3001, %v2890
    %v3050 = vpack.c.bf16 %v3002, %v2894
    %v3051 = vpack.c.bf16 %v3003, %v2898
    %v3052 = vpack.c.bf16 %v3004, %v2902
    %v3053 = vpack.c.bf16 %v3005, %v2906
    %v3054 = vpack.c.bf16 %v3006, %v2910
    %v3055 = vpack.c.bf16 %v3031, %v3031
    %v3056 = vpack.c.bf16 %v3032, %v3032
    %v3057 = vpack.c.bf16 %v3033, %v3033
    %v3058 = vpack.c.bf16 %v3034, %v3034
    %v3059 = vpack.c.bf16 %v3035, %v3035
    %v3060 = vpack.c.bf16 %v3036, %v3036
    %v3061 = vpack.c.bf16 %v3037, %v3037
    %v3062 = vpack.c.bf16 %v3038, %v3038
    %s3063 = scalar_lea.vmem [#allocation5], 32
    %v3064 = vld [vmem:[%s3063] sm:$0xf]
    %v3065 = vld [vmem:[%s3063 + $0x4] sm:$0xf]
    %s3066 = scalar_lea.vmem %s3, 96
    %v3067 = vld [vmem:[%s3066] sm:$0xff]
    %v3068 = vld [vmem:[%s3066 + $0x8] sm:$0xff]
    %3070 = vset.pattern.permute.xlu0 0
    %3071 = vperm.xlu0 %3070, %v3067
    %v3072 = vpop.permute.xlu0 %3071
    %3075 = vset.pattern.permute.xlu0 0
    %3076 = vperm.xlu0 %3075, %v3068
    %v3077 = vpop.permute.xlu0 %3076
    %v3080 = vunpack.c.l.b16 %v3064
    %v3081 = vunpack.c.l.b16 %v3065
    %v3082 = vpack.c.b16 %v3081, %v3080
    %v3084 = vsel %vm304, %v3082, 0
    %v3087 = vsel %vm308, %v3055, 0
    %v3090 = vsel %vm308, %v3056, 0
    %v3093 = vsel %vm308, %v3057, 0
    %v3096 = vsel %vm308, %v3058, 0
    %v3099 = vsel %vm308, %v3059, 0
    %v3102 = vsel %vm308, %v3060, 0
    %v3105 = vsel %vm308, %v3061, 0
    %v3108 = vsel %vm308, %v3062, 0
    %3110 = vmatprep.subr.bf16.mxu0 0
    %3111 = vmatpush1.bf16.msra.mxu0 0
    %3112 = vmatprep.subr.bf16.mxu0 0
    %3113 = vmatpush1.bf16.msra.mxu0 0
    %3114 = vmatprep.subr.bf16.mxu0 0
    %3115 = vmatpush1.bf16.msra.mxu0 0
    %3116 = vmatprep.subr.bf16.mxu0 0
    %3117 = vmatpush1.bf16.msra.mxu0 0
    %3118 = vmatprep.subr.bf16.mxu0 0
    %3119 = vmatpush1.bf16.msra.mxu0 0
    %3120 = vmatprep.subr.bf16.mxu0 %v3090
    %3121 = vmatpush1.bf16.msra.mxu0 %v3087
    %3122 = vmatprep.subr.bf16.mxu0 %v3048
    %3123 = vmatpush1.bf16.msra.mxu0 %v3047
    %3124 = vmatprep.subr.bf16.mxu0 %v3040
    %3125 = vmatpush1.bf16.msra.mxu0 %v3039
    %3126 = vmatprep.subr.bf16.mxu0 0
    %3127 = vmatpush2.bf16.msra.mxu0 0
    %3128 = vmatprep.subr.bf16.mxu0 0
    %3129 = vmatpush2.bf16.msra.mxu0 0
    %3130 = vmatprep.subr.bf16.mxu0 0
    %3131 = vmatpush2.bf16.msra.mxu0 0
    %3132 = vmatprep.subr.bf16.mxu0 0
    %3133 = vmatpush2.bf16.msra.mxu0 0
    %3134 = vmatprep.subr.bf16.mxu0 0
    %3135 = vmatpush2.bf16.msra.mxu0 0
    %3136 = vmatprep.subr.bf16.mxu0 0
    %3137 = vmatpush2.bf16.msra.mxu0 0
    %3138 = vmatprep.subr.bf16.mxu0 0
    %3139 = vmatpush2.bf16.msra.mxu0 0
    %3140 = vmatprep.subr.bf16.mxu0 0
    %3141 = vmatpush2.bf16.msra.mxu0 0
    %3142 = vmatprep.mubr.bf16.mxu0 0
    %3143 = vmatmul.mubr.bf16.gmra.mxu0 %v3084
    %v3144 = vpop.f32.mrf.mxu0
    %v3145 = vadd.f32 %v3072, %v3144
    %v3146 = vpop.f32.mrf.mxu0
    %v3147 = vadd.f32 %v3072, %v3146
    %v3148 = vpop.f32.mrf.mxu0
    %v3149 = vpop.f32.mrf.mxu0
    %3150 = vdwg.mxu0
    %3151 = vmatprep.subr.bf16.mxu0 0
    %3152 = vmatpush1.bf16.msra.mxu0 0
    %3153 = vmatprep.subr.bf16.mxu0 0
    %3154 = vmatpush1.bf16.msra.mxu0 0
    %3155 = vmatprep.subr.bf16.mxu0 0
    %3156 = vmatpush1.bf16.msra.mxu0 0
    %3157 = vmatprep.subr.bf16.mxu0 0
    %3158 = vmatpush1.bf16.msra.mxu0 0
    %3159 = vmatprep.subr.bf16.mxu0 0
    %3160 = vmatpush1.bf16.msra.mxu0 0
    %3161 = vmatprep.subr.bf16.mxu0 %v3096
    %3162 = vmatpush1.bf16.msra.mxu0 %v3093
    %3163 = vmatprep.subr.bf16.mxu0 %v3050
    %3164 = vmatpush1.bf16.msra.mxu0 %v3049
    %3165 = vmatprep.subr.bf16.mxu0 %v3042
    %3166 = vmatpush1.bf16.msra.mxu0 %v3041
    %3167 = vmatprep.subr.bf16.mxu0 0
    %3168 = vmatpush2.bf16.msra.mxu0 0
    %3169 = vmatprep.subr.bf16.mxu0 0
    %3170 = vmatpush2.bf16.msra.mxu0 0
    %3171 = vmatprep.subr.bf16.mxu0 0
    %3172 = vmatpush2.bf16.msra.mxu0 0
    %3173 = vmatprep.subr.bf16.mxu0 0
    %3174 = vmatpush2.bf16.msra.mxu0 0
    %3175 = vmatprep.subr.bf16.mxu0 0
    %3176 = vmatpush2.bf16.msra.mxu0 0
    %3177 = vmatprep.subr.bf16.mxu0 0
    %3178 = vmatpush2.bf16.msra.mxu0 0
    %3179 = vmatprep.subr.bf16.mxu0 0
    %3180 = vmatpush2.bf16.msra.mxu0 0
    %3181 = vmatprep.subr.bf16.mxu0 0
    %3182 = vmatpush2.bf16.msra.mxu0 0
    %3183 = vmatprep.mubr.bf16.mxu0 0
    %3184 = vmatmul.mubr.bf16.gmra.mxu0 %v3084
    %v3185 = vpop.f32.mrf.mxu0
    %v3186 = vadd.f32 %v3072, %v3185
    %v3187 = vpop.f32.mrf.mxu0
    %v3188 = vadd.f32 %v3072, %v3187
    %v3189 = vpop.f32.mrf.mxu0
    %v3190 = vpop.f32.mrf.mxu0
    %3191 = vdwg.mxu0
    %3192 = vmatprep.subr.bf16.mxu0 0
    %3193 = vmatpush1.bf16.msra.mxu0 0
    %3194 = vmatprep.subr.bf16.mxu0 0
    %3195 = vmatpush1.bf16.msra.mxu0 0
    %3196 = vmatprep.subr.bf16.mxu0 0
    %3197 = vmatpush1.bf16.msra.mxu0 0
    %3198 = vmatprep.subr.bf16.mxu0 0
    %3199 = vmatpush1.bf16.msra.mxu0 0
    %3200 = vmatprep.subr.bf16.mxu0 0
    %3201 = vmatpush1.bf16.msra.mxu0 0
    %3202 = vmatprep.subr.bf16.mxu0 %v3102
    %3203 = vmatpush1.bf16.msra.mxu0 %v3099
    %3204 = vmatprep.subr.bf16.mxu0 %v3052
    %3205 = vmatpush1.bf16.msra.mxu0 %v3051
    %3206 = vmatprep.subr.bf16.mxu0 %v3044
    %3207 = vmatpush1.bf16.msra.mxu0 %v3043
    %3208 = vmatprep.subr.bf16.mxu0 0
    %3209 = vmatpush2.bf16.msra.mxu0 0
    %3210 = vmatprep.subr.bf16.mxu0 0
    %3211 = vmatpush2.bf16.msra.mxu0 0
    %3212 = vmatprep.subr.bf16.mxu0 0
    %3213 = vmatpush2.bf16.msra.mxu0 0
    %3214 = vmatprep.subr.bf16.mxu0 0
    %3215 = vmatpush2.bf16.msra.mxu0 0
    %3216 = vmatprep.subr.bf16.mxu0 0
    %3217 = vmatpush2.bf16.msra.mxu0 0
    %3218 = vmatprep.subr.bf16.mxu0 0
    %3219 = vmatpush2.bf16.msra.mxu0 0
    %3220 = vmatprep.subr.bf16.mxu0 0
    %3221 = vmatpush2.bf16.msra.mxu0 0
    %3222 = vmatprep.subr.bf16.mxu0 0
    %3223 = vmatpush2.bf16.msra.mxu0 0
    %3224 = vmatprep.mubr.bf16.mxu0 0
    %3225 = vmatmul.mubr.bf16.gmra.mxu0 %v3084
    %v3226 = vpop.f32.mrf.mxu0
    %v3227 = vadd.f32 %v3072, %v3226
    %v3228 = vpop.f32.mrf.mxu0
    %v3229 = vadd.f32 %v3072, %v3228
    %v3230 = vpop.f32.mrf.mxu0
    %v3231 = vpop.f32.mrf.mxu0
    %3232 = vdwg.mxu0
    %3233 = vmatprep.subr.bf16.mxu0 0
    %3234 = vmatpush1.bf16.msra.mxu0 0
    %3235 = vmatprep.subr.bf16.mxu0 0
    %3236 = vmatpush1.bf16.msra.mxu0 0
    %3237 = vmatprep.subr.bf16.mxu0 0
    %3238 = vmatpush1.bf16.msra.mxu0 0
    %3239 = vmatprep.subr.bf16.mxu0 0
    %3240 = vmatpush1.bf16.msra.mxu0 0
    %3241 = vmatprep.subr.bf16.mxu0 0
    %3242 = vmatpush1.bf16.msra.mxu0 0
    %3243 = vmatprep.subr.bf16.mxu0 %v3108
    %3244 = vmatpush1.bf16.msra.mxu0 %v3105
    %3245 = vmatprep.subr.bf16.mxu0 %v3054
    %3246 = vmatpush1.bf16.msra.mxu0 %v3053
    %3247 = vmatprep.subr.bf16.mxu0 %v3046
    %3248 = vmatpush1.bf16.msra.mxu0 %v3045
    %3249 = vmatprep.subr.bf16.mxu0 0
    %3250 = vmatpush2.bf16.msra.mxu0 0
    %3251 = vmatprep.subr.bf16.mxu0 0
    %3252 = vmatpush2.bf16.msra.mxu0 0
    %3253 = vmatprep.subr.bf16.mxu0 0
    %3254 = vmatpush2.bf16.msra.mxu0 0
    %3255 = vmatprep.subr.bf16.mxu0 0
    %3256 = vmatpush2.bf16.msra.mxu0 0
    %3257 = vmatprep.subr.bf16.mxu0 0
    %3258 = vmatpush2.bf16.msra.mxu0 0
    %3259 = vmatprep.subr.bf16.mxu0 0
    %3260 = vmatpush2.bf16.msra.mxu0 0
    %3261 = vmatprep.subr.bf16.mxu0 0
    %3262 = vmatpush2.bf16.msra.mxu0 0
    %3263 = vmatprep.subr.bf16.mxu0 0
    %3264 = vmatpush2.bf16.msra.mxu0 0
    %3265 = vmatprep.mubr.bf16.mxu0 0
    %3266 = vmatmul.mubr.bf16.gmra.mxu0 %v3084
    %v3267 = vpop.f32.mrf.mxu0
    %v3268 = vadd.f32 %v3072, %v3267
    %v3269 = vpop.f32.mrf.mxu0
    %v3270 = vadd.f32 %v3072, %v3269
    %v3271 = vpop.f32.mrf.mxu0
    %v3272 = vpop.f32.mrf.mxu0
    %3273 = vdwg.mxu0
    %v3274 = vmax.f32 %v3145, 0.0
    %v3275 = vmax.f32 %v3147, 0.0
    %v3276 = vmax.f32 %v3186, 0.0
    %v3277 = vmax.f32 %v3188, 0.0
    %v3278 = vmax.f32 %v3227, 0.0
    %v3279 = vmax.f32 %v3229, 0.0
    %v3280 = vmax.f32 %v3268, 0.0
    %v3281 = vmax.f32 %v3270, 0.0
    %3282 = vrot.lane.b32.xlu0 %v3274, 127
    %v3283 = vpop.permute.xlu0 %3282
    %3284 = vrot.lane.b32.xlu0 %v3275, 127
    %v3285 = vpop.permute.xlu0 %3284
    %3286 = vrot.lane.b32.xlu0 %v3276, 127
    %v3287 = vpop.permute.xlu0 %3286
    %3288 = vrot.lane.b32.xlu0 %v3277, 127
    %v3289 = vpop.permute.xlu0 %3288
    %3290 = vrot.lane.b32.xlu0 %v3278, 127
    %v3291 = vpop.permute.xlu0 %3290
    %3292 = vrot.lane.b32.xlu0 %v3279, 127
    %v3293 = vpop.permute.xlu0 %3292
    %3294 = vrot.lane.b32.xlu0 %v3280, 127
    %v3295 = vpop.permute.xlu0 %3294
    %3296 = vrot.lane.b32.xlu0 %v3281, 127
    %v3297 = vpop.permute.xlu0 %3296
    %v3298 = vsel %vm200, %v3295, %v3297
    %v3299 = vsel %vm200, %v3293, %v3295
    %v3300 = vsel %vm200, %v3291, %v3293
    %v3301 = vsel %vm200, %v3289, %v3291
    %v3302 = vsel %vm200, %v3287, %v3289
    %v3303 = vsel %vm200, %v3285, %v3287
    %v3304 = vsel %vm200, %v3283, %v3285
    %v3305 = vsel %vm200, %v3297, %v3283
    %v3306 = vadd.f32 %v3274, %v3304
    %v3307 = vadd.f32 %v3275, %v3303
    %v3308 = vadd.f32 %v3276, %v3302
    %v3309 = vadd.f32 %v3277, %v3301
    %v3310 = vadd.f32 %v3278, %v3300
    %v3311 = vadd.f32 %v3279, %v3299
    %v3312 = vadd.f32 %v3280, %v3298
    %v3313 = vadd.f32 %v3281, %v3305
    %v3314 = vmul.f32 %v3306, 0.5
    %v3315 = vmul.f32 %v3307, 0.5
    %v3316 = vmul.f32 %v3308, 0.5
    %v3317 = vmul.f32 %v3309, 0.5
    %v3318 = vmul.f32 %v3310, 0.5
    %v3319 = vmul.f32 %v3311, 0.5
    %v3320 = vmul.f32 %v3312, 0.5
    %v3321 = vmul.f32 %v3313, 0.5
    %3322 = vrot.lane.b32.xlu0 %v3314, 4
    %v3323 = vpop.permute.xlu0 %3322
    %3324 = vrot.lane.b32.xlu0 %v3315, 4
    %v3325 = vpop.permute.xlu0 %3324
    %3326 = vrot.lane.b32.xlu0 %v3316, 4
    %v3327 = vpop.permute.xlu0 %3326
    %3328 = vrot.lane.b32.xlu0 %v3317, 4
    %v3329 = vpop.permute.xlu0 %3328
    %3330 = vrot.lane.b32.xlu0 %v3318, 4
    %v3331 = vpop.permute.xlu0 %3330
    %3332 = vrot.lane.b32.xlu0 %v3319, 4
    %v3333 = vpop.permute.xlu0 %3332
    %3334 = vrot.lane.b32.xlu0 %v3320, 4
    %v3335 = vpop.permute.xlu0 %3334
    %3336 = vrot.lane.b32.xlu0 %v3321, 4
    %v3337 = vpop.permute.xlu0 %3336
    %vm3338 = vcmp.lt.s32.totalorder %v61, 4
    %v3339 = vsel %vm3338, %v3335, %v3337
    %v3340 = vsel %vm3338, %v3333, %v3335
    %v3341 = vsel %vm3338, %v3331, %v3333
    %v3342 = vsel %vm3338, %v3329, %v3331
    %v3343 = vsel %vm3338, %v3327, %v3329
    %v3344 = vsel %vm3338, %v3325, %v3327
    %v3345 = vsel %vm3338, %v3323, %v3325
    %v3346 = vsel %vm3338, %v3337, %v3323
    %vm3347 = vcmp.ge.s32.totalorder %v61, 4
    %v3348 = vsel %vm3347, 1, 0
    %v3349 = vcvt.s32.f32 %v3348
    %v3350 = vlaneseq
    %v3351 = vshrl.u32 %v3350, 7
    %v3352 = vsub.s32 0, %v3351
    %v3353 = vrot.slane %v3349, %v3352
    %v3354 = vmul.f32 %v3346, %v3353
    %v3355 = vmul.f32 %v3345, %v3353
    %v3356 = vmul.f32 %v3344, %v3353
    %v3357 = vmul.f32 %v3343, %v3353
    %v3358 = vmul.f32 %v3342, %v3353
    %v3359 = vmul.f32 %v3341, %v3353
    %v3360 = vmul.f32 %v3340, %v3353
    %v3361 = vmul.f32 %v3339, %v3353
    %3362 = vrot.lane.b32.xlu0 %v3314, 2
    %v3363 = vpop.permute.xlu0 %3362
    %3364 = vrot.lane.b32.xlu0 %v3315, 2
    %v3365 = vpop.permute.xlu0 %3364
    %3366 = vrot.lane.b32.xlu0 %v3316, 2
    %v3367 = vpop.permute.xlu0 %3366
    %3368 = vrot.lane.b32.xlu0 %v3317, 2
    %v3369 = vpop.permute.xlu0 %3368
    %3370 = vrot.lane.b32.xlu0 %v3318, 2
    %v3371 = vpop.permute.xlu0 %3370
    %3372 = vrot.lane.b32.xlu0 %v3319, 2
    %v3373 = vpop.permute.xlu0 %3372
    %3374 = vrot.lane.b32.xlu0 %v3320, 2
    %v3375 = vpop.permute.xlu0 %3374
    %3376 = vrot.lane.b32.xlu0 %v3321, 2
    %v3377 = vpop.permute.xlu0 %3376
    %v3378 = vsel %vm120, %v3375, %v3377
    %v3379 = vsel %vm120, %v3373, %v3375
    %v3380 = vsel %vm120, %v3371, %v3373
    %v3381 = vsel %vm120, %v3369, %v3371
    %v3382 = vsel %vm120, %v3367, %v3369
    %v3383 = vsel %vm120, %v3365, %v3367
    %v3384 = vsel %vm120, %v3363, %v3365
    %v3385 = vsel %vm120, %v3377, %v3363
    %v3386 = vmul.f32 %v3385, %v135
    %v3387 = vmul.f32 %v3384, %v135
    %v3388 = vmul.f32 %v3383, %v135
    %v3389 = vmul.f32 %v3382, %v135
    %v3390 = vmul.f32 %v3381, %v135
    %v3391 = vmul.f32 %v3380, %v135
    %v3392 = vmul.f32 %v3379, %v135
    %v3393 = vmul.f32 %v3378, %v135
    %3394 = vrot.lane.b32.xlu0 %v3314, 126
    %v3395 = vpop.permute.xlu0 %3394
    %3396 = vrot.lane.b32.xlu0 %v3315, 126
    %v3397 = vpop.permute.xlu0 %3396
    %3398 = vrot.lane.b32.xlu0 %v3316, 126
    %v3399 = vpop.permute.xlu0 %3398
    %3400 = vrot.lane.b32.xlu0 %v3317, 126
    %v3401 = vpop.permute.xlu0 %3400
    %3402 = vrot.lane.b32.xlu0 %v3318, 126
    %v3403 = vpop.permute.xlu0 %3402
    %3404 = vrot.lane.b32.xlu0 %v3319, 126
    %v3405 = vpop.permute.xlu0 %3404
    %3406 = vrot.lane.b32.xlu0 %v3320, 126
    %v3407 = vpop.permute.xlu0 %3406
    %3408 = vrot.lane.b32.xlu0 %v3321, 126
    %v3409 = vpop.permute.xlu0 %3408
    %v3410 = vsel %vm239, %v3407, %v3409
    %v3411 = vsel %vm239, %v3405, %v3407
    %v3412 = vsel %vm239, %v3403, %v3405
    %v3413 = vsel %vm239, %v3401, %v3403
    %v3414 = vsel %vm239, %v3399, %v3401
    %v3415 = vsel %vm239, %v3397, %v3399
    %v3416 = vsel %vm239, %v3395, %v3397
    %v3417 = vsel %vm239, %v3409, %v3395
    %v3418 = vmul.f32 %v3416, %v253
    %v3419 = vmul.f32 %v3415, %v253
    %v3420 = vmul.f32 %v3414, %v253
    %v3421 = vmul.f32 %v3413, %v253
    %v3422 = vmul.f32 %v3412, %v253
    %v3423 = vmul.f32 %v3411, %v253
    %v3424 = vmul.f32 %v3410, %v253
    %v3425 = vmul.f32 %v3417, %v253
    %3426 = vrot.lane.b32.xlu0 %v3314, 124
    %v3427 = vpop.permute.xlu0 %3426
    %3428 = vrot.lane.b32.xlu0 %v3315, 124
    %v3429 = vpop.permute.xlu0 %3428
    %3430 = vrot.lane.b32.xlu0 %v3316, 124
    %v3431 = vpop.permute.xlu0 %3430
    %3432 = vrot.lane.b32.xlu0 %v3317, 124
    %v3433 = vpop.permute.xlu0 %3432
    %3434 = vrot.lane.b32.xlu0 %v3318, 124
    %v3435 = vpop.permute.xlu0 %3434
    %3436 = vrot.lane.b32.xlu0 %v3319, 124
    %v3437 = vpop.permute.xlu0 %3436
    %3438 = vrot.lane.b32.xlu0 %v3320, 124
    %v3439 = vpop.permute.xlu0 %3438
    %3440 = vrot.lane.b32.xlu0 %v3321, 124
    %v3441 = vpop.permute.xlu0 %3440
    %vm3442 = vcmp.lt.s32.totalorder %v61, 124
    %v3443 = vsel %vm3442, %v3439, %v3441
    %v3444 = vsel %vm3442, %v3437, %v3439
    %v3445 = vsel %vm3442, %v3435, %v3437
    %v3446 = vsel %vm3442, %v3433, %v3435
    %v3447 = vsel %vm3442, %v3431, %v3433
    %v3448 = vsel %vm3442, %v3429, %v3431
    %v3449 = vsel %vm3442, %v3427, %v3429
    %v3450 = vsel %vm3442, %v3441, %v3427
    %v3451 = vsel %vm3442, 1, 0
    %v3452 = vcvt.s32.f32 %v3451
    %v3453 = vlaneseq
    %v3454 = vshrl.u32 %v3453, 7
    %v3455 = vsub.s32 0, %v3454
    %v3456 = vrot.slane %v3452, %v3455
    %v3457 = vmul.f32 %v3449, %v3456
    %v3458 = vmul.f32 %v3448, %v3456
    %v3459 = vmul.f32 %v3447, %v3456
    %v3460 = vmul.f32 %v3446, %v3456
    %v3461 = vmul.f32 %v3445, %v3456
    %v3462 = vmul.f32 %v3444, %v3456
    %v3463 = vmul.f32 %v3443, %v3456
    %v3464 = vmul.f32 %v3450, %v3456
    %v3465 = vpack.c.bf16 %v3386, %v3354
    %v3466 = vpack.c.bf16 %v3387, %v3355
    %v3467 = vpack.c.bf16 %v3388, %v3356
    %v3468 = vpack.c.bf16 %v3389, %v3357
    %v3469 = vpack.c.bf16 %v3390, %v3358
    %v3470 = vpack.c.bf16 %v3391, %v3359
    %v3471 = vpack.c.bf16 %v3392, %v3360
    %v3472 = vpack.c.bf16 %v3393, %v3361
    %v3473 = vpack.c.bf16 %v3418, %v3314
    %v3474 = vpack.c.bf16 %v3419, %v3315
    %v3475 = vpack.c.bf16 %v3420, %v3316
    %v3476 = vpack.c.bf16 %v3421, %v3317
    %v3477 = vpack.c.bf16 %v3422, %v3318
    %v3478 = vpack.c.bf16 %v3423, %v3319
    %v3479 = vpack.c.bf16 %v3424, %v3320
    %v3480 = vpack.c.bf16 %v3425, %v3321
    %v3481 = vpack.c.bf16 %v3457, %v3457
    %v3482 = vpack.c.bf16 %v3458, %v3458
    %v3483 = vpack.c.bf16 %v3459, %v3459
    %v3484 = vpack.c.bf16 %v3460, %v3460
    %v3485 = vpack.c.bf16 %v3461, %v3461
    %v3486 = vpack.c.bf16 %v3462, %v3462
    %v3487 = vpack.c.bf16 %v3463, %v3463
    %v3488 = vpack.c.bf16 %v3464, %v3464
    %s3489 = scalar_lea.vmem [#allocation5], 40
    %v3490 = vld [vmem:[%s3489] sm:$0xf]
    %v3491 = vld [vmem:[%s3489 + $0x4] sm:$0xf]
    %s3492 = scalar_lea.vmem %s3, 112
    %v3493 = vld [vmem:[%s3492] sm:$0xff]
    %v3494 = vld [vmem:[%s3492 + $0x8] sm:$0xff]
    %3496 = vset.pattern.permute.xlu0 0
    %3497 = vperm.xlu0 %3496, %v3493
    %v3498 = vpop.permute.xlu0 %3497
    %3501 = vset.pattern.permute.xlu0 0
    %3502 = vperm.xlu0 %3501, %v3494
    %v3503 = vpop.permute.xlu0 %3502
    %v3507 = vunpack.c.l.b16 %v3490
    %v3508 = vunpack.c.l.b16 %v3491
    %v3509 = vpack.c.b16 %v3508, %v3507
    %v3511 = vsel %vm304, %v3509, 0
    %v3514 = vsel %vm308, %v3481, 0
    %v3517 = vsel %vm308, %v3482, 0
    %v3520 = vsel %vm308, %v3483, 0
    %v3523 = vsel %vm308, %v3484, 0
    %v3526 = vsel %vm308, %v3485, 0
    %v3529 = vsel %vm308, %v3486, 0
    %v3532 = vsel %vm308, %v3487, 0
    %v3535 = vsel %vm308, %v3488, 0
    %3537 = vmatprep.subr.bf16.mxu0 0
    %3538 = vmatpush1.bf16.msra.mxu0 0
    %3539 = vmatprep.subr.bf16.mxu0 0
    %3540 = vmatpush1.bf16.msra.mxu0 0
    %3541 = vmatprep.subr.bf16.mxu0 0
    %3542 = vmatpush1.bf16.msra.mxu0 0
    %3543 = vmatprep.subr.bf16.mxu0 0
    %3544 = vmatpush1.bf16.msra.mxu0 0
    %3545 = vmatprep.subr.bf16.mxu0 0
    %3546 = vmatpush1.bf16.msra.mxu0 0
    %3547 = vmatprep.subr.bf16.mxu0 %v3517
    %3548 = vmatpush1.bf16.msra.mxu0 %v3514
    %3549 = vmatprep.subr.bf16.mxu0 %v3474
    %3550 = vmatpush1.bf16.msra.mxu0 %v3473
    %3551 = vmatprep.subr.bf16.mxu0 %v3466
    %3552 = vmatpush1.bf16.msra.mxu0 %v3465
    %3553 = vmatprep.subr.bf16.mxu0 0
    %3554 = vmatpush2.bf16.msra.mxu0 0
    %3555 = vmatprep.subr.bf16.mxu0 0
    %3556 = vmatpush2.bf16.msra.mxu0 0
    %3557 = vmatprep.subr.bf16.mxu0 0
    %3558 = vmatpush2.bf16.msra.mxu0 0
    %3559 = vmatprep.subr.bf16.mxu0 0
    %3560 = vmatpush2.bf16.msra.mxu0 0
    %3561 = vmatprep.subr.bf16.mxu0 0
    %3562 = vmatpush2.bf16.msra.mxu0 0
    %3563 = vmatprep.subr.bf16.mxu0 0
    %3564 = vmatpush2.bf16.msra.mxu0 0
    %3565 = vmatprep.subr.bf16.mxu0 0
    %3566 = vmatpush2.bf16.msra.mxu0 0
    %3567 = vmatprep.subr.bf16.mxu0 0
    %3568 = vmatpush2.bf16.msra.mxu0 0
    %3569 = vmatprep.mubr.bf16.mxu0 0
    %3570 = vmatmul.mubr.bf16.gmra.mxu0 %v3511
    %v3571 = vpop.f32.mrf.mxu0
    %v3572 = vadd.f32 %v3498, %v3571
    %v3573 = vpop.f32.mrf.mxu0
    %v3574 = vadd.f32 %v3498, %v3573
    %v3575 = vpop.f32.mrf.mxu0
    %v3576 = vadd.f32 %v3503, %v3575
    %v3577 = vpop.f32.mrf.mxu0
    %v3578 = vadd.f32 %v3503, %v3577
    %3579 = vdwg.mxu0
    %3580 = vmatprep.subr.bf16.mxu0 0
    %3581 = vmatpush1.bf16.msra.mxu0 0
    %3582 = vmatprep.subr.bf16.mxu0 0
    %3583 = vmatpush1.bf16.msra.mxu0 0
    %3584 = vmatprep.subr.bf16.mxu0 0
    %3585 = vmatpush1.bf16.msra.mxu0 0
    %3586 = vmatprep.subr.bf16.mxu0 0
    %3587 = vmatpush1.bf16.msra.mxu0 0
    %3588 = vmatprep.subr.bf16.mxu0 0
    %3589 = vmatpush1.bf16.msra.mxu0 0
    %3590 = vmatprep.subr.bf16.mxu0 %v3523
    %3591 = vmatpush1.bf16.msra.mxu0 %v3520
    %3592 = vmatprep.subr.bf16.mxu0 %v3476
    %3593 = vmatpush1.bf16.msra.mxu0 %v3475
    %3594 = vmatprep.subr.bf16.mxu0 %v3468
    %3595 = vmatpush1.bf16.msra.mxu0 %v3467
    %3596 = vmatprep.subr.bf16.mxu0 0
    %3597 = vmatpush2.bf16.msra.mxu0 0
    %3598 = vmatprep.subr.bf16.mxu0 0
    %3599 = vmatpush2.bf16.msra.mxu0 0
    %3600 = vmatprep.subr.bf16.mxu0 0
    %3601 = vmatpush2.bf16.msra.mxu0 0
    %3602 = vmatprep.subr.bf16.mxu0 0
    %3603 = vmatpush2.bf16.msra.mxu0 0
    %3604 = vmatprep.subr.bf16.mxu0 0
    %3605 = vmatpush2.bf16.msra.mxu0 0
    %3606 = vmatprep.subr.bf16.mxu0 0
    %3607 = vmatpush2.bf16.msra.mxu0 0
    %3608 = vmatprep.subr.bf16.mxu0 0
    %3609 = vmatpush2.bf16.msra.mxu0 0
    %3610 = vmatprep.subr.bf16.mxu0 0
    %3611 = vmatpush2.bf16.msra.mxu0 0
    %3612 = vmatprep.mubr.bf16.mxu0 0
    %3613 = vmatmul.mubr.bf16.gmra.mxu0 %v3511
    %v3614 = vpop.f32.mrf.mxu0
    %v3615 = vadd.f32 %v3498, %v3614
    %v3616 = vpop.f32.mrf.mxu0
    %v3617 = vadd.f32 %v3498, %v3616
    %v3618 = vpop.f32.mrf.mxu0
    %v3619 = vadd.f32 %v3503, %v3618
    %v3620 = vpop.f32.mrf.mxu0
    %v3621 = vadd.f32 %v3503, %v3620
    %3622 = vdwg.mxu0
    %3623 = vmatprep.subr.bf16.mxu0 0
    %3624 = vmatpush1.bf16.msra.mxu0 0
    %3625 = vmatprep.subr.bf16.mxu0 0
    %3626 = vmatpush1.bf16.msra.mxu0 0
    %3627 = vmatprep.subr.bf16.mxu0 0
    %3628 = vmatpush1.bf16.msra.mxu0 0
    %3629 = vmatprep.subr.bf16.mxu0 0
    %3630 = vmatpush1.bf16.msra.mxu0 0
    %3631 = vmatprep.subr.bf16.mxu0 0
    %3632 = vmatpush1.bf16.msra.mxu0 0
    %3633 = vmatprep.subr.bf16.mxu0 %v3529
    %3634 = vmatpush1.bf16.msra.mxu0 %v3526
    %3635 = vmatprep.subr.bf16.mxu0 %v3478
    %3636 = vmatpush1.bf16.msra.mxu0 %v3477
    %3637 = vmatprep.subr.bf16.mxu0 %v3470
    %3638 = vmatpush1.bf16.msra.mxu0 %v3469
    %3639 = vmatprep.subr.bf16.mxu0 0
    %3640 = vmatpush2.bf16.msra.mxu0 0
    %3641 = vmatprep.subr.bf16.mxu0 0
    %3642 = vmatpush2.bf16.msra.mxu0 0
    %3643 = vmatprep.subr.bf16.mxu0 0
    %3644 = vmatpush2.bf16.msra.mxu0 0
    %3645 = vmatprep.subr.bf16.mxu0 0
    %3646 = vmatpush2.bf16.msra.mxu0 0
    %3647 = vmatprep.subr.bf16.mxu0 0
    %3648 = vmatpush2.bf16.msra.mxu0 0
    %3649 = vmatprep.subr.bf16.mxu0 0
    %3650 = vmatpush2.bf16.msra.mxu0 0
    %3651 = vmatprep.subr.bf16.mxu0 0
    %3652 = vmatpush2.bf16.msra.mxu0 0
    %3653 = vmatprep.subr.bf16.mxu0 0
    %3654 = vmatpush2.bf16.msra.mxu0 0
    %3655 = vmatprep.mubr.bf16.mxu0 0
    %3656 = vmatmul.mubr.bf16.gmra.mxu0 %v3511
    %v3657 = vpop.f32.mrf.mxu0
    %v3658 = vadd.f32 %v3498, %v3657
    %v3659 = vpop.f32.mrf.mxu0
    %v3660 = vadd.f32 %v3498, %v3659
    %v3661 = vpop.f32.mrf.mxu0
    %v3662 = vadd.f32 %v3503, %v3661
    %v3663 = vpop.f32.mrf.mxu0
    %v3664 = vadd.f32 %v3503, %v3663
    %3665 = vdwg.mxu0
    %3666 = vmatprep.subr.bf16.mxu0 0
    %3667 = vmatpush1.bf16.msra.mxu0 0
    %3668 = vmatprep.subr.bf16.mxu0 0
    %3669 = vmatpush1.bf16.msra.mxu0 0
    %3670 = vmatprep.subr.bf16.mxu0 0
    %3671 = vmatpush1.bf16.msra.mxu0 0
    %3672 = vmatprep.subr.bf16.mxu0 0
    %3673 = vmatpush1.bf16.msra.mxu0 0
    %3674 = vmatprep.subr.bf16.mxu0 0
    %3675 = vmatpush1.bf16.msra.mxu0 0
    %3676 = vmatprep.subr.bf16.mxu0 %v3535
    %3677 = vmatpush1.bf16.msra.mxu0 %v3532
    %3678 = vmatprep.subr.bf16.mxu0 %v3480
    %3679 = vmatpush1.bf16.msra.mxu0 %v3479
    %3680 = vmatprep.subr.bf16.mxu0 %v3472
    %3681 = vmatpush1.bf16.msra.mxu0 %v3471
    %3682 = vmatprep.subr.bf16.mxu0 0
    %3683 = vmatpush2.bf16.msra.mxu0 0
    %3684 = vmatprep.subr.bf16.mxu0 0
    %3685 = vmatpush2.bf16.msra.mxu0 0
    %3686 = vmatprep.subr.bf16.mxu0 0
    %3687 = vmatpush2.bf16.msra.mxu0 0
    %3688 = vmatprep.subr.bf16.mxu0 0
    %3689 = vmatpush2.bf16.msra.mxu0 0
    %3690 = vmatprep.subr.bf16.mxu0 0
    %3691 = vmatpush2.bf16.msra.mxu0 0
    %3692 = vmatprep.subr.bf16.mxu0 0
    %3693 = vmatpush2.bf16.msra.mxu0 0
    %3694 = vmatprep.subr.bf16.mxu0 0
    %3695 = vmatpush2.bf16.msra.mxu0 0
    %3696 = vmatprep.subr.bf16.mxu0 0
    %3697 = vmatpush2.bf16.msra.mxu0 0
    %3698 = vmatprep.mubr.bf16.mxu0 0
    %3699 = vmatmul.mubr.bf16.gmra.mxu0 %v3511
    %v3700 = vpop.f32.mrf.mxu0
    %v3701 = vadd.f32 %v3498, %v3700
    %v3702 = vpop.f32.mrf.mxu0
    %v3703 = vadd.f32 %v3498, %v3702
    %v3704 = vpop.f32.mrf.mxu0
    %v3705 = vadd.f32 %v3503, %v3704
    %v3706 = vpop.f32.mrf.mxu0
    %v3707 = vadd.f32 %v3503, %v3706
    %3708 = vdwg.mxu0
    %v3709 = vmax.f32 %v3572, 0.0
    %v3710 = vmax.f32 %v3574, 0.0
    %v3711 = vmax.f32 %v3615, 0.0
    %v3712 = vmax.f32 %v3617, 0.0
    %v3713 = vmax.f32 %v3658, 0.0
    %v3714 = vmax.f32 %v3660, 0.0
    %v3715 = vmax.f32 %v3701, 0.0
    %v3716 = vmax.f32 %v3703, 0.0
    %v3717 = vmax.f32 %v3576, 0.0
    %v3718 = vmax.f32 %v3578, 0.0
    %v3719 = vmax.f32 %v3619, 0.0
    %v3720 = vmax.f32 %v3621, 0.0
    %v3721 = vmax.f32 %v3662, 0.0
    %v3722 = vmax.f32 %v3664, 0.0
    %v3723 = vmax.f32 %v3705, 0.0
    %v3724 = vmax.f32 %v3707, 0.0
    %3725 = vrot.lane.b32.xlu0 %v3709, 126
    %v3726 = vpop.permute.xlu0 %3725
    %3727 = vrot.lane.b32.xlu0 %v3717, 126
    %v3728 = vpop.permute.xlu0 %3727
    %3729 = vrot.lane.b32.xlu0 %v3710, 126
    %v3730 = vpop.permute.xlu0 %3729
    %3731 = vrot.lane.b32.xlu0 %v3718, 126
    %v3732 = vpop.permute.xlu0 %3731
    %3733 = vrot.lane.b32.xlu0 %v3711, 126
    %v3734 = vpop.permute.xlu0 %3733
    %3735 = vrot.lane.b32.xlu0 %v3719, 126
    %v3736 = vpop.permute.xlu0 %3735
    %3737 = vrot.lane.b32.xlu0 %v3712, 126
    %v3738 = vpop.permute.xlu0 %3737
    %3739 = vrot.lane.b32.xlu0 %v3720, 126
    %v3740 = vpop.permute.xlu0 %3739
    %3741 = vrot.lane.b32.xlu0 %v3713, 126
    %v3742 = vpop.permute.xlu0 %3741
    %3743 = vrot.lane.b32.xlu0 %v3721, 126
    %v3744 = vpop.permute.xlu0 %3743
    %3745 = vrot.lane.b32.xlu0 %v3714, 126
    %v3746 = vpop.permute.xlu0 %3745
    %3747 = vrot.lane.b32.xlu0 %v3722, 126
    %v3748 = vpop.permute.xlu0 %3747
    %3749 = vrot.lane.b32.xlu0 %v3715, 126
    %v3750 = vpop.permute.xlu0 %3749
    %3751 = vrot.lane.b32.xlu0 %v3723, 126
    %v3752 = vpop.permute.xlu0 %3751
    %3753 = vrot.lane.b32.xlu0 %v3716, 126
    %v3754 = vpop.permute.xlu0 %3753
    %3755 = vrot.lane.b32.xlu0 %v3724, 126
    %v3756 = vpop.permute.xlu0 %3755
    %v3757 = vsel %vm239, %v3750, %v3754
    %v3758 = vsel %vm239, %v3752, %v3756
    %v3759 = vsel %vm239, %v3746, %v3750
    %v3760 = vsel %vm239, %v3748, %v3752
    %v3761 = vsel %vm239, %v3742, %v3746
    %v3762 = vsel %vm239, %v3744, %v3748
    %v3763 = vsel %vm239, %v3738, %v3742
    %v3764 = vsel %vm239, %v3740, %v3744
    %v3765 = vsel %vm239, %v3734, %v3738
    %v3766 = vsel %vm239, %v3736, %v3740
    %v3767 = vsel %vm239, %v3730, %v3734
    %v3768 = vsel %vm239, %v3732, %v3736
    %v3769 = vsel %vm239, %v3726, %v3730
    %v3770 = vsel %vm239, %v3728, %v3732
    %v3771 = vsel %vm239, %v3754, %v3726
    %v3772 = vsel %vm239, %v3756, %v3728
    %v3773 = vadd.f32 %v3709, %v3769
    %v3774 = vadd.f32 %v3710, %v3767
    %v3775 = vadd.f32 %v3711, %v3765
    %v3776 = vadd.f32 %v3712, %v3763
    %v3777 = vadd.f32 %v3713, %v3761
    %v3778 = vadd.f32 %v3714, %v3759
    %v3779 = vadd.f32 %v3715, %v3757
    %v3780 = vadd.f32 %v3716, %v3771
    %v3781 = vadd.f32 %v3717, %v3770
    %v3782 = vadd.f32 %v3718, %v3768
    %v3783 = vadd.f32 %v3719, %v3766
    %v3784 = vadd.f32 %v3720, %v3764
    %v3785 = vadd.f32 %v3721, %v3762
    %v3786 = vadd.f32 %v3722, %v3760
    %v3787 = vadd.f32 %v3723, %v3758
    %v3788 = vadd.f32 %v3724, %v3772
    %v3789 = vmul.f32 %v3773, 0.5
    %v3790 = vmul.f32 %v3774, 0.5
    %v3791 = vmul.f32 %v3775, 0.5
    %v3792 = vmul.f32 %v3776, 0.5
    %v3793 = vmul.f32 %v3777, 0.5
    %v3794 = vmul.f32 %v3778, 0.5
    %v3795 = vmul.f32 %v3779, 0.5
    %v3796 = vmul.f32 %v3780, 0.5
    %v3797 = vmul.f32 %v3781, 0.5
    %v3798 = vmul.f32 %v3782, 0.5
    %v3799 = vmul.f32 %v3783, 0.5
    %v3800 = vmul.f32 %v3784, 0.5
    %v3801 = vmul.f32 %v3785, 0.5
    %v3802 = vmul.f32 %v3786, 0.5
    %v3803 = vmul.f32 %v3787, 0.5
    %v3804 = vmul.f32 %v3788, 0.5
    %3805 = vrot.lane.b32.xlu0 %v3789, 8
    %v3806 = vpop.permute.xlu0 %3805
    %3807 = vrot.lane.b32.xlu0 %v3797, 8
    %v3808 = vpop.permute.xlu0 %3807
    %3809 = vrot.lane.b32.xlu0 %v3790, 8
    %v3810 = vpop.permute.xlu0 %3809
    %3811 = vrot.lane.b32.xlu0 %v3798, 8
    %v3812 = vpop.permute.xlu0 %3811
    %3813 = vrot.lane.b32.xlu0 %v3791, 8
    %v3814 = vpop.permute.xlu0 %3813
    %3815 = vrot.lane.b32.xlu0 %v3799, 8
    %v3816 = vpop.permute.xlu0 %3815
    %3817 = vrot.lane.b32.xlu0 %v3792, 8
    %v3818 = vpop.permute.xlu0 %3817
    %3819 = vrot.lane.b32.xlu0 %v3800, 8
    %v3820 = vpop.permute.xlu0 %3819
    %3821 = vrot.lane.b32.xlu0 %v3793, 8
    %v3822 = vpop.permute.xlu0 %3821
    %3823 = vrot.lane.b32.xlu0 %v3801, 8
    %v3824 = vpop.permute.xlu0 %3823
    %3825 = vrot.lane.b32.xlu0 %v3794, 8
    %v3826 = vpop.permute.xlu0 %3825
    %3827 = vrot.lane.b32.xlu0 %v3802, 8
    %v3828 = vpop.permute.xlu0 %3827
    %3829 = vrot.lane.b32.xlu0 %v3795, 8
    %v3830 = vpop.permute.xlu0 %3829
    %3831 = vrot.lane.b32.xlu0 %v3803, 8
    %v3832 = vpop.permute.xlu0 %3831
    %3833 = vrot.lane.b32.xlu0 %v3796, 8
    %v3834 = vpop.permute.xlu0 %3833
    %3835 = vrot.lane.b32.xlu0 %v3804, 8
    %v3836 = vpop.permute.xlu0 %3835
    %vm3837 = vcmp.lt.s32.totalorder %v61, 8
    %v3838 = vsel %vm3837, %v3830, %v3834
    %v3839 = vsel %vm3837, %v3832, %v3836
    %v3840 = vsel %vm3837, %v3826, %v3830
    %v3841 = vsel %vm3837, %v3828, %v3832
    %v3842 = vsel %vm3837, %v3822, %v3826
    %v3843 = vsel %vm3837, %v3824, %v3828
    %v3844 = vsel %vm3837, %v3818, %v3822
    %v3845 = vsel %vm3837, %v3820, %v3824
    %v3846 = vsel %vm3837, %v3814, %v3818
    %v3847 = vsel %vm3837, %v3816, %v3820
    %v3848 = vsel %vm3837, %v3810, %v3814
    %v3849 = vsel %vm3837, %v3812, %v3816
    %v3850 = vsel %vm3837, %v3806, %v3810
    %v3851 = vsel %vm3837, %v3808, %v3812
    %v3852 = vsel %vm3837, %v3834, %v3806
    %v3853 = vsel %vm3837, %v3836, %v3808
    %vm3854 = vcmp.ge.s32.totalorder %v61, 8
    %v3855 = vsel %vm3854, 1, 0
    %v3856 = vcvt.s32.f32 %v3855
    %v3857 = vlaneseq
    %v3858 = vshrl.u32 %v3857, 7
    %v3859 = vsub.s32 0, %v3858
    %v3860 = vrot.slane %v3856, %v3859
    %v3861 = vmul.f32 %v3852, %v3860
    %v3862 = vmul.f32 %v3850, %v3860
    %v3863 = vmul.f32 %v3848, %v3860
    %v3864 = vmul.f32 %v3846, %v3860
    %v3865 = vmul.f32 %v3844, %v3860
    %v3866 = vmul.f32 %v3842, %v3860
    %v3867 = vmul.f32 %v3840, %v3860
    %v3868 = vmul.f32 %v3838, %v3860
    %v3869 = vmul.f32 %v3853, %v3860
    %v3870 = vmul.f32 %v3851, %v3860
    %v3871 = vmul.f32 %v3849, %v3860
    %v3872 = vmul.f32 %v3847, %v3860
    %v3873 = vmul.f32 %v3845, %v3860
    %v3874 = vmul.f32 %v3843, %v3860
    %v3875 = vmul.f32 %v3841, %v3860
    %v3876 = vmul.f32 %v3839, %v3860
    %3877 = vrot.lane.b32.xlu0 %v3789, 4
    %v3878 = vpop.permute.xlu0 %3877
    %3879 = vrot.lane.b32.xlu0 %v3797, 4
    %v3880 = vpop.permute.xlu0 %3879
    %3881 = vrot.lane.b32.xlu0 %v3790, 4
    %v3882 = vpop.permute.xlu0 %3881
    %3883 = vrot.lane.b32.xlu0 %v3798, 4
    %v3884 = vpop.permute.xlu0 %3883
    %3885 = vrot.lane.b32.xlu0 %v3791, 4
    %v3886 = vpop.permute.xlu0 %3885
    %3887 = vrot.lane.b32.xlu0 %v3799, 4
    %v3888 = vpop.permute.xlu0 %3887
    %3889 = vrot.lane.b32.xlu0 %v3792, 4
    %v3890 = vpop.permute.xlu0 %3889
    %3891 = vrot.lane.b32.xlu0 %v3800, 4
    %v3892 = vpop.permute.xlu0 %3891
    %3893 = vrot.lane.b32.xlu0 %v3793, 4
    %v3894 = vpop.permute.xlu0 %3893
    %3895 = vrot.lane.b32.xlu0 %v3801, 4
    %v3896 = vpop.permute.xlu0 %3895
    %3897 = vrot.lane.b32.xlu0 %v3794, 4
    %v3898 = vpop.permute.xlu0 %3897
    %3899 = vrot.lane.b32.xlu0 %v3802, 4
    %v3900 = vpop.permute.xlu0 %3899
    %3901 = vrot.lane.b32.xlu0 %v3795, 4
    %v3902 = vpop.permute.xlu0 %3901
    %3903 = vrot.lane.b32.xlu0 %v3803, 4
    %v3904 = vpop.permute.xlu0 %3903
    %3905 = vrot.lane.b32.xlu0 %v3796, 4
    %v3906 = vpop.permute.xlu0 %3905
    %3907 = vrot.lane.b32.xlu0 %v3804, 4
    %v3908 = vpop.permute.xlu0 %3907
    %v3909 = vsel %vm3338, %v3902, %v3906
    %v3910 = vsel %vm3338, %v3904, %v3908
    %v3911 = vsel %vm3338, %v3898, %v3902
    %v3912 = vsel %vm3338, %v3900, %v3904
    %v3913 = vsel %vm3338, %v3894, %v3898
    %v3914 = vsel %vm3338, %v3896, %v3900
    %v3915 = vsel %vm3338, %v3890, %v3894
    %v3916 = vsel %vm3338, %v3892, %v3896
    %v3917 = vsel %vm3338, %v3886, %v3890
    %v3918 = vsel %vm3338, %v3888, %v3892
    %v3919 = vsel %vm3338, %v3882, %v3886
    %v3920 = vsel %vm3338, %v3884, %v3888
    %v3921 = vsel %vm3338, %v3878, %v3882
    %v3922 = vsel %vm3338, %v3880, %v3884
    %v3923 = vsel %vm3338, %v3906, %v3878
    %v3924 = vsel %vm3338, %v3908, %v3880
    %v3925 = vmul.f32 %v3923, %v3353
    %v3926 = vmul.f32 %v3921, %v3353
    %v3927 = vmul.f32 %v3919, %v3353
    %v3928 = vmul.f32 %v3917, %v3353
    %v3929 = vmul.f32 %v3915, %v3353
    %v3930 = vmul.f32 %v3913, %v3353
    %v3931 = vmul.f32 %v3911, %v3353
    %v3932 = vmul.f32 %v3909, %v3353
    %v3933 = vmul.f32 %v3924, %v3353
    %v3934 = vmul.f32 %v3922, %v3353
    %v3935 = vmul.f32 %v3920, %v3353
    %v3936 = vmul.f32 %v3918, %v3353
    %v3937 = vmul.f32 %v3916, %v3353
    %v3938 = vmul.f32 %v3914, %v3353
    %v3939 = vmul.f32 %v3912, %v3353
    %v3940 = vmul.f32 %v3910, %v3353
    %3941 = vrot.lane.b32.xlu0 %v3789, 124
    %v3942 = vpop.permute.xlu0 %3941
    %3943 = vrot.lane.b32.xlu0 %v3797, 124
    %v3944 = vpop.permute.xlu0 %3943
    %3945 = vrot.lane.b32.xlu0 %v3790, 124
    %v3946 = vpop.permute.xlu0 %3945
    %3947 = vrot.lane.b32.xlu0 %v3798, 124
    %v3948 = vpop.permute.xlu0 %3947
    %3949 = vrot.lane.b32.xlu0 %v3791, 124
    %v3950 = vpop.permute.xlu0 %3949
    %3951 = vrot.lane.b32.xlu0 %v3799, 124
    %v3952 = vpop.permute.xlu0 %3951
    %3953 = vrot.lane.b32.xlu0 %v3792, 124
    %v3954 = vpop.permute.xlu0 %3953
    %3955 = vrot.lane.b32.xlu0 %v3800, 124
    %v3956 = vpop.permute.xlu0 %3955
    %3957 = vrot.lane.b32.xlu0 %v3793, 124
    %v3958 = vpop.permute.xlu0 %3957
    %3959 = vrot.lane.b32.xlu0 %v3801, 124
    %v3960 = vpop.permute.xlu0 %3959
    %3961 = vrot.lane.b32.xlu0 %v3794, 124
    %v3962 = vpop.permute.xlu0 %3961
    %3963 = vrot.lane.b32.xlu0 %v3802, 124
    %v3964 = vpop.permute.xlu0 %3963
    %3965 = vrot.lane.b32.xlu0 %v3795, 124
    %v3966 = vpop.permute.xlu0 %3965
    %3967 = vrot.lane.b32.xlu0 %v3803, 124
    %v3968 = vpop.permute.xlu0 %3967
    %3969 = vrot.lane.b32.xlu0 %v3796, 124
    %v3970 = vpop.permute.xlu0 %3969
    %3971 = vrot.lane.b32.xlu0 %v3804, 124
    %v3972 = vpop.permute.xlu0 %3971
    %v3973 = vsel %vm3442, %v3966, %v3970
    %v3974 = vsel %vm3442, %v3968, %v3972
    %v3975 = vsel %vm3442, %v3962, %v3966
    %v3976 = vsel %vm3442, %v3964, %v3968
    %v3977 = vsel %vm3442, %v3958, %v3962
    %v3978 = vsel %vm3442, %v3960, %v3964
    %v3979 = vsel %vm3442, %v3954, %v3958
    %v3980 = vsel %vm3442, %v3956, %v3960
    %v3981 = vsel %vm3442, %v3950, %v3954
    %v3982 = vsel %vm3442, %v3952, %v3956
    %v3983 = vsel %vm3442, %v3946, %v3950
    %v3984 = vsel %vm3442, %v3948, %v3952
    %v3985 = vsel %vm3442, %v3942, %v3946
    %v3986 = vsel %vm3442, %v3944, %v3948
    %v3987 = vsel %vm3442, %v3970, %v3942
    %v3988 = vsel %vm3442, %v3972, %v3944
    %v3989 = vmul.f32 %v3985, %v3456
    %v3990 = vmul.f32 %v3983, %v3456
    %v3991 = vmul.f32 %v3981, %v3456
    %v3992 = vmul.f32 %v3979, %v3456
    %v3993 = vmul.f32 %v3977, %v3456
    %v3994 = vmul.f32 %v3975, %v3456
    %v3995 = vmul.f32 %v3973, %v3456
    %v3996 = vmul.f32 %v3987, %v3456
    %v3997 = vmul.f32 %v3986, %v3456
    %v3998 = vmul.f32 %v3984, %v3456
    %v3999 = vmul.f32 %v3982, %v3456
    %v4000 = vmul.f32 %v3980, %v3456
    %v4001 = vmul.f32 %v3978, %v3456
    %v4002 = vmul.f32 %v3976, %v3456
    %v4003 = vmul.f32 %v3974, %v3456
    %v4004 = vmul.f32 %v3988, %v3456
    %4005 = vrot.lane.b32.xlu0 %v3789, 120
    %v4006 = vpop.permute.xlu0 %4005
    %4007 = vrot.lane.b32.xlu0 %v3797, 120
    %v4008 = vpop.permute.xlu0 %4007
    %4009 = vrot.lane.b32.xlu0 %v3790, 120
    %v4010 = vpop.permute.xlu0 %4009
    %4011 = vrot.lane.b32.xlu0 %v3798, 120
    %v4012 = vpop.permute.xlu0 %4011
    %4013 = vrot.lane.b32.xlu0 %v3791, 120
    %v4014 = vpop.permute.xlu0 %4013
    %4015 = vrot.lane.b32.xlu0 %v3799, 120
    %v4016 = vpop.permute.xlu0 %4015
    %4017 = vrot.lane.b32.xlu0 %v3792, 120
    %v4018 = vpop.permute.xlu0 %4017
    %4019 = vrot.lane.b32.xlu0 %v3800, 120
    %v4020 = vpop.permute.xlu0 %4019
    %4021 = vrot.lane.b32.xlu0 %v3793, 120
    %v4022 = vpop.permute.xlu0 %4021
    %4023 = vrot.lane.b32.xlu0 %v3801, 120
    %v4024 = vpop.permute.xlu0 %4023
    %4025 = vrot.lane.b32.xlu0 %v3794, 120
    %v4026 = vpop.permute.xlu0 %4025
    %4027 = vrot.lane.b32.xlu0 %v3802, 120
    %v4028 = vpop.permute.xlu0 %4027
    %4029 = vrot.lane.b32.xlu0 %v3795, 120
    %v4030 = vpop.permute.xlu0 %4029
    %4031 = vrot.lane.b32.xlu0 %v3803, 120
    %v4032 = vpop.permute.xlu0 %4031
    %4033 = vrot.lane.b32.xlu0 %v3796, 120
    %v4034 = vpop.permute.xlu0 %4033
    %4035 = vrot.lane.b32.xlu0 %v3804, 120
    %v4036 = vpop.permute.xlu0 %4035
    %vm4037 = vcmp.lt.s32.totalorder %v61, 120
    %v4038 = vsel %vm4037, %v4030, %v4034
    %v4039 = vsel %vm4037, %v4032, %v4036
    %v4040 = vsel %vm4037, %v4026, %v4030
    %v4041 = vsel %vm4037, %v4028, %v4032
    %v4042 = vsel %vm4037, %v4022, %v4026
    %v4043 = vsel %vm4037, %v4024, %v4028
    %v4044 = vsel %vm4037, %v4018, %v4022
    %v4045 = vsel %vm4037, %v4020, %v4024
    %v4046 = vsel %vm4037, %v4014, %v4018
    %v4047 = vsel %vm4037, %v4016, %v4020
    %v4048 = vsel %vm4037, %v4010, %v4014
    %v4049 = vsel %vm4037, %v4012, %v4016
    %v4050 = vsel %vm4037, %v4006, %v4010
    %v4051 = vsel %vm4037, %v4008, %v4012
    %v4052 = vsel %vm4037, %v4034, %v4006
    %v4053 = vsel %vm4037, %v4036, %v4008
    %v4054 = vsel %vm4037, 1, 0
    %v4055 = vcvt.s32.f32 %v4054
    %v4056 = vlaneseq
    %v4057 = vshrl.u32 %v4056, 7
    %v4058 = vsub.s32 0, %v4057
    %v4059 = vrot.slane %v4055, %v4058
    %v4060 = vmul.f32 %v4050, %v4059
    %v4061 = vmul.f32 %v4048, %v4059
    %v4062 = vmul.f32 %v4046, %v4059
    %v4063 = vmul.f32 %v4044, %v4059
    %v4064 = vmul.f32 %v4042, %v4059
    %v4065 = vmul.f32 %v4040, %v4059
    %v4066 = vmul.f32 %v4038, %v4059
    %v4067 = vmul.f32 %v4052, %v4059
    %v4068 = vmul.f32 %v4051, %v4059
    %v4069 = vmul.f32 %v4049, %v4059
    %v4070 = vmul.f32 %v4047, %v4059
    %v4071 = vmul.f32 %v4045, %v4059
    %v4072 = vmul.f32 %v4043, %v4059
    %v4073 = vmul.f32 %v4041, %v4059
    %v4074 = vmul.f32 %v4039, %v4059
    %v4075 = vmul.f32 %v4053, %v4059
    %v4076 = vpack.c.bf16 %v3869, %v3861
    %v4077 = vpack.c.bf16 %v3870, %v3862
    %v4078 = vpack.c.bf16 %v3871, %v3863
    %v4079 = vpack.c.bf16 %v3872, %v3864
    %v4080 = vpack.c.bf16 %v3873, %v3865
    %v4081 = vpack.c.bf16 %v3874, %v3866
    %v4082 = vpack.c.bf16 %v3875, %v3867
    %v4083 = vpack.c.bf16 %v3876, %v3868
    %v4084 = vpack.c.bf16 %v3933, %v3925
    %v4085 = vpack.c.bf16 %v3934, %v3926
    %v4086 = vpack.c.bf16 %v3935, %v3927
    %v4087 = vpack.c.bf16 %v3936, %v3928
    %v4088 = vpack.c.bf16 %v3937, %v3929
    %v4089 = vpack.c.bf16 %v3938, %v3930
    %v4090 = vpack.c.bf16 %v3939, %v3931
    %v4091 = vpack.c.bf16 %v3940, %v3932
    %v4092 = vpack.c.bf16 %v3797, %v3789
    %v4093 = vpack.c.bf16 %v3798, %v3790
    %v4094 = vpack.c.bf16 %v3799, %v3791
    %v4095 = vpack.c.bf16 %v3800, %v3792
    %v4096 = vpack.c.bf16 %v3801, %v3793
    %v4097 = vpack.c.bf16 %v3802, %v3794
    %v4098 = vpack.c.bf16 %v3803, %v3795
    %v4099 = vpack.c.bf16 %v3804, %v3796
    %v4100 = vpack.c.bf16 %v3997, %v3989
    %v4101 = vpack.c.bf16 %v3998, %v3990
    %v4102 = vpack.c.bf16 %v3999, %v3991
    %v4103 = vpack.c.bf16 %v4000, %v3992
    %v4104 = vpack.c.bf16 %v4001, %v3993
    %v4105 = vpack.c.bf16 %v4002, %v3994
    %v4106 = vpack.c.bf16 %v4003, %v3995
    %v4107 = vpack.c.bf16 %v4004, %v3996
    %v4108 = vpack.c.bf16 %v4068, %v4060
    %v4109 = vpack.c.bf16 %v4069, %v4061
    %v4110 = vpack.c.bf16 %v4070, %v4062
    %v4111 = vpack.c.bf16 %v4071, %v4063
    %v4112 = vpack.c.bf16 %v4072, %v4064
    %v4113 = vpack.c.bf16 %v4073, %v4065
    %v4114 = vpack.c.bf16 %v4074, %v4066
    %v4115 = vpack.c.bf16 %v4075, %v4067
    %s4116 = scalar_lea.vmem %s2, 16
    %v4117 = vld [vmem:[%s4116] sm:$0xf]
    %v4118 = vld [vmem:[%s4116 + $0x4] sm:$0xf]
    %s4119 = scalar_lea.vmem %s3, 128
    %v4120 = vld [vmem:[%s4119] sm:$0xff]
    %v4121 = vld [vmem:[%s4119 + $0x8] sm:$0xff]
    %4123 = vset.pattern.permute.xlu0 0
    %4124 = vperm.xlu0 %4123, %v4120
    %v4125 = vpop.permute.xlu0 %4124
    %4128 = vset.pattern.permute.xlu0 0
    %4129 = vperm.xlu0 %4128, %v4121
    %v4130 = vpop.permute.xlu0 %4129
    %v4133 = vunpack.c.l.b16 %v4117
    %v4134 = vunpack.c.l.b16 %v4118
    %v4135 = vpack.c.b16 %v4134, %v4133
    %v4137 = vsel %vm1208, %v4135, 0
    %4139 = vmatprep.subr.bf16.mxu0 0
    %4140 = vmatpush1.bf16.msra.mxu0 0
    %4141 = vmatprep.subr.bf16.mxu0 0
    %4142 = vmatpush1.bf16.msra.mxu0 0
    %4143 = vmatprep.subr.bf16.mxu0 0
    %4144 = vmatpush1.bf16.msra.mxu0 0
    %4145 = vmatprep.subr.bf16.mxu0 %v4109
    %4146 = vmatpush1.bf16.msra.mxu0 %v4108
    %4147 = vmatprep.subr.bf16.mxu0 %v4101
    %4148 = vmatpush1.bf16.msra.mxu0 %v4100
    %4149 = vmatprep.subr.bf16.mxu0 %v4093
    %4150 = vmatpush1.bf16.msra.mxu0 %v4092
    %4151 = vmatprep.subr.bf16.mxu0 %v4085
    %4152 = vmatpush1.bf16.msra.mxu0 %v4084
    %4153 = vmatprep.subr.bf16.mxu0 %v4077
    %4154 = vmatpush1.bf16.msra.mxu0 %v4076
    %4155 = vmatprep.subr.bf16.mxu0 0
    %4156 = vmatpush2.bf16.msra.mxu0 0
    %4157 = vmatprep.subr.bf16.mxu0 0
    %4158 = vmatpush2.bf16.msra.mxu0 0
    %4159 = vmatprep.subr.bf16.mxu0 0
    %4160 = vmatpush2.bf16.msra.mxu0 0
    %4161 = vmatprep.subr.bf16.mxu0 0
    %4162 = vmatpush2.bf16.msra.mxu0 0
    %4163 = vmatprep.subr.bf16.mxu0 0
    %4164 = vmatpush2.bf16.msra.mxu0 0
    %4165 = vmatprep.subr.bf16.mxu0 0
    %4166 = vmatpush2.bf16.msra.mxu0 0
    %4167 = vmatprep.subr.bf16.mxu0 0
    %4168 = vmatpush2.bf16.msra.mxu0 0
    %4169 = vmatprep.subr.bf16.mxu0 0
    %4170 = vmatpush2.bf16.msra.mxu0 0
    %4171 = vmatprep.mubr.bf16.mxu0 0
    %4172 = vmatmul.mubr.bf16.gmra.mxu0 %v4137
    %v4173 = vpop.f32.mrf.mxu0
    %v4174 = vadd.f32 %v4125, %v4173
    %v4175 = vpop.f32.mrf.mxu0
    %v4176 = vadd.f32 %v4125, %v4175
    %v4177 = vpop.f32.mrf.mxu0
    %v4178 = vpop.f32.mrf.mxu0
    %4179 = vdwg.mxu0
    %4180 = vmatprep.subr.bf16.mxu0 0
    %4181 = vmatpush1.bf16.msra.mxu0 0
    %4182 = vmatprep.subr.bf16.mxu0 0
    %4183 = vmatpush1.bf16.msra.mxu0 0
    %4184 = vmatprep.subr.bf16.mxu0 0
    %4185 = vmatpush1.bf16.msra.mxu0 0
    %4186 = vmatprep.subr.bf16.mxu0 %v4111
    %4187 = vmatpush1.bf16.msra.mxu0 %v4110
    %4188 = vmatprep.subr.bf16.mxu0 %v4103
    %4189 = vmatpush1.bf16.msra.mxu0 %v4102
    %4190 = vmatprep.subr.bf16.mxu0 %v4095
    %4191 = vmatpush1.bf16.msra.mxu0 %v4094
    %4192 = vmatprep.subr.bf16.mxu0 %v4087
    %4193 = vmatpush1.bf16.msra.mxu0 %v4086
    %4194 = vmatprep.subr.bf16.mxu0 %v4079
    %4195 = vmatpush1.bf16.msra.mxu0 %v4078
    %4196 = vmatprep.subr.bf16.mxu0 0
    %4197 = vmatpush2.bf16.msra.mxu0 0
    %4198 = vmatprep.subr.bf16.mxu0 0
    %4199 = vmatpush2.bf16.msra.mxu0 0
    %4200 = vmatprep.subr.bf16.mxu0 0
    %4201 = vmatpush2.bf16.msra.mxu0 0
    %4202 = vmatprep.subr.bf16.mxu0 0
    %4203 = vmatpush2.bf16.msra.mxu0 0
    %4204 = vmatprep.subr.bf16.mxu0 0
    %4205 = vmatpush2.bf16.msra.mxu0 0
    %4206 = vmatprep.subr.bf16.mxu0 0
    %4207 = vmatpush2.bf16.msra.mxu0 0
    %4208 = vmatprep.subr.bf16.mxu0 0
    %4209 = vmatpush2.bf16.msra.mxu0 0
    %4210 = vmatprep.subr.bf16.mxu0 0
    %4211 = vmatpush2.bf16.msra.mxu0 0
    %4212 = vmatprep.mubr.bf16.mxu0 0
    %4213 = vmatmul.mubr.bf16.gmra.mxu0 %v4137
    %v4214 = vpop.f32.mrf.mxu0
    %v4215 = vadd.f32 %v4125, %v4214
    %v4216 = vpop.f32.mrf.mxu0
    %v4217 = vadd.f32 %v4125, %v4216
    %v4218 = vpop.f32.mrf.mxu0
    %v4219 = vpop.f32.mrf.mxu0
    %4220 = vdwg.mxu0
    %4221 = vmatprep.subr.bf16.mxu0 0
    %4222 = vmatpush1.bf16.msra.mxu0 0
    %4223 = vmatprep.subr.bf16.mxu0 0
    %4224 = vmatpush1.bf16.msra.mxu0 0
    %4225 = vmatprep.subr.bf16.mxu0 0
    %4226 = vmatpush1.bf16.msra.mxu0 0
    %4227 = vmatprep.subr.bf16.mxu0 %v4113
    %4228 = vmatpush1.bf16.msra.mxu0 %v4112
    %4229 = vmatprep.subr.bf16.mxu0 %v4105
    %4230 = vmatpush1.bf16.msra.mxu0 %v4104
    %4231 = vmatprep.subr.bf16.mxu0 %v4097
    %4232 = vmatpush1.bf16.msra.mxu0 %v4096
    %4233 = vmatprep.subr.bf16.mxu0 %v4089
    %4234 = vmatpush1.bf16.msra.mxu0 %v4088
    %4235 = vmatprep.subr.bf16.mxu0 %v4081
    %4236 = vmatpush1.bf16.msra.mxu0 %v4080
    %4237 = vmatprep.subr.bf16.mxu0 0
    %4238 = vmatpush2.bf16.msra.mxu0 0
    %4239 = vmatprep.subr.bf16.mxu0 0
    %4240 = vmatpush2.bf16.msra.mxu0 0
    %4241 = vmatprep.subr.bf16.mxu0 0
    %4242 = vmatpush2.bf16.msra.mxu0 0
    %4243 = vmatprep.subr.bf16.mxu0 0
    %4244 = vmatpush2.bf16.msra.mxu0 0
    %4245 = vmatprep.subr.bf16.mxu0 0
    %4246 = vmatpush2.bf16.msra.mxu0 0
    %4247 = vmatprep.subr.bf16.mxu0 0
    %4248 = vmatpush2.bf16.msra.mxu0 0
    %4249 = vmatprep.subr.bf16.mxu0 0
    %4250 = vmatpush2.bf16.msra.mxu0 0
    %4251 = vmatprep.subr.bf16.mxu0 0
    %4252 = vmatpush2.bf16.msra.mxu0 0
    %4253 = vmatprep.mubr.bf16.mxu0 0
    %4254 = vmatmul.mubr.bf16.gmra.mxu0 %v4137
    %v4255 = vpop.f32.mrf.mxu0
    %v4256 = vadd.f32 %v4125, %v4255
    %v4257 = vpop.f32.mrf.mxu0
    %v4258 = vadd.f32 %v4125, %v4257
    %v4259 = vpop.f32.mrf.mxu0
    %v4260 = vpop.f32.mrf.mxu0
    %4261 = vdwg.mxu0
    %4262 = vmatprep.subr.bf16.mxu0 0
    %4263 = vmatpush1.bf16.msra.mxu0 0
    %4264 = vmatprep.subr.bf16.mxu0 0
    %4265 = vmatpush1.bf16.msra.mxu0 0
    %4266 = vmatprep.subr.bf16.mxu0 0
    %4267 = vmatpush1.bf16.msra.mxu0 0
    %4268 = vmatprep.subr.bf16.mxu0 %v4115
    %4269 = vmatpush1.bf16.msra.mxu0 %v4114
    %4270 = vmatprep.subr.bf16.mxu0 %v4107
    %4271 = vmatpush1.bf16.msra.mxu0 %v4106
    %4272 = vmatprep.subr.bf16.mxu0 %v4099
    %4273 = vmatpush1.bf16.msra.mxu0 %v4098
    %4274 = vmatprep.subr.bf16.mxu0 %v4091
    %4275 = vmatpush1.bf16.msra.mxu0 %v4090
    %4276 = vmatprep.subr.bf16.mxu0 %v4083
    %4277 = vmatpush1.bf16.msra.mxu0 %v4082
    %4278 = vmatprep.subr.bf16.mxu0 0
    %4279 = vmatpush2.bf16.msra.mxu0 0
    %4280 = vmatprep.subr.bf16.mxu0 0
    %4281 = vmatpush2.bf16.msra.mxu0 0
    %4282 = vmatprep.subr.bf16.mxu0 0
    %4283 = vmatpush2.bf16.msra.mxu0 0
    %4284 = vmatprep.subr.bf16.mxu0 0
    %4285 = vmatpush2.bf16.msra.mxu0 0
    %4286 = vmatprep.subr.bf16.mxu0 0
    %4287 = vmatpush2.bf16.msra.mxu0 0
    %4288 = vmatprep.subr.bf16.mxu0 0
    %4289 = vmatpush2.bf16.msra.mxu0 0
    %4290 = vmatprep.subr.bf16.mxu0 0
    %4291 = vmatpush2.bf16.msra.mxu0 0
    %4292 = vmatprep.subr.bf16.mxu0 0
    %4293 = vmatpush2.bf16.msra.mxu0 0
    %4294 = vmatprep.mubr.bf16.mxu0 0
    %4295 = vmatmul.mubr.bf16.gmra.mxu0 %v4137
    %v4296 = vpop.f32.mrf.mxu0
    %v4297 = vadd.f32 %v4125, %v4296
    %v4298 = vpop.f32.mrf.mxu0
    %v4299 = vadd.f32 %v4125, %v4298
    %v4300 = vpop.f32.mrf.mxu0
    %v4301 = vpop.f32.mrf.mxu0
    %4302 = vdwg.mxu0
    %v4303 = vmax.f32 %v4174, 0.0
    %v4304 = vmax.f32 %v4176, 0.0
    %v4305 = vmax.f32 %v4215, 0.0
    %v4306 = vmax.f32 %v4217, 0.0
    %v4307 = vmax.f32 %v4256, 0.0
    %v4308 = vmax.f32 %v4258, 0.0
    %v4309 = vmax.f32 %v4297, 0.0
    %v4310 = vmax.f32 %v4299, 0.0
    %4311 = vrot.lane.b32.xlu0 %v4303, 124
    %v4312 = vpop.permute.xlu0 %4311
    %4313 = vrot.lane.b32.xlu0 %v4304, 124
    %v4314 = vpop.permute.xlu0 %4313
    %4315 = vrot.lane.b32.xlu0 %v4305, 124
    %v4316 = vpop.permute.xlu0 %4315
    %4317 = vrot.lane.b32.xlu0 %v4306, 124
    %v4318 = vpop.permute.xlu0 %4317
    %4319 = vrot.lane.b32.xlu0 %v4307, 124
    %v4320 = vpop.permute.xlu0 %4319
    %4321 = vrot.lane.b32.xlu0 %v4308, 124
    %v4322 = vpop.permute.xlu0 %4321
    %4323 = vrot.lane.b32.xlu0 %v4309, 124
    %v4324 = vpop.permute.xlu0 %4323
    %4325 = vrot.lane.b32.xlu0 %v4310, 124
    %v4326 = vpop.permute.xlu0 %4325
    %v4327 = vsel %vm3442, %v4324, %v4326
    %v4328 = vsel %vm3442, %v4322, %v4324
    %v4329 = vsel %vm3442, %v4320, %v4322
    %v4330 = vsel %vm3442, %v4318, %v4320
    %v4331 = vsel %vm3442, %v4316, %v4318
    %v4332 = vsel %vm3442, %v4314, %v4316
    %v4333 = vsel %vm3442, %v4312, %v4314
    %v4334 = vsel %vm3442, %v4326, %v4312
    %v4335 = vadd.f32 %v4303, %v4333
    %v4336 = vadd.f32 %v4304, %v4332
    %v4337 = vadd.f32 %v4305, %v4331
    %v4338 = vadd.f32 %v4306, %v4330
    %v4339 = vadd.f32 %v4307, %v4329
    %v4340 = vadd.f32 %v4308, %v4328
    %v4341 = vadd.f32 %v4309, %v4327
    %v4342 = vadd.f32 %v4310, %v4334
    %v4343 = vmul.f32 %v4335, 0.5
    %v4344 = vmul.f32 %v4336, 0.5
    %v4345 = vmul.f32 %v4337, 0.5
    %v4346 = vmul.f32 %v4338, 0.5
    %v4347 = vmul.f32 %v4339, 0.5
    %v4348 = vmul.f32 %v4340, 0.5
    %v4349 = vmul.f32 %v4341, 0.5
    %v4350 = vmul.f32 %v4342, 0.5
    %v4352 = vrot.slane %v4344, 7
    %v4355 = vrot.slane %v4345, 6
    %v4358 = vrot.slane %v4346, 5
    %v4361 = vrot.slane %v4347, 4
    %v4364 = vrot.slane %v4348, 3
    %v4367 = vrot.slane %v4349, 2
    %v4370 = vrot.slane %v4350, 1
    %v4372 = vsel %vm1405, %v4343, %v4352
    %v4373 = vsel %vm1407, %v4372, %v4355
    %v4374 = vsel %vm1409, %v4373, %v4358
    %v4375 = vsel %vm308, %v4374, %v4361
    %v4376 = vsel %vm1412, %v4375, %v4364
    %v4377 = vsel %vm1414, %v4376, %v4367
    %v4378 = vsel %vm1416, %v4377, %v4370
    %v4379 = vpack.c.bf16 %v4378, %v4378
    %v4380 = vld [vmem:[%s6] sm:$0xf]
    %v4381 = vld [vmem:[%s6 + $0x4] sm:$0xf]
    %v4382 = vld [vmem:[%s6 + $0x8] sm:$0xf]
    %v4383 = vld [vmem:[%s6 + $0xc] sm:$0xf]
    %v4384 = vld [vmem:[%s6 + $0x10] sm:$0xf]
    %v4385 = vld [vmem:[%s6 + $0x14] sm:$0xf]
    %v4386 = vld [vmem:[%s6 + $0x18] sm:$0xf]
    %v4387 = vld [vmem:[%s6 + $0x1c] sm:$0xf]
    %v4388 = vld [vmem:[%s6 + $0x20] sm:$0xf]
    %v4389 = vld [vmem:[%s6 + $0x24] sm:$0xf]
    %v4390 = vld [vmem:[%s6 + $0x28] sm:$0xf]
    %v4391 = vld [vmem:[%s6 + $0x2c] sm:$0xf]
    %v4392 = vld [vmem:[%s6 + $0x30] sm:$0xf]
    %v4393 = vld [vmem:[%s6 + $0x34] sm:$0xf]
    %v4394 = vld [vmem:[%s6 + $0x38] sm:$0xf]
    %v4395 = vld [vmem:[%s6 + $0x3c] sm:$0xf]
    %v4396 = vld [vmem:[%s7] sm:$0x1]
    %v4398 = vlaneseq
    %v4399 = vshrl.u32 %v4398, 7
    %v4400 = vsub.s32 0, %v4399
    %v4401 = vrot.slane %v4396, %v4400
    %v4419 = vunpack.c.l.b16 %v4380
    %v4420 = vunpack.c.l.b16 %v4381
    %v4421 = vunpack.c.l.b16 %v4382
    %v4422 = vunpack.c.l.b16 %v4383
    %v4423 = vunpack.c.l.b16 %v4384
    %v4424 = vunpack.c.l.b16 %v4385
    %v4425 = vunpack.c.l.b16 %v4386
    %v4426 = vunpack.c.l.b16 %v4387
    %v4427 = vunpack.c.l.b16 %v4388
    %v4428 = vunpack.c.l.b16 %v4389
    %v4429 = vunpack.c.l.b16 %v4390
    %v4430 = vunpack.c.l.b16 %v4391
    %v4431 = vunpack.c.l.b16 %v4392
    %v4432 = vunpack.c.l.b16 %v4393
    %v4433 = vunpack.c.l.b16 %v4394
    %v4434 = vunpack.c.l.b16 %v4395
    %v4435 = vpack.c.b16 %v4420, %v4419
    %v4436 = vpack.c.b16 %v4422, %v4421
    %v4437 = vpack.c.b16 %v4424, %v4423
    %v4438 = vpack.c.b16 %v4426, %v4425
    %v4439 = vpack.c.b16 %v4428, %v4427
    %v4440 = vpack.c.b16 %v4430, %v4429
    %v4441 = vpack.c.b16 %v4432, %v4431
    %v4442 = vpack.c.b16 %v4434, %v4433
    %4451 = vmatprep.subr.bf16.mxu0 0
    %4452 = vmatpush1.bf16.msra.mxu0 %v4442
    %4453 = vmatprep.subr.bf16.mxu0 0
    %4454 = vmatpush1.bf16.msra.mxu0 %v4441
    %4455 = vmatprep.subr.bf16.mxu0 0
    %4456 = vmatpush1.bf16.msra.mxu0 %v4440
    %4457 = vmatprep.subr.bf16.mxu0 0
    %4458 = vmatpush1.bf16.msra.mxu0 %v4439
    %4459 = vmatprep.subr.bf16.mxu0 0
    %4460 = vmatpush1.bf16.msra.mxu0 %v4438
    %4461 = vmatprep.subr.bf16.mxu0 0
    %4462 = vmatpush1.bf16.msra.mxu0 %v4437
    %4463 = vmatprep.subr.bf16.mxu0 0
    %4464 = vmatpush1.bf16.msra.mxu0 %v4436
    %4465 = vmatprep.subr.bf16.mxu0 0
    %4466 = vmatpush1.bf16.msra.mxu0 %v4435
    %4467 = vmatprep.subr.bf16.mxu0 0
    %4468 = vmatpush2.bf16.msra.mxu0 0
    %4469 = vmatprep.subr.bf16.mxu0 0
    %4470 = vmatpush2.bf16.msra.mxu0 0
    %4471 = vmatprep.subr.bf16.mxu0 0
    %4472 = vmatpush2.bf16.msra.mxu0 0
    %4473 = vmatprep.subr.bf16.mxu0 0
    %4474 = vmatpush2.bf16.msra.mxu0 0
    %4475 = vmatprep.subr.bf16.mxu0 0
    %4476 = vmatpush2.bf16.msra.mxu0 0
    %4477 = vmatprep.subr.bf16.mxu0 0
    %4478 = vmatpush2.bf16.msra.mxu0 0
    %4479 = vmatprep.subr.bf16.mxu0 0
    %4480 = vmatpush2.bf16.msra.mxu0 0
    %4481 = vmatprep.subr.bf16.mxu0 0
    %4482 = vmatpush2.bf16.msra.mxu0 0
    %4483 = vmatprep.mubr.bf16.mxu0 0
    %4484 = vmatmul.mubr.bf16.gmra.mxu0 %v4379
    %v4485 = vpop.f32.mrf.mxu0
    %v4486 = vadd.f32 %v4401, %v4485
    %v4487 = vpop.f32.mrf.mxu0
    %v4488 = vpop.f32.mrf.mxu0
    %v4489 = vpop.f32.mrf.mxu0
    %4490 = vdwg.mxu0
    %v4491 = vsub.f32 0.0, %v4486
    %v4492 = vmul.f32 %v4491, 1.442695
    %v4493 = vpow.pop %v4492
    %v4494 = vadd.f32 %v4493, 1.0
    %v4495 = vrcp.pop %v4494
    %4496 = vst [vmem:[#allocation8] sm:$0xff] %v4495
    // Predicated region
    $region42: #{tpu_custom_call.1} parent=1 // pred_check
      _
    $region43: #{tpu_custom_call.1} parent=1 // pred_check_branch
      %4498 = sbr.rel (0) target = $region45
    $region44: #{tpu_custom_call.1} parent=1 // pred_region
      %s4500 = ssub.s32 128, 128
      %4501 = vsyncadd [#allocation4], %s4500
      %s4503 = sshll.u32 [#allocation7], 4
      %s4504 = int_to_ptr.vmem [resolvable:$true] %s4503
      %4506 = dma.vmem_to_hbm [thread:$0]  %s4504, 128, %s8, [#allocation4]
    $region45: #{tpu_custom_call.1} parent=1 // pred_fallthru
      _
    // Predicated region
    $region46: #{tpu_custom_call.1} parent=1 // pred_check
      _
    $region47: #{tpu_custom_call.1} parent=1 // pred_check_branch
      %4508 = sbr.rel (0) target = $region49
    $region48: #{tpu_custom_call.1} parent=1 // pred_region
      %s4510 = ssub.s32 128, 128
      %4511 = vsyncadd [#allocation9], %s4510
      %s4513 = sshll.u32 [#allocation8], 4
      %s4514 = int_to_ptr.vmem [resolvable:$true] %s4513
      %4516 = dma.vmem_to_hbm [thread:$0]  %s4514, 128, %s9, [#allocation9]
    $region49: #{tpu_custom_call.1} parent=1 // pred_fallthru
      _
    // Predicated region
    $region50: #{tpu_custom_call.1} parent=1 // pred_check
      _
    $region51: #{tpu_custom_call.1} parent=1 // pred_check_branch
      %4518 = sbr.rel (0) target = $region53
    $region52: #{tpu_custom_call.1} parent=1 // pred_region
      %4519 = dma.done [#allocation4], 128
    $region53: #{tpu_custom_call.1} parent=1 // pred_fallthru
      _
    // Predicated region
    $region54: #{tpu_custom_call.1} parent=1 // pred_check
      _
    $region55: #{tpu_custom_call.1} parent=1 // pred_check_branch
      %4521 = sbr.rel (0) target = $region57
    $region56: #{tpu_custom_call.1} parent=1 // pred_region
      %4522 = dma.done [#allocation9], 128
    $region57: #{tpu_custom_call.1} parent=1 // pred_fallthru
      _
    %4523 = vsyncpa [#allocation3], 1
    %4524 = vsyncpa [#allocation6], 1
    %4525 = vsyncpa [#allocation4], 1
    %4526 = vsyncpa [#allocation9], 1

</llo_original>
